<compile_context>
chip_gen: v5e
topology: v5e:2x2
jax: 0.10.0
libtpu: 0.0.40
codegen_flags: <defaults>
</compile_context>

<pallas_src>
import functools

import jax
import jax.numpy as jnp
from jax.experimental import pallas as pl
from jax.experimental.pallas import tpu as pltpu

F32 = jnp.float32
BF16 = jnp.bfloat16


def _vmem_specs(n):
    return [pl.BlockSpec(memory_space=pltpu.MemorySpace.VMEM)] * n


def _fixed_spec(arr):
    # Full-array block that is identical at every grid step (stays VMEM-resident).
    nd = arr.ndim
    return pl.BlockSpec(arr.shape, lambda *_, _nd=nd: (0,) * _nd)


# -------------------------------------------------------- in-kernel helpers --

def _layernorm(x, g, b, eps):
    x = x.astype(jnp.float32)
    mu = jnp.mean(x, axis=-1, keepdims=True)
    xc = x - mu
    return xc * jax.lax.rsqrt(jnp.mean(xc * xc, axis=-1, keepdims=True) + eps) * g + b


def _rmsnorm(x, g, eps):
    x = x.astype(jnp.float32)
    return x * jax.lax.rsqrt(jnp.mean(x * x, axis=-1, keepdims=True) + eps) * g


def _mha(xn, wqkv, bqkv, wo, bo, num_heads, add_mask):
    """xn: (S, E) f32 (already normed). Fused QKV + per-head softmax + out-proj."""
    S, E = xn.shape
    Dh = E // num_heads
    scale = 1.0 / (Dh ** 0.5)
    qkv = jnp.dot(xn.astype(BF16), wqkv, preferred_element_type=jnp.float32) + bqkv
    q, k, v = qkv[:, :E], qkv[:, E:2 * E], qkv[:, 2 * E:]
    out = bo  # (1, E) -> broadcasts to (S, E)
    for h in range(num_heads):  # static unroll over heads
        sl = slice(h * Dh, (h + 1) * Dh)
        qh = q[:, sl].astype(BF16)
        kh = k[:, sl].astype(BF16)
        vh = v[:, sl].astype(BF16)
        s = jax.lax.dot_general(qh, kh, (((1,), (1,)), ((), ())),
                                preferred_element_type=jnp.float32) * scale
        if add_mask is not None:
            s = s + add_mask
        s = s - jnp.max(s, axis=-1, keepdims=True)
        p = jnp.exp(s)
        p = p * pl.reciprocal(jnp.sum(p, axis=-1, keepdims=True), approx=True)
        oh = jnp.dot(p.astype(BF16), vh, preferred_element_type=jnp.float32)  # (S, Dh)
        out = out + jnp.dot(oh.astype(BF16), wo[h * Dh:(h + 1) * Dh, :],
                            preferred_element_type=jnp.float32)
    return out  # (S, E)


# ------------------------------------------------------------------ kernels --

def _patch_embed_kernel(x_ref, w_ref, b_ref, o_ref):
    y = jnp.dot(x_ref[...].astype(BF16), w_ref[...],
                preferred_element_type=jnp.float32) + b_ref[...]
    o_ref[...] = y.astype(o_ref.dtype)


def patch_embed(x2d, w, b):
    M = x2d.shape[0]
    E = w.shape[1]
    return pl.pallas_call(
        _patch_embed_kernel,
        out_shape=jax.ShapeDtypeStruct((M, E), x2d.dtype),
        in_specs=_vmem_specs(3),
        out_specs=pl.BlockSpec(memory_space=pltpu.MemorySpace.VMEM),
    )(x2d, w.astype(BF16), b.reshape(1, E))


def _vit_encode_kernel(x_ref, ln1g_ref, ln1b_ref, wqkv_ref, bqkv_ref, wo_ref, bo_ref,
                       ln2g_ref, ln2b_ref, w1_ref, b1_ref, w2_ref, b2_ref,
                       lnfg_ref, lnfb_ref, pw1_ref, pb1_ref, pw2_ref, pb2_ref,
                       o_ref, *, num_heads, eps):
    # --- ViT pre-norm block: LN1 -> MHA -> +res -------------------------------
    x = x_ref[0].astype(jnp.float32)                                    # (S, E)
    h = _layernorm(x, ln1g_ref[...], ln1b_ref[...], eps)
    x = x + _mha(h, wqkv_ref[...], bqkv_ref[...], wo_ref[...], bo_ref[...],
                 num_heads, None)
    # Only the CLS token is consumed downstream (encoder(...)[0][:, 0, :]); the
    # per-token MLP / final LN / proj are therefore applied to row 0 only.
    x0 = x[0:1, :]                                                      # (1, E)
    h = _layernorm(x0, ln2g_ref[...], ln2b_ref[...], eps)
    h = jnp.dot(h.astype(BF16), w1_ref[...],
                preferred_element_type=jnp.float32) + b1_ref[...]
    h = jax.nn.gelu(h)
    h = jnp.dot(h.astype(BF16), w2_ref[...],
                preferred_element_type=jnp.float32) + b2_ref[...]
    x0 = x0 + h
    # --- final encoder LayerNorm + proj MLP (Linear -> ReLU -> Linear) --------
    h = _layernorm(x0, lnfg_ref[...], lnfb_ref[...], eps)
    h = jnp.dot(h.astype(BF16), pw1_ref[...],
                preferred_element_type=jnp.float32) + pb1_ref[...]
    h = jnp.maximum(h, 0.0)
    h = jnp.dot(h.astype(BF16), pw2_ref[...],
                preferred_element_type=jnp.float32) + pb2_ref[...]
    o_ref[0] = h.astype(o_ref.dtype)                                    # (1, D)


def vit_encode(x, enc_p, proj_w1, proj_b1, proj_w2, proj_b2, num_heads, eps=1e-6):
    """ViT block + final LN + proj head, CLS row only.  Returns (B, D)."""
    B, S, E = x.shape
    D = proj_w2.shape[1]
    fixed = [
        enc_p["ln1_g"].reshape(1, E), enc_p["ln1_b"].reshape(1, E),
        enc_p["wqkv"].astype(BF16), enc_p["bqkv"].reshape(1, -1),
        enc_p["wo"].astype(BF16), enc_p["bo"].reshape(1, E),
        enc_p["ln2_g"].reshape(1, E), enc_p["ln2_b"].reshape(1, E),
        enc_p["mlp_w1"].astype(BF16), enc_p["mlp_b1"].reshape(1, -1),
        enc_p["mlp_w2"].astype(BF16), enc_p["mlp_b2"].reshape(1, E),
        enc_p["lnf_g"].reshape(1, E), enc_p["lnf_b"].reshape(1, E),
        proj_w1.astype(BF16), proj_b1.reshape(1, D),
        proj_w2.astype(BF16), proj_b2.reshape(1, D),
    ]
    xspec = pl.BlockSpec((1, S, E), lambda b: (b, 0, 0))
    ospec = pl.BlockSpec((1, 1, D), lambda b: (b, 0, 0))
    out = pl.pallas_call(
        functools.partial(_vit_encode_kernel, num_heads=num_heads, eps=eps),
        out_shape=jax.ShapeDtypeStruct((B, 1, D), x.dtype),
        grid=(B,),
        in_specs=[xspec] + [_fixed_spec(a) for a in fixed],
        out_specs=ospec,
        compiler_params=pltpu.CompilerParams(dimension_semantics=("parallel",)),
    )(x, *fixed)
    return out[:, 0, :]


def _llama_block_kernel(x_ref, am_ref, rms1_ref, wqkv_ref, bqkv_ref, wo_ref, bo_ref,
                        rms2_ref, wgu_ref, wd_ref, rmsf_ref, o_ref,
                        *, num_heads, inter, eps):
    x = x_ref[0].astype(jnp.float32)                                    # (L, D)
    L = x.shape[0]
    # causal + padding mask built on the VPU (no (B, L, L) tensor in HBM)
    row = jax.lax.broadcasted_iota(jnp.int32, (L, L), 0)
    col = jax.lax.broadcasted_iota(jnp.int32, (L, L), 1)
    allowed = (col <= row) & (am_ref[0] > 0)                            # (L, L)
    add_mask = jnp.where(allowed, 0.0, -1e9).astype(jnp.float32)

    # TODO(synk): SmolLM2's rotary position embeddings are omitted in this synthetic decoder.
    h = _rmsnorm(x, rms1_ref[...], eps)
    x = x + _mha(h, wqkv_ref[...], bqkv_ref[...], wo_ref[...], bo_ref[...],
                 num_heads, add_mask)
    h = _rmsnorm(x, rms2_ref[...], eps)
    gu = jnp.dot(h.astype(BF16), wgu_ref[...], preferred_element_type=jnp.float32)
    gated = jax.nn.silu(gu[:, :inter]) * gu[:, inter:]
    x = x + jnp.dot(gated.astype(BF16), wd_ref[...],
                    preferred_element_type=jnp.float32)
    # final decoder RMSNorm fused here (single-block synthetic decoder)
    o_ref[0] = _rmsnorm(x, rmsf_ref[...], eps).astype(o_ref.dtype)


def llama_block(x, amask, p, num_heads, inter, eps=1e-5):
    B, L, D = x.shape
    fixed = [
        p["rms1_g"].reshape(1, D),
        p["wqkv"].astype(BF16), p["bqkv"].reshape(1, -1),
        p["wo"].astype(BF16), p["bo"].reshape(1, D),
        p["rms2_g"].reshape(1, D),
        p["mlp_wgu"].astype(BF16), p["mlp_wd"].astype(BF16),
        p["rmsf_g"].reshape(1, D),
    ]
    xspec = pl.BlockSpec((1, L, D), lambda b: (b, 0, 0))
    amspec = pl.BlockSpec((1, 1, L), lambda b: (b, 0, 0))
    return pl.pallas_call(
        functools.partial(_llama_block_kernel, num_heads=num_heads,
                          inter=inter, eps=eps),
        out_shape=jax.ShapeDtypeStruct((B, L, D), x.dtype),
        grid=(B,),
        in_specs=[xspec, amspec] + [_fixed_spec(a) for a in fixed],
        out_specs=xspec,
        compiler_params=pltpu.CompilerParams(dimension_semantics=("parallel",)),
    )(x, amask.reshape(B, 1, L).astype(jnp.int32), *fixed)


def _flash_ce_kernel(x_ref, w_ref, b_ref, lab_ref, loss_ref, m_sc, l_sc, t_sc, *, tv):
    j = pl.program_id(0)

    @pl.when(j == 0)
    def _():
        m_sc[...] = jnp.full(m_sc.shape, -jnp.inf, jnp.float32)
        l_sc[...] = jnp.zeros(l_sc.shape, jnp.float32)
        t_sc[...] = jnp.zeros(t_sc.shape, jnp.float32)

    logits = jnp.dot(x_ref[...].astype(BF16), w_ref[...],
                     preferred_element_type=jnp.float32) + b_ref[...]   # (N, tv)
    m_new = jnp.maximum(m_sc[...], jnp.max(logits, axis=-1, keepdims=True))
    l_sc[...] = (l_sc[...] * jnp.exp(m_sc[...] - m_new)
                 + jnp.sum(jnp.exp(logits - m_new), axis=-1, keepdims=True))
    m_sc[...] = m_new
    ids = jax.lax.broadcasted_iota(jnp.int32, logits.shape, 1) + j * tv
    t_sc[...] += jnp.sum(jnp.where(ids == lab_ref[...], logits, 0.0),
                         axis=-1, keepdims=True)

    @pl.when(j == pl.num_programs(0) - 1)
    def _():
        loss_ref[...] = m_sc[...] + jnp.log(l_sc[...]) - t_sc[...]


def lm_head_cross_entropy(x2d, lm_w, lm_b, labels, tv=128):
    """Vocab-tiled fused lm_head + softmax cross entropy (logits never hit HBM)."""
    N, D = x2d.shape
    V = lm_w.shape[1]
    nv = V // tv
    per_tok = pl.pallas_call(
        functools.partial(_flash_ce_kernel, tv=tv),
        out_shape=jax.ShapeDtypeStruct((N, 1), jnp.float32),
        grid=(nv,),
        in_specs=[
            pl.BlockSpec((N, D), lambda j: (0, 0)),
            pl.BlockSpec((D, tv), lambda j: (0, j)),
            pl.BlockSpec((1, tv), lambda j: (0, j)),
            pl.BlockSpec((N, 1), lambda j: (0, 0)),
        ],
        out_specs=pl.BlockSpec((N, 1), lambda j: (0, 0)),
        scratch_shapes=[pltpu.VMEM((N, 1), jnp.float32)] * 3,
        compiler_params=pltpu.CompilerParams(dimension_semantics=("arbitrary",)),
    )(x2d, lm_w.astype(BF16), lm_b.reshape(1, V),
      labels.reshape(N, 1).astype(jnp.int32))
    # Original HF path: labels = input_ids (never -100), so every shifted position
    # contributes to the mean — matches an unmasked mean here.
    return jnp.mean(per_tok)


# ------------------------------------------------------------- model pieces --

def encoder_forward(images, params, cfg):
    """DINOv2-style ViT (1 pre-norm block) + final LN + proj head -> (B, D)."""
    p = params["enc"]
    B, C, H, W = images.shape
    ps = cfg["patch"]
    nh, nw = H // ps, W // ps
    patches = images.reshape(B, C, nh, ps, nw, ps)
    patches = patches.transpose(0, 2, 4, 1, 3, 5).reshape(B, nh * nw, C * ps * ps)
    P = nh * nw
    E = cfg["enc_hidden"]

    x = patch_embed(patches.reshape(B * P, -1), p["patch_w"], p["patch_b"])
    x = x.reshape(B, P, E)
    cls = jnp.broadcast_to(p["cls"], (B, 1, E))
    x = jnp.concatenate([cls, x], axis=1) + p["pos"]                    # (B, P+1, E)
    return vit_encode(x, p, params["proj_w1"], params["proj_b1"],
                      params["proj_w2"], params["proj_b2"], cfg["enc_heads"])


def decoder_loss(image_emb, input_ids, attention_mask, p, cfg):
    """SmolLM2-style causal LM (1 Llama block); HF-style shifted CE loss."""
    B, L = input_ids.shape
    D = cfg["dec_hidden"]

    tok_emb = jnp.take(p["embed"], input_ids, axis=0)                    # (B, L, D)
    x = jnp.concatenate([image_emb[:, None, :], tok_emb[:, :-1, :]], 1)  # (B, L, D)
    amask = jnp.concatenate(
        [jnp.ones((B, 1), attention_mask.dtype), attention_mask[:, :-1]], axis=1)

    x = llama_block(x, amask, p, cfg["dec_heads"], cfg["dec_mlp"])       # (B, L, D)

    # shifted CE: logits[:, :-1, :] vs labels = input_ids[:, 1:]
    xs = x[:, :-1, :].reshape(B * (L - 1), D)
    labels = input_ids[:, 1:].reshape(B * (L - 1))
    return lm_head_cross_entropy(xs, p["lm_w"], p["lm_b"], labels)


def dino_smollm_forward(params, images, input_ids, attention_mask, cfg):
    img_emb = encoder_forward(images, params, cfg)                       # (B, D)
    return decoder_loss(img_emb, input_ids, attention_mask, params["dec"], cfg)


# ------------------------------------------------------------------- params --

def init_params(key, cfg):
    def nrm(k, shape, s=0.02):
        return s * jax.random.normal(k, shape, F32)

    ks = iter(jax.random.split(key, 64))
    E, D = cfg["enc_hidden"], cfg["dec_hidden"]
    Ie, Id, V = cfg["enc_mlp"], cfg["dec_mlp"], cfg["vocab"]
    pd = 3 * cfg["patch"] ** 2
    P = (cfg["img_size"] // cfg["patch"]) ** 2

    enc = dict(
        patch_w=nrm(next(ks), (pd, E)), patch_b=jnp.zeros((E,), F32),
        cls=nrm(next(ks), (1, E)), pos=nrm(next(ks), (1, P + 1, E)),
        ln1_g=jnp.ones((E,), F32), ln1_b=jnp.zeros((E,), F32),
        ln2_g=jnp.ones((E,), F32), ln2_b=jnp.zeros((E,), F32),
        lnf_g=jnp.ones((E,), F32), lnf_b=jnp.zeros((E,), F32),
        wqkv=nrm(next(ks), (E, 3 * E)), bqkv=jnp.zeros((3 * E,), F32),
        wo=nrm(next(ks), (E, E)), bo=jnp.zeros((E,), F32),
        mlp_w1=nrm(next(ks), (E, Ie)), mlp_b1=jnp.zeros((Ie,), F32),
        mlp_w2=nrm(next(ks), (Ie, E)), mlp_b2=jnp.zeros((E,), F32))

    dec = dict(
        embed=nrm(next(ks), (V, D)),
        rms1_g=jnp.ones((D,), F32), rms2_g=jnp.ones((D,), F32),
        rmsf_g=jnp.ones((D,), F32),
        wqkv=nrm(next(ks), (D, 3 * D)), bqkv=jnp.zeros((3 * D,), F32),
        wo=nrm(next(ks), (D, D)), bo=jnp.zeros((D,), F32),
        mlp_wgu=nrm(next(ks), (D, 2 * Id)), mlp_wd=nrm(next(ks), (Id, D)),
        lm_w=nrm(next(ks), (D, V)), lm_b=jnp.zeros((V,), F32))

    return dict(
        enc=enc, dec=dec,
        proj_w1=nrm(next(ks), (E, D)), proj_b1=jnp.zeros((D,), F32),
        proj_w2=nrm(next(ks), (D, D)), proj_b2=jnp.zeros((D,), F32))


# --------------------------------------------------------------------- main --

if __name__ == "__main__":
    # Lane-friendly synthetic config: all feature/vocab dims multiples of 128.
    cfg = dict(img_size=16, patch=8,
               enc_hidden=128, enc_heads=2, enc_mlp=256,
               dec_hidden=128, dec_heads=2, dec_mlp=256,
               vocab=256, seq=8)

    key = jax.random.PRNGKey(0)
    kp, ki, kt = jax.random.split(key, 3)
    params = init_params(kp, cfg)

    B = 2
    images = jax.random.normal(ki, (B, 3, cfg["img_size"], cfg["img_size"]), F32)  # NCHW
    input_ids = jax.random.randint(kt, (B, cfg["seq"]), 0, cfg["vocab"], jnp.int32)
    attention_mask = jnp.ones((B, cfg["seq"]), jnp.int32)

    fwd = jax.jit(lambda p_, im, ids, am: dino_smollm_forward(p_, im, ids, am, cfg))
    loss = fwd(params, images, input_ids, attention_mask)
    loss = jax.block_until_ready(loss)
    assert loss.shape == () and bool(jnp.isfinite(loss))
    print("KERNEL_OK")
</pallas_src>

<mosaic_0001>
module attributes {stable_mosaic.version = 11 : i64} {
  func.func @_patch_embed_kernel(%arg0: memref<8x192xf32, #tpu.memory_space<vmem>>, %arg1: memref<192x128xbf16, #tpu.memory_space<vmem>>, %arg2: memref<1x128xf32, #tpu.memory_space<vmem>>, %arg3: memref<8x128xf32, #tpu.memory_space<vmem>>) attributes {dimension_semantics = [], scalar_prefetch = 0 : i64, scratch_operands = 0 : i64, tpu.core_type = #tpu.core_type<tc>} {
    %c0 = arith.constant 0 : index
    %c0_0 = arith.constant 0 : index
    %0 = vector.load %arg0[%c0, %c0_0] : memref<8x192xf32, #tpu.memory_space<vmem>>, vector<8x192xf32>
    %1 = arith.truncf %0 : vector<8x192xf32> to vector<8x192xbf16>
    %c0_1 = arith.constant 0 : index
    %c0_2 = arith.constant 0 : index
    %2 = vector.load %arg1[%c0_1, %c0_2] : memref<192x128xbf16, #tpu.memory_space<vmem>>, vector<192x128xbf16>
    %cst = arith.constant dense<0.000000e+00> : vector<8x128xf32>
    %3 = tpu.matmul %1, %2, %cst {dimension_numbers = #tpu.dot_dimension_numbers<[1], [0], [0], [1], [0, 0, 1, 1], [], []>} : vector<8x192xbf16>, vector<192x128xbf16>, vector<8x128xf32> -> vector<8x128xf32>
    %c0_3 = arith.constant 0 : index
    %c0_4 = arith.constant 0 : index
    %4 = vector.load %arg2[%c0_3, %c0_4] : memref<1x128xf32, #tpu.memory_space<vmem>>, vector<1x128xf32>
    %5 = vector.broadcast %4 : vector<1x128xf32> to vector<8x128xf32>
    %6 = arith.addf %3, %5 : vector<8x128xf32>
    %c0_5 = arith.constant 0 : index
    %c0_6 = arith.constant 0 : index
    %7 = vector.load %arg3[%c0_5, %c0_6] : memref<8x128xf32, #tpu.memory_space<vmem>>, vector<8x128xf32>
    tpu.vector_store %arg3[%c0_5, %c0_6], %6 {strides = array<i32>} : memref<8x128xf32, #tpu.memory_space<vmem>>, vector<8x128xf32>,
    return
  }
}

module attributes {stable_mosaic.version = 11 : i64} {
  func.func @_vit_encode_kernel(%arg0: i32, %arg1: memref<1x5x128xf32, #tpu.memory_space<vmem>>, %arg2: memref<1x128xf32, #tpu.memory_space<vmem>>, %arg3: memref<1x128xf32, #tpu.memory_space<vmem>>, %arg4: memref<128x384xbf16, #tpu.memory_space<vmem>>, %arg5: memref<1x384xf32, #tpu.memory_space<vmem>>, %arg6: memref<128x128xbf16, #tpu.memory_space<vmem>>, %arg7: memref<1x128xf32, #tpu.memory_space<vmem>>, %arg8: memref<1x128xf32, #tpu.memory_space<vmem>>, %arg9: memref<1x128xf32, #tpu.memory_space<vmem>>, %arg10: memref<128x256xbf16, #tpu.memory_space<vmem>>, %arg11: memref<1x256xf32, #tpu.memory_space<vmem>>, %arg12: memref<256x128xbf16, #tpu.memory_space<vmem>>, %arg13: memref<1x128xf32, #tpu.memory_space<vmem>>, %arg14: memref<1x128xf32, #tpu.memory_space<vmem>>, %arg15: memref<1x128xf32, #tpu.memory_space<vmem>>, %arg16: memref<128x128xbf16, #tpu.memory_space<vmem>>, %arg17: memref<1x128xf32, #tpu.memory_space<vmem>>, %arg18: memref<128x128xbf16, #tpu.memory_space<vmem>>, %arg19: memref<1x128xf32, #tpu.memory_space<vmem>>, %arg20: memref<1x1x128xf32, #tpu.memory_space<vmem>>) attributes {dimension_semantics = [#tpu.dimension_semantics<parallel>], iteration_bounds = array<i64: 2>, scalar_prefetch = 0 : i64, scratch_operands = 0 : i64, tpu.core_type = #tpu.core_type<tc>, window_params = [{transform_indices = @transform_0, window_bounds = array<i64: 1, 5, 128>}, {pipeline_mode = #tpu.pipeline_mode<synchronous>, transform_indices = @transform_1, window_bounds = array<i64: 1, 128>}, {pipeline_mode = #tpu.pipeline_mode<synchronous>, transform_indices = @transform_2, window_bounds = array<i64: 1, 128>}, {pipeline_mode = #tpu.pipeline_mode<synchronous>, transform_indices = @transform_3, window_bounds = array<i64: 128, 384>}, {pipeline_mode = #tpu.pipeline_mode<synchronous>, transform_indices = @transform_4, window_bounds = array<i64: 1, 384>}, {pipeline_mode = #tpu.pipeline_mode<synchronous>, transform_indices = @transform_5, window_bounds = array<i64: 128, 128>}, {pipeline_mode = #tpu.pipeline_mode<synchronous>, transform_indices = @transform_6, window_bounds = array<i64: 1, 128>}, {pipeline_mode = #tpu.pipeline_mode<synchronous>, transform_indices = @transform_7, window_bounds = array<i64: 1, 128>}, {pipeline_mode = #tpu.pipeline_mode<synchronous>, transform_indices = @transform_8, window_bounds = array<i64: 1, 128>}, {pipeline_mode = #tpu.pipeline_mode<synchronous>, transform_indices = @transform_9, window_bounds = array<i64: 128, 256>}, {pipeline_mode = #tpu.pipeline_mode<synchronous>, transform_indices = @transform_10, window_bounds = array<i64: 1, 256>}, {pipeline_mode = #tpu.pipeline_mode<synchronous>, transform_indices = @transform_11, window_bounds = array<i64: 256, 128>}, {pipeline_mode = #tpu.pipeline_mode<synchronous>, transform_indices = @transform_12, window_bounds = array<i64: 1, 128>}, {pipeline_mode = #tpu.pipeline_mode<synchronous>, transform_indices = @transform_13, window_bounds = array<i64: 1, 128>}, {pipeline_mode = #tpu.pipeline_mode<synchronous>, transform_indices = @transform_14, window_bounds = array<i64: 1, 128>}, {pipeline_mode = #tpu.pipeline_mode<synchronous>, transform_indices = @transform_15, window_bounds = array<i64: 128, 128>}, {pipeline_mode = #tpu.pipeline_mode<synchronous>, transform_indices = @transform_16, window_bounds = array<i64: 1, 128>}, {pipeline_mode = #tpu.pipeline_mode<synchronous>, transform_indices = @transform_17, window_bounds = array<i64: 128, 128>}, {pipeline_mode = #tpu.pipeline_mode<synchronous>, transform_indices = @transform_18, window_bounds = array<i64: 1, 128>}, {transform_indices = @transform_19, window_bounds = array<i64: 1, 1, 128>}]} {
    %c0 = arith.constant 0 : index
    %c0_0 = arith.constant 0 : index
    %c0_1 = arith.constant 0 : index
    %0 = vector.load %arg1[%c0, %c0_0, %c0_1] : memref<1x5x128xf32, #tpu.memory_space<vmem>>, vector<1x5x128xf32>
    %1 = vector.shape_cast %0 : vector<1x5x128xf32> to vector<5x128xf32>
    %c0_2 = arith.constant 0 : index
    %c0_3 = arith.constant 0 : index
    %2 = vector.load %arg2[%c0_2, %c0_3] : memref<1x128xf32, #tpu.memory_space<vmem>>, vector<1x128xf32>
    %c0_4 = arith.constant 0 : index
    %c0_5 = arith.constant 0 : index
    %3 = vector.load %arg3[%c0_4, %c0_5] : memref<1x128xf32, #tpu.memory_space<vmem>>, vector<1x128xf32>
    %cst = arith.constant dense<0.000000e+00> : vector<5xf32>
    %4 = vector.multi_reduction <add>, %1, %cst [1] : vector<5x128xf32> to vector<5xf32>
    %5 = vector.shape_cast %4 : vector<5xf32> to vector<5x1xf32>
    %cst_6 = arith.constant 1.280000e+02 : f32
    %6 = vector.broadcast %cst_6 : f32 to vector<5x1xf32>
    %7 = arith.divf %5, %6 : vector<5x1xf32>
    %8 = vector.broadcast %7 : vector<5x1xf32> to vector<5x128xf32>
    %9 = arith.subf %1, %8 : vector<5x128xf32>
    %10 = arith.mulf %9, %9 : vector<5x128xf32>
    %cst_7 = arith.constant dense<0.000000e+00> : vector<5xf32>
    %11 = vector.multi_reduction <add>, %10, %cst_7 [1] : vector<5x128xf32> to vector<5xf32>
    %12 = vector.shape_cast %11 : vector<5xf32> to vector<5x1xf32>
    %cst_8 = arith.constant 1.280000e+02 : f32
    %13 = vector.broadcast %cst_8 : f32 to vector<5x1xf32>
    %14 = arith.divf %12, %13 : vector<5x1xf32>
    %cst_9 = arith.constant 9.99999997E-7 : f32
    %15 = vector.broadcast %cst_9 : f32 to vector<5x1xf32>
    %16 = arith.addf %14, %15 : vector<5x1xf32>
    %17 = math.rsqrt %16 : vector<5x1xf32>
    %18 = vector.broadcast %17 : vector<5x1xf32> to vector<5x128xf32>
    %19 = arith.mulf %9, %18 : vector<5x128xf32>
    %20 = vector.broadcast %2 : vector<1x128xf32> to vector<5x128xf32>
    %21 = arith.mulf %19, %20 : vector<5x128xf32>
    %22 = vector.broadcast %3 : vector<1x128xf32> to vector<5x128xf32>
    %23 = arith.addf %21, %22 : vector<5x128xf32>
    %c0_10 = arith.constant 0 : index
    %c0_11 = arith.constant 0 : index
    %24 = vector.load %arg4[%c0_10, %c0_11] : memref<128x384xbf16, #tpu.memory_space<vmem>>, vector<128x384xbf16>
    %c0_12 = arith.constant 0 : index
    %c0_13 = arith.constant 0 : index
    %25 = vector.load %arg5[%c0_12, %c0_13] : memref<1x384xf32, #tpu.memory_space<vmem>>, vector<1x384xf32>
    %c0_14 = arith.constant 0 : index
    %c0_15 = arith.constant 0 : index
    %26 = vector.load %arg6[%c0_14, %c0_15] : memref<128x128xbf16, #tpu.memory_space<vmem>>, vector<128x128xbf16>
    %c0_16 = arith.constant 0 : index
    %c0_17 = arith.constant 0 : index
    %27 = vector.load %arg7[%c0_16, %c0_17] : memref<1x128xf32, #tpu.memory_space<vmem>>, vector<1x128xf32>
    %28 = arith.truncf %23 : vector<5x128xf32> to vector<5x128xbf16>
    %cst_18 = arith.constant dense<0.000000e+00> : vector<5x384xf32>
    %29 = tpu.matmul %28, %24, %cst_18 {dimension_numbers = #tpu.dot_dimension_numbers<[1], [0], [0], [1], [0, 0, 1, 1], [], []>} : vector<5x128xbf16>, vector<128x384xbf16>, vector<5x384xf32> -> vector<5x384xf32>
    %30 = vector.broadcast %25 : vector<1x384xf32> to vector<5x384xf32>
    %31 = arith.addf %29, %30 : vector<5x384xf32>
    %32 = vector.extract_strided_slice %31 {offsets = [0, 0], sizes = [5, 128], strides = [1, 1]} : vector<5x384xf32> to vector<5x128xf32>
    %33 = vector.extract_strided_slice %31 {offsets = [0, 128], sizes = [5, 128], strides = [1, 1]} : vector<5x384xf32> to vector<5x128xf32>
    %34 = vector.extract_strided_slice %31 {offsets = [0, 256], sizes = [5, 128], strides = [1, 1]} : vector<5x384xf32> to vector<5x128xf32>
    %35 = vector.extract_strided_slice %32 {offsets = [0, 0], sizes = [5, 64], strides = [1, 1]} : vector<5x128xf32> to vector<5x64xf32>
    %36 = arith.truncf %35 : vector<5x64xf32> to vector<5x64xbf16>
    %37 = vector.extract_strided_slice %33 {offsets = [0, 0], sizes = [5, 64], strides = [1, 1]} : vector<5x128xf32> to vector<5x64xf32>
    %38 = arith.truncf %37 : vector<5x64xf32> to vector<5x64xbf16>
    %39 = vector.extract_strided_slice %34 {offsets = [0, 0], sizes = [5, 64], strides = [1, 1]} : vector<5x128xf32> to vector<5x64xf32>
    %40 = arith.truncf %39 : vector<5x64xf32> to vector<5x64xbf16>
    %cst_19 = arith.constant dense<0.000000e+00> : vector<5x5xf32>
    %41 = tpu.matmul %36, %38, %cst_19 {dimension_numbers = #tpu.dot_dimension_numbers<[1], [1], [0], [0], [0, 0, 1, 0], [], []>} : vector<5x64xbf16>, vector<5x64xbf16>, vector<5x5xf32> -> vector<5x5xf32>
    %cst_20 = arith.constant 1.250000e-01 : f32
    %42 = vector.broadcast %cst_20 : f32 to vector<5x5xf32>
    %43 = arith.mulf %41, %42 : vector<5x5xf32>
    %cst_21 = arith.constant dense<0xFF800000> : vector<5xf32>
    %44 = vector.multi_reduction <maximumf>, %43, %cst_21 [1] : vector<5x5xf32> to vector<5xf32>
    %45 = vector.shape_cast %44 : vector<5xf32> to vector<5x1xf32>
    %46 = vector.broadcast %45 : vector<5x1xf32> to vector<5x5xf32>
    %47 = arith.subf %43, %46 : vector<5x5xf32>
    %48 = math.exp %47 : vector<5x5xf32>
    %cst_22 = arith.constant dense<0.000000e+00> : vector<5xf32>
    %49 = vector.multi_reduction <add>, %48, %cst_22 [1] : vector<5x5xf32> to vector<5xf32>
    %50 = vector.shape_cast %49 : vector<5xf32> to vector<5x1xf32>
    %51 = tpu.reciprocal %50 {approx = true} : vector<5x1xf32> -> vector<5x1xf32>
    %52 = vector.broadcast %51 : vector<5x1xf32> to vector<5x5xf32>
    %53 = arith.mulf %48, %52 : vector<5x5xf32>
    %54 = arith.truncf %53 : vector<5x5xf32> to vector<5x5xbf16>
    %cst_23 = arith.constant dense<0.000000e+00> : vector<5x64xf32>
    %55 = tpu.matmul %54, %40, %cst_23 {dimension_numbers = #tpu.dot_dimension_numbers<[1], [0], [0], [1], [0, 0, 1, 1], [], []>} : vector<5x5xbf16>, vector<5x64xbf16>, vector<5x64xf32> -> vector<5x64xf32>
    %56 = arith.truncf %55 : vector<5x64xf32> to vector<5x64xbf16>
    %57 = vector.extract_strided_slice %26 {offsets = [0, 0], sizes = [64, 128], strides = [1, 1]} : vector<128x128xbf16> to vector<64x128xbf16>
    %cst_24 = arith.constant dense<0.000000e+00> : vector<5x128xf32>
    %58 = tpu.matmul %56, %57, %cst_24 {dimension_numbers = #tpu.dot_dimension_numbers<[1], [0], [0], [1], [0, 0, 1, 1], [], []>} : vector<5x64xbf16>, vector<64x128xbf16>, vector<5x128xf32> -> vector<5x128xf32>
    %59 = vector.broadcast %27 : vector<1x128xf32> to vector<5x128xf32>
    %60 = arith.addf %59, %58 : vector<5x128xf32>
    %61 = vector.extract_strided_slice %32 {offsets = [0, 64], sizes = [5, 64], strides = [1, 1]} : vector<5x128xf32> to vector<5x64xf32>
    %62 = arith.truncf %61 : vector<5x64xf32> to vector<5x64xbf16>
    %63 = vector.extract_strided_slice %33 {offsets = [0, 64], sizes = [5, 64], strides = [1, 1]} : vector<5x128xf32> to vector<5x64xf32>
    %64 = arith.truncf %63 : vector<5x64xf32> to vector<5x64xbf16>
    %65 = vector.extract_strided_slice %34 {offsets = [0, 64], sizes = [5, 64], strides = [1, 1]} : vector<5x128xf32> to vector<5x64xf32>
    %66 = arith.truncf %65 : vector<5x64xf32> to vector<5x64xbf16>
    %cst_25 = arith.constant dense<0.000000e+00> : vector<5x5xf32>
    %67 = tpu.matmul %62, %64, %cst_25 {dimension_numbers = #tpu.dot_dimension_numbers<[1], [1], [0], [0], [0, 0, 1, 0], [], []>} : vector<5x64xbf16>, vector<5x64xbf16>, vector<5x5xf32> -> vector<5x5xf32>
    %cst_26 = arith.constant 1.250000e-01 : f32
    %68 = vector.broadcast %cst_26 : f32 to vector<5x5xf32>
    %69 = arith.mulf %67, %68 : vector<5x5xf32>
    %cst_27 = arith.constant dense<0xFF800000> : vector<5xf32>
    %70 = vector.multi_reduction <maximumf>, %69, %cst_27 [1] : vector<5x5xf32> to vector<5xf32>
    %71 = vector.shape_cast %70 : vector<5xf32> to vector<5x1xf32>
    %72 = vector.broadcast %71 : vector<5x1xf32> to vector<5x5xf32>
    %73 = arith.subf %69, %72 : vector<5x5xf32>
    %74 = math.exp %73 : vector<5x5xf32>
    %cst_28 = arith.constant dense<0.000000e+00> : vector<5xf32>
    %75 = vector.multi_reduction <add>, %74, %cst_28 [1] : vector<5x5xf32> to vector<5xf32>
    %76 = vector.shape_cast %75 : vector<5xf32> to vector<5x1xf32>
    %77 = tpu.reciprocal %76 {approx = true} : vector<5x1xf32> -> vector<5x1xf32>
    %78 = vector.broadcast %77 : vector<5x1xf32> to vector<5x5xf32>
    %79 = arith.mulf %74, %78 : vector<5x5xf32>
    %80 = arith.truncf %79 : vector<5x5xf32> to vector<5x5xbf16>
    %cst_29 = arith.constant dense<0.000000e+00> : vector<5x64xf32>
    %81 = tpu.matmul %80, %66, %cst_29 {dimension_numbers = #tpu.dot_dimension_numbers<[1], [0], [0], [1], [0, 0, 1, 1], [], []>} : vector<5x5xbf16>, vector<5x64xbf16>, vector<5x64xf32> -> vector<5x64xf32>
    %82 = arith.truncf %81 : vector<5x64xf32> to vector<5x64xbf16>
    %83 = vector.extract_strided_slice %26 {offsets = [64, 0], sizes = [64, 128], strides = [1, 1]} : vector<128x128xbf16> to vector<64x128xbf16>
    %cst_30 = arith.constant dense<0.000000e+00> : vector<5x128xf32>
    %84 = tpu.matmul %82, %83, %cst_30 {dimension_numbers = #tpu.dot_dimension_numbers<[1], [0], [0], [1], [0, 0, 1, 1], [], []>} : vector<5x64xbf16>, vector<64x128xbf16>, vector<5x128xf32> -> vector<5x128xf32>
    %85 = arith.addf %60, %84 : vector<5x128xf32>
    %86 = arith.addf %1, %85 : vector<5x128xf32>
    %87 = vector.extract_strided_slice %86 {offsets = [0, 0], sizes = [1, 128], strides = [1, 1]} : vector<5x128xf32> to vector<1x128xf32>
    %c0_31 = arith.constant 0 : index
    %c0_32 = arith.constant 0 : index
    %88 = vector.load %arg8[%c0_31, %c0_32] : memref<1x128xf32, #tpu.memory_space<vmem>>, vector<1x128xf32>
    %c0_33 = arith.constant 0 : index
    %c0_34 = arith.constant 0 : index
    %89 = vector.load %arg9[%c0_33, %c0_34] : memref<1x128xf32, #tpu.memory_space<vmem>>, vector<1x128xf32>
    %cst_35 = arith.constant dense<0.000000e+00> : vector<1xf32>
    %90 = vector.multi_reduction <add>, %87, %cst_35 [1] : vector<1x128xf32> to vector<1xf32>
    %91 = vector.shape_cast %90 : vector<1xf32> to vector<1x1xf32>
    %cst_36 = arith.constant 1.280000e+02 : f32
    %92 = vector.broadcast %cst_36 : f32 to vector<1x1xf32>
    %93 = arith.divf %91, %92 : vector<1x1xf32>
    %94 = vector.broadcast %93 : vector<1x1xf32> to vector<1x128xf32>
    %95 = arith.subf %87, %94 : vector<1x128xf32>
    %96 = arith.mulf %95, %95 : vector<1x128xf32>
    %cst_37 = arith.constant dense<0.000000e+00> : vector<1xf32>
    %97 = vector.multi_reduction <add>, %96, %cst_37 [1] : vector<1x128xf32> to vector<1xf32>
    %98 = vector.shape_cast %97 : vector<1xf32> to vector<1x1xf32>
    %cst_38 = arith.constant 1.280000e+02 : f32
    %99 = vector.broadcast %cst_38 : f32 to vector<1x1xf32>
    %100 = arith.divf %98, %99 : vector<1x1xf32>
    %cst_39 = arith.constant 9.99999997E-7 : f32
    %101 = vector.broadcast %cst_39 : f32 to vector<1x1xf32>
    %102 = arith.addf %100, %101 : vector<1x1xf32>
    %103 = math.rsqrt %102 : vector<1x1xf32>
    %104 = vector.broadcast %103 : vector<1x1xf32> to vector<1x128xf32>
    %105 = arith.mulf %95, %104 : vector<1x128xf32>
    %106 = arith.mulf %105, %88 : vector<1x128xf32>
    %107 = arith.addf %106, %89 : vector<1x128xf32>
    %108 = arith.truncf %107 : vector<1x128xf32> to vector<1x128xbf16>
    %c0_40 = arith.constant 0 : index
    %c0_41 = arith.constant 0 : index
    %109 = vector.load %arg10[%c0_40, %c0_41] : memref<128x256xbf16, #tpu.memory_space<vmem>>, vector<128x256xbf16>
    %cst_42 = arith.constant dense<0.000000e+00> : vector<1x256xf32>
    %110 = tpu.matmul %108, %109, %cst_42 {dimension_numbers = #tpu.dot_dimension_numbers<[1], [0], [0], [1], [0, 0, 1, 1], [], []>} : vector<1x128xbf16>, vector<128x256xbf16>, vector<1x256xf32> -> vector<1x256xf32>
    %c0_43 = arith.constant 0 : index
    %c0_44 = arith.constant 0 : index
    %111 = vector.load %arg11[%c0_43, %c0_44] : memref<1x256xf32, #tpu.memory_space<vmem>>, vector<1x256xf32>
    %112 = arith.addf %110, %111 : vector<1x256xf32>
    %113 = arith.mulf %112, %112 : vector<1x256xf32>
    %114 = arith.mulf %112, %113 : vector<1x256xf32>
    %cst_45 = arith.constant 4.471500e-02 : f32
    %115 = vector.broadcast %cst_45 : f32 to vector<1x256xf32>
    %116 = arith.mulf %115, %114 : vector<1x256xf32>
    %117 = arith.addf %112, %116 : vector<1x256xf32>
    %cst_46 = arith.constant 0.797884583 : f32
    %118 = vector.broadcast %cst_46 : f32 to vector<1x256xf32>
    %119 = arith.mulf %118, %117 : vector<1x256xf32>
    %120 = math.tanh %119 : vector<1x256xf32>
    %cst_47 = arith.constant 1.000000e+00 : f32
    %121 = vector.broadcast %cst_47 : f32 to vector<1x256xf32>
    %122 = arith.addf %121, %120 : vector<1x256xf32>
    %cst_48 = arith.constant 5.000000e-01 : f32
    %123 = vector.broadcast %cst_48 : f32 to vector<1x256xf32>
    %124 = arith.mulf %123, %122 : vector<1x256xf32>
    %125 = arith.mulf %112, %124 : vector<1x256xf32>
    %126 = arith.truncf %125 : vector<1x256xf32> to vector<1x256xbf16>
    %c0_49 = arith.constant 0 : index
    %c0_50 = arith.constant 0 : index
    %127 = vector.load %arg12[%c0_49, %c0_50] : memref<256x128xbf16, #tpu.memory_space<vmem>>, vector<256x128xbf16>
    %cst_51 = arith.constant dense<0.000000e+00> : vector<1x128xf32>
    %128 = tpu.matmul %126, %127, %cst_51 {dimension_numbers = #tpu.dot_dimension_numbers<[1], [0], [0], [1], [0, 0, 1, 1], [], []>} : vector<1x256xbf16>, vector<256x128xbf16>, vector<1x128xf32> -> vector<1x128xf32>
    %c0_52 = arith.constant 0 : index
    %c0_53 = arith.constant 0 : index
    %129 = vector.load %arg13[%c0_52, %c0_53] : memref<1x128xf32, #tpu.memory_space<vmem>>, vector<1x128xf32>
    %130 = arith.addf %128, %129 : vector<1x128xf32>
    %131 = arith.addf %87, %130 : vector<1x128xf32>
    %c0_54 = arith.constant 0 : index
    %c0_55 = arith.constant 0 : index
    %132 = vector.load %arg14[%c0_54, %c0_55] : memref<1x128xf32, #tpu.memory_space<vmem>>, vector<1x128xf32>
    %c0_56 = arith.constant 0 : index
    %c0_57 = arith.constant 0 : index
    %133 = vector.load %arg15[%c0_56, %c0_57] : memref<1x128xf32, #tpu.memory_space<vmem>>, vector<1x128xf32>
    %cst_58 = arith.constant dense<0.000000e+00> : vector<1xf32>
    %134 = vector.multi_reduction <add>, %131, %cst_58 [1] : vector<1x128xf32> to vector<1xf32>
    %135 = vector.shape_cast %134 : vector<1xf32> to vector<1x1xf32>
    %cst_59 = arith.constant 1.280000e+02 : f32
    %136 = vector.broadcast %cst_59 : f32 to vector<1x1xf32>
    %137 = arith.divf %135, %136 : vector<1x1xf32>
    %138 = vector.broadcast %137 : vector<1x1xf32> to vector<1x128xf32>
    %139 = arith.subf %131, %138 : vector<1x128xf32>
    %140 = arith.mulf %139, %139 : vector<1x128xf32>
    %cst_60 = arith.constant dense<0.000000e+00> : vector<1xf32>
    %141 = vector.multi_reduction <add>, %140, %cst_60 [1] : vector<1x128xf32> to vector<1xf32>
    %142 = vector.shape_cast %141 : vector<1xf32> to vector<1x1xf32>
    %cst_61 = arith.constant 1.280000e+02 : f32
    %143 = vector.broadcast %cst_61 : f32 to vector<1x1xf32>
    %144 = arith.divf %142, %143 : vector<1x1xf32>
    %cst_62 = arith.constant 9.99999997E-7 : f32
    %145 = vector.broadcast %cst_62 : f32 to vector<1x1xf32>
    %146 = arith.addf %144, %145 : vector<1x1xf32>
    %147 = math.rsqrt %146 : vector<1x1xf32>
    %148 = vector.broadcast %147 : vector<1x1xf32> to vector<1x128xf32>
    %149 = arith.mulf %139, %148 : vector<1x128xf32>
    %150 = arith.mulf %149, %132 : vector<1x128xf32>
    %151 = arith.addf %150, %133 : vector<1x128xf32>
    %152 = arith.truncf %151 : vector<1x128xf32> to vector<1x128xbf16>
    %c0_63 = arith.constant 0 : index
    %c0_64 = arith.constant 0 : index
    %153 = vector.load %arg16[%c0_63, %c0_64] : memref<128x128xbf16, #tpu.memory_space<vmem>>, vector<128x128xbf16>
    %cst_65 = arith.constant dense<0.000000e+00> : vector<1x128xf32>
    %154 = tpu.matmul %152, %153, %cst_65 {dimension_numbers = #tpu.dot_dimension_numbers<[1], [0], [0], [1], [0, 0, 1, 1], [], []>} : vector<1x128xbf16>, vector<128x128xbf16>, vector<1x128xf32> -> vector<1x128xf32>
    %c0_66 = arith.constant 0 : index
    %c0_67 = arith.constant 0 : index
    %155 = vector.load %arg17[%c0_66, %c0_67] : memref<1x128xf32, #tpu.memory_space<vmem>>, vector<1x128xf32>
    %156 = arith.addf %154, %155 : vector<1x128xf32>
    %cst_68 = arith.constant 0.000000e+00 : f32
    %157 = vector.broadcast %cst_68 : f32 to vector<1x128xf32>
    %158 = arith.maximumf %156, %157 : vector<1x128xf32>
    %159 = arith.truncf %158 : vector<1x128xf32> to vector<1x128xbf16>
    %c0_69 = arith.constant 0 : index
    %c0_70 = arith.constant 0 : index
    %160 = vector.load %arg18[%c0_69, %c0_70] : memref<128x128xbf16, #tpu.memory_space<vmem>>, vector<128x128xbf16>
    %cst_71 = arith.constant dense<0.000000e+00> : vector<1x128xf32>
    %161 = tpu.matmul %159, %160, %cst_71 {dimension_numbers = #tpu.dot_dimension_numbers<[1], [0], [0], [1], [0, 0, 1, 1], [], []>} : vector<1x128xbf16>, vector<128x128xbf16>, vector<1x128xf32> -> vector<1x128xf32>
    %c0_72 = arith.constant 0 : index
    %c0_73 = arith.constant 0 : index
    %162 = vector.load %arg19[%c0_72, %c0_73] : memref<1x128xf32, #tpu.memory_space<vmem>>, vector<1x128xf32>
    %163 = arith.addf %161, %162 : vector<1x128xf32>
    %c0_74 = arith.constant 0 : index
    %c0_75 = arith.constant 0 : index
    %c0_76 = arith.constant 0 : index
    %164 = vector.load %arg20[%c0_74, %c0_75, %c0_76] : memref<1x1x128xf32, #tpu.memory_space<vmem>>, vector<1x1x128xf32>
    %165 = vector.shape_cast %164 : vector<1x1x128xf32> to vector<1x128xf32>
    %166 = vector.shape_cast %163 : vector<1x128xf32> to vector<1x1x128xf32>
    tpu.vector_store %arg20[%c0_74, %c0_75, %c0_76], %166 {strides = array<i32>} : memref<1x1x128xf32, #tpu.memory_space<vmem>>, vector<1x1x128xf32>,
    return
  }
  func.func @transform_0(%arg0: i32) -> (i32, i32, i32) {
    %c0_i32 = arith.constant 0 : i32
    %c0_i32_0 = arith.constant 0 : i32
    %c0_i32_1 = arith.constant 0 : i32
    return %arg0, %c0_i32, %c0_i32_0 : i32, i32, i32
  }
  func.func @transform_1(%arg0: i32) -> (i32, i32) {
    %c0_i32 = arith.constant 0 : i32
    %c0_i32_0 = arith.constant 0 : i32
    %c0_i32_1 = arith.constant 0 : i32
    return %c0_i32, %c0_i32_0 : i32, i32
  }
  func.func @transform_2(%arg0: i32) -> (i32, i32) {
    %c0_i32 = arith.constant 0 : i32
    %c0_i32_0 = arith.constant 0 : i32
    %c0_i32_1 = arith.constant 0 : i32
    return %c0_i32, %c0_i32_0 : i32, i32
  }
  func.func @transform_3(%arg0: i32) -> (i32, i32) {
    %c0_i32 = arith.constant 0 : i32
    %c0_i32_0 = arith.constant 0 : i32
    %c0_i32_1 = arith.constant 0 : i32
    return %c0_i32, %c0_i32_0 : i32, i32
  }
  func.func @transform_4(%arg0: i32) -> (i32, i32) {
    %c0_i32 = arith.constant 0 : i32
    %c0_i32_0 = arith.constant 0 : i32
    %c0_i32_1 = arith.constant 0 : i32
    return %c0_i32, %c0_i32_0 : i32, i32
  }
  func.func @transform_5(%arg0: i32) -> (i32, i32) {
    %c0_i32 = arith.constant 0 : i32
    %c0_i32_0 = arith.constant 0 : i32
    %c0_i32_1 = arith.constant 0 : i32
    return %c0_i32, %c0_i32_0 : i32, i32
  }
  func.func @transform_6(%arg0: i32) -> (i32, i32) {
    %c0_i32 = arith.constant 0 : i32
    %c0_i32_0 = arith.constant 0 : i32
    %c0_i32_1 = arith.constant 0 : i32
    return %c0_i32, %c0_i32_0 : i32, i32
  }
  func.func @transform_7(%arg0: i32) -> (i32, i32) {
    %c0_i32 = arith.constant 0 : i32
    %c0_i32_0 = arith.constant 0 : i32
    %c0_i32_1 = arith.constant 0 : i32
    return %c0_i32, %c0_i32_0 : i32, i32
  }
  func.func @transform_8(%arg0: i32) -> (i32, i32) {
    %c0_i32 = arith.constant 0 : i32
    %c0_i32_0 = arith.constant 0 : i32
    %c0_i32_1 = arith.constant 0 : i32
    return %c0_i32, %c0_i32_0 : i32, i32
  }
  func.func @transform_9(%arg0: i32) -> (i32, i32) {
    %c0_i32 = arith.constant 0 : i32
    %c0_i32_0 = arith.constant 0 : i32
    %c0_i32_1 = arith.constant 0 : i32
    return %c0_i32, %c0_i32_0 : i32, i32
  }
  func.func @transform_10(%arg0: i32) -> (i32, i32) {
    %c0_i32 = arith.constant 0 : i32
    %c0_i32_0 = arith.constant 0 : i32
    %c0_i32_1 = arith.constant 0 : i32
    return %c0_i32, %c0_i32_0 : i32, i32
  }
  func.func @transform_11(%arg0: i32) -> (i32, i32) {
    %c0_i32 = arith.constant 0 : i32
    %c0_i32_0 = arith.constant 0 : i32
    %c0_i32_1 = arith.constant 0 : i32
    return %c0_i32, %c0_i32_0 : i32, i32
  }
  func.func @transform_12(%arg0: i32) -> (i32, i32) {
    %c0_i32 = arith.constant 0 : i32
    %c0_i32_0 = arith.constant 0 : i32
    %c0_i32_1 = arith.constant 0 : i32
    return %c0_i32, %c0_i32_0 : i32, i32
  }
  func.func @transform_13(%arg0: i32) -> (i32, i32) {
    %c0_i32 = arith.constant 0 : i32
    %c0_i32_0 = arith.constant 0 : i32
    %c0_i32_1 = arith.constant 0 : i32
    return %c0_i32, %c0_i32_0 : i32, i32
  }
  func.func @transform_14(%arg0: i32) -> (i32, i32) {
    %c0_i32 = arith.constant 0 : i32
    %c0_i32_0 = arith.constant 0 : i32
    %c0_i32_1 = arith.constant 0 : i32
    return %c0_i32, %c0_i32_0 : i32, i32
  }
  func.func @transform_15(%arg0: i32) -> (i32, i32) {
    %c0_i32 = arith.constant 0 : i32
    %c0_i32_0 = arith.constant 0 : i32
    %c0_i32_1 = arith.constant 0 : i32
    return %c0_i32, %c0_i32_0 : i32, i32
  }
  func.func @transform_16(%arg0: i32) -> (i32, i32) {
    %c0_i32 = arith.constant 0 : i32
    %c0_i32_0 = arith.constant 0 : i32
    %c0_i32_1 = arith.constant 0 : i32
    return %c0_i32, %c0_i32_0 : i32, i32
  }
  func.func @transform_17(%arg0: i32) -> (i32, i32) {
    %c0_i32 = arith.constant 0 : i32
    %c0_i32_0 = arith.constant 0 : i32
    %c0_i32_1 = arith.constant 0 : i32
    return %c0_i32, %c0_i32_0 : i32, i32
  }
  func.func @transform_18(%arg0: i32) -> (i32, i32) {
    %c0_i32 = arith.constant 0 : i32
    %c0_i32_0 = arith.constant 0 : i32
    %c0_i32_1 = arith.constant 0 : i32
    return %c0_i32, %c0_i32_0 : i32, i32
  }
  func.func @transform_19(%arg0: i32) -> (i32, i32, i32) {
    %c0_i32 = arith.constant 0 : i32
    %c0_i32_0 = arith.constant 0 : i32
    %c0_i32_1 = arith.constant 0 : i32
    return %arg0, %c0_i32, %c0_i32_0 : i32, i32, i32
  }
}

module attributes {stable_mosaic.version = 11 : i64} {
  func.func @_llama_block_kernel(%arg0: i32, %arg1: memref<1x8x128xf32, #tpu.memory_space<vmem>>, %arg2: memref<1x1x8xi32, #tpu.memory_space<vmem>>, %arg3: memref<1x128xf32, #tpu.memory_space<vmem>>, %arg4: memref<128x384xbf16, #tpu.memory_space<vmem>>, %arg5: memref<1x384xf32, #tpu.memory_space<vmem>>, %arg6: memref<128x128xbf16, #tpu.memory_space<vmem>>, %arg7: memref<1x128xf32, #tpu.memory_space<vmem>>, %arg8: memref<1x128xf32, #tpu.memory_space<vmem>>, %arg9: memref<128x512xbf16, #tpu.memory_space<vmem>>, %arg10: memref<256x128xbf16, #tpu.memory_space<vmem>>, %arg11: memref<1x128xf32, #tpu.memory_space<vmem>>, %arg12: memref<1x8x128xf32, #tpu.memory_space<vmem>>) attributes {dimension_semantics = [#tpu.dimension_semantics<parallel>], iteration_bounds = array<i64: 2>, scalar_prefetch = 0 : i64, scratch_operands = 0 : i64, tpu.core_type = #tpu.core_type<tc>, window_params = [{transform_indices = @transform_0, window_bounds = array<i64: 1, 8, 128>}, {transform_indices = @transform_1, window_bounds = array<i64: 1, 1, 8>}, {pipeline_mode = #tpu.pipeline_mode<synchronous>, transform_indices = @transform_2, window_bounds = array<i64: 1, 128>}, {pipeline_mode = #tpu.pipeline_mode<synchronous>, transform_indices = @transform_3, window_bounds = array<i64: 128, 384>}, {pipeline_mode = #tpu.pipeline_mode<synchronous>, transform_indices = @transform_4, window_bounds = array<i64: 1, 384>}, {pipeline_mode = #tpu.pipeline_mode<synchronous>, transform_indices = @transform_5, window_bounds = array<i64: 128, 128>}, {pipeline_mode = #tpu.pipeline_mode<synchronous>, transform_indices = @transform_6, window_bounds = array<i64: 1, 128>}, {pipeline_mode = #tpu.pipeline_mode<synchronous>, transform_indices = @transform_7, window_bounds = array<i64: 1, 128>}, {pipeline_mode = #tpu.pipeline_mode<synchronous>, transform_indices = @transform_8, window_bounds = array<i64: 128, 512>}, {pipeline_mode = #tpu.pipeline_mode<synchronous>, transform_indices = @transform_9, window_bounds = array<i64: 256, 128>}, {pipeline_mode = #tpu.pipeline_mode<synchronous>, transform_indices = @transform_10, window_bounds = array<i64: 1, 128>}, {transform_indices = @transform_11, window_bounds = array<i64: 1, 8, 128>}]} {
    %c0 = arith.constant 0 : index
    %c0_0 = arith.constant 0 : index
    %c0_1 = arith.constant 0 : index
    %0 = vector.load %arg1[%c0, %c0_0, %c0_1] : memref<1x8x128xf32, #tpu.memory_space<vmem>>, vector<1x8x128xf32>
    %1 = vector.shape_cast %0 : vector<1x8x128xf32> to vector<8x128xf32>
    %2 = tpu.iota {dimensions = array<i32: 0>} : vector<8x8xi32>
    %3 = tpu.iota {dimensions = array<i32: 1>} : vector<8x8xi32>
    %4 = arith.cmpi sle, %3, %2 : vector<8x8xi32>
    %c0_2 = arith.constant 0 : index
    %c0_3 = arith.constant 0 : index
    %c0_4 = arith.constant 0 : index
    %5 = vector.load %arg2[%c0_2, %c0_3, %c0_4] : memref<1x1x8xi32, #tpu.memory_space<vmem>>, vector<1x1x8xi32>
    %6 = vector.shape_cast %5 : vector<1x1x8xi32> to vector<1x8xi32>
    %c0_i32 = arith.constant 0 : i32
    %7 = vector.broadcast %c0_i32 : i32 to vector<1x8xi32>
    %8 = arith.cmpi sgt, %6, %7 : vector<1x8xi32>
    %9 = vector.broadcast %8 : vector<1x8xi1> to vector<8x8xi1>
    %10 = arith.andi %4, %9 : vector<8x8xi1>
    %cst = arith.constant 0.000000e+00 : f32
    %cst_5 = arith.constant -1.000000e+09 : f32
    %11 = vector.broadcast %cst : f32 to vector<8x8xf32>
    %12 = vector.broadcast %cst_5 : f32 to vector<8x8xf32>
    %13 = arith.select %10, %11, %12 : vector<8x8xi1>, vector<8x8xf32>
    %c0_6 = arith.constant 0 : index
    %c0_7 = arith.constant 0 : index
    %14 = vector.load %arg3[%c0_6, %c0_7] : memref<1x128xf32, #tpu.memory_space<vmem>>, vector<1x128xf32>
    %15 = arith.mulf %1, %1 : vector<8x128xf32>
    %cst_8 = arith.constant dense<0.000000e+00> : vector<8xf32>
    %16 = vector.multi_reduction <add>, %15, %cst_8 [1] : vector<8x128xf32> to vector<8xf32>
    %17 = vector.shape_cast %16 : vector<8xf32> to vector<8x1xf32>
    %cst_9 = arith.constant 1.280000e+02 : f32
    %18 = vector.broadcast %cst_9 : f32 to vector<8x1xf32>
    %19 = arith.divf %17, %18 : vector<8x1xf32>
    %cst_10 = arith.constant 9.99999974E-6 : f32
    %20 = vector.broadcast %cst_10 : f32 to vector<8x1xf32>
    %21 = arith.addf %19, %20 : vector<8x1xf32>
    %22 = math.rsqrt %21 : vector<8x1xf32>
    %23 = vector.broadcast %22 : vector<8x1xf32> to vector<8x128xf32>
    %24 = arith.mulf %1, %23 : vector<8x128xf32>
    %25 = vector.broadcast %14 : vector<1x128xf32> to vector<8x128xf32>
    %26 = arith.mulf %24, %25 : vector<8x128xf32>
    %c0_11 = arith.constant 0 : index
    %c0_12 = arith.constant 0 : index
    %27 = vector.load %arg4[%c0_11, %c0_12] : memref<128x384xbf16, #tpu.memory_space<vmem>>, vector<128x384xbf16>
    %c0_13 = arith.constant 0 : index
    %c0_14 = arith.constant 0 : index
    %28 = vector.load %arg5[%c0_13, %c0_14] : memref<1x384xf32, #tpu.memory_space<vmem>>, vector<1x384xf32>
    %c0_15 = arith.constant 0 : index
    %c0_16 = arith.constant 0 : index
    %29 = vector.load %arg6[%c0_15, %c0_16] : memref<128x128xbf16, #tpu.memory_space<vmem>>, vector<128x128xbf16>
    %c0_17 = arith.constant 0 : index
    %c0_18 = arith.constant 0 : index
    %30 = vector.load %arg7[%c0_17, %c0_18] : memref<1x128xf32, #tpu.memory_space<vmem>>, vector<1x128xf32>
    %31 = arith.truncf %26 : vector<8x128xf32> to vector<8x128xbf16>
    %cst_19 = arith.constant dense<0.000000e+00> : vector<8x384xf32>
    %32 = tpu.matmul %31, %27, %cst_19 {dimension_numbers = #tpu.dot_dimension_numbers<[1], [0], [0], [1], [0, 0, 1, 1], [], []>} : vector<8x128xbf16>, vector<128x384xbf16>, vector<8x384xf32> -> vector<8x384xf32>
    %33 = vector.broadcast %28 : vector<1x384xf32> to vector<8x384xf32>
    %34 = arith.addf %32, %33 : vector<8x384xf32>
    %35 = vector.extract_strided_slice %34 {offsets = [0, 0], sizes = [8, 128], strides = [1, 1]} : vector<8x384xf32> to vector<8x128xf32>
    %36 = vector.extract_strided_slice %34 {offsets = [0, 128], sizes = [8, 128], strides = [1, 1]} : vector<8x384xf32> to vector<8x128xf32>
    %37 = vector.extract_strided_slice %34 {offsets = [0, 256], sizes = [8, 128], strides = [1, 1]} : vector<8x384xf32> to vector<8x128xf32>
    %38 = vector.extract_strided_slice %35 {offsets = [0, 0], sizes = [8, 64], strides = [1, 1]} : vector<8x128xf32> to vector<8x64xf32>
    %39 = arith.truncf %38 : vector<8x64xf32> to vector<8x64xbf16>
    %40 = vector.extract_strided_slice %36 {offsets = [0, 0], sizes = [8, 64], strides = [1, 1]} : vector<8x128xf32> to vector<8x64xf32>
    %41 = arith.truncf %40 : vector<8x64xf32> to vector<8x64xbf16>
    %42 = vector.extract_strided_slice %37 {offsets = [0, 0], sizes = [8, 64], strides = [1, 1]} : vector<8x128xf32> to vector<8x64xf32>
    %43 = arith.truncf %42 : vector<8x64xf32> to vector<8x64xbf16>
    %cst_20 = arith.constant dense<0.000000e+00> : vector<8x8xf32>
    %44 = tpu.matmul %39, %41, %cst_20 {dimension_numbers = #tpu.dot_dimension_numbers<[1], [1], [0], [0], [0, 0, 1, 0], [], []>} : vector<8x64xbf16>, vector<8x64xbf16>, vector<8x8xf32> -> vector<8x8xf32>
    %cst_21 = arith.constant 1.250000e-01 : f32
    %45 = vector.broadcast %cst_21 : f32 to vector<8x8xf32>
    %46 = arith.mulf %44, %45 : vector<8x8xf32>
    %47 = arith.addf %46, %13 : vector<8x8xf32>
    %cst_22 = arith.constant dense<0xFF800000> : vector<8xf32>
    %48 = vector.multi_reduction <maximumf>, %47, %cst_22 [1] : vector<8x8xf32> to vector<8xf32>
    %49 = vector.shape_cast %48 : vector<8xf32> to vector<8x1xf32>
    %50 = vector.broadcast %49 : vector<8x1xf32> to vector<8x8xf32>
    %51 = arith.subf %47, %50 : vector<8x8xf32>
    %52 = math.exp %51 : vector<8x8xf32>
    %cst_23 = arith.constant dense<0.000000e+00> : vector<8xf32>
    %53 = vector.multi_reduction <add>, %52, %cst_23 [1] : vector<8x8xf32> to vector<8xf32>
    %54 = vector.shape_cast %53 : vector<8xf32> to vector<8x1xf32>
    %55 = tpu.reciprocal %54 {approx = true} : vector<8x1xf32> -> vector<8x1xf32>
    %56 = vector.broadcast %55 : vector<8x1xf32> to vector<8x8xf32>
    %57 = arith.mulf %52, %56 : vector<8x8xf32>
    %58 = arith.truncf %57 : vector<8x8xf32> to vector<8x8xbf16>
    %cst_24 = arith.constant dense<0.000000e+00> : vector<8x64xf32>
    %59 = tpu.matmul %58, %43, %cst_24 {dimension_numbers = #tpu.dot_dimension_numbers<[1], [0], [0], [1], [0, 0, 1, 1], [], []>} : vector<8x8xbf16>, vector<8x64xbf16>, vector<8x64xf32> -> vector<8x64xf32>
    %60 = arith.truncf %59 : vector<8x64xf32> to vector<8x64xbf16>
    %61 = vector.extract_strided_slice %29 {offsets = [0, 0], sizes = [64, 128], strides = [1, 1]} : vector<128x128xbf16> to vector<64x128xbf16>
    %cst_25 = arith.constant dense<0.000000e+00> : vector<8x128xf32>
    %62 = tpu.matmul %60, %61, %cst_25 {dimension_numbers = #tpu.dot_dimension_numbers<[1], [0], [0], [1], [0, 0, 1, 1], [], []>} : vector<8x64xbf16>, vector<64x128xbf16>, vector<8x128xf32> -> vector<8x128xf32>
    %63 = vector.broadcast %30 : vector<1x128xf32> to vector<8x128xf32>
    %64 = arith.addf %63, %62 : vector<8x128xf32>
    %65 = vector.extract_strided_slice %35 {offsets = [0, 64], sizes = [8, 64], strides = [1, 1]} : vector<8x128xf32> to vector<8x64xf32>
    %66 = arith.truncf %65 : vector<8x64xf32> to vector<8x64xbf16>
    %67 = vector.extract_strided_slice %36 {offsets = [0, 64], sizes = [8, 64], strides = [1, 1]} : vector<8x128xf32> to vector<8x64xf32>
    %68 = arith.truncf %67 : vector<8x64xf32> to vector<8x64xbf16>
    %69 = vector.extract_strided_slice %37 {offsets = [0, 64], sizes = [8, 64], strides = [1, 1]} : vector<8x128xf32> to vector<8x64xf32>
    %70 = arith.truncf %69 : vector<8x64xf32> to vector<8x64xbf16>
    %cst_26 = arith.constant dense<0.000000e+00> : vector<8x8xf32>
    %71 = tpu.matmul %66, %68, %cst_26 {dimension_numbers = #tpu.dot_dimension_numbers<[1], [1], [0], [0], [0, 0, 1, 0], [], []>} : vector<8x64xbf16>, vector<8x64xbf16>, vector<8x8xf32> -> vector<8x8xf32>
    %cst_27 = arith.constant 1.250000e-01 : f32
    %72 = vector.broadcast %cst_27 : f32 to vector<8x8xf32>
    %73 = arith.mulf %71, %72 : vector<8x8xf32>
    %74 = arith.addf %73, %13 : vector<8x8xf32>
    %cst_28 = arith.constant dense<0xFF800000> : vector<8xf32>
    %75 = vector.multi_reduction <maximumf>, %74, %cst_28 [1] : vector<8x8xf32> to vector<8xf32>
    %76 = vector.shape_cast %75 : vector<8xf32> to vector<8x1xf32>
    %77 = vector.broadcast %76 : vector<8x1xf32> to vector<8x8xf32>
    %78 = arith.subf %74, %77 : vector<8x8xf32>
    %79 = math.exp %78 : vector<8x8xf32>
    %cst_29 = arith.constant dense<0.000000e+00> : vector<8xf32>
    %80 = vector.multi_reduction <add>, %79, %cst_29 [1] : vector<8x8xf32> to vector<8xf32>
    %81 = vector.shape_cast %80 : vector<8xf32> to vector<8x1xf32>
    %82 = tpu.reciprocal %81 {approx = true} : vector<8x1xf32> -> vector<8x1xf32>
    %83 = vector.broadcast %82 : vector<8x1xf32> to vector<8x8xf32>
    %84 = arith.mulf %79, %83 : vector<8x8xf32>
    %85 = arith.truncf %84 : vector<8x8xf32> to vector<8x8xbf16>
    %cst_30 = arith.constant dense<0.000000e+00> : vector<8x64xf32>
    %86 = tpu.matmul %85, %70, %cst_30 {dimension_numbers = #tpu.dot_dimension_numbers<[1], [0], [0], [1], [0, 0, 1, 1], [], []>} : vector<8x8xbf16>, vector<8x64xbf16>, vector<8x64xf32> -> vector<8x64xf32>
    %87 = arith.truncf %86 : vector<8x64xf32> to vector<8x64xbf16>
    %88 = vector.extract_strided_slice %29 {offsets = [64, 0], sizes = [64, 128], strides = [1, 1]} : vector<128x128xbf16> to vector<64x128xbf16>
    %cst_31 = arith.constant dense<0.000000e+00> : vector<8x128xf32>
    %89 = tpu.matmul %87, %88, %cst_31 {dimension_numbers = #tpu.dot_dimension_numbers<[1], [0], [0], [1], [0, 0, 1, 1], [], []>} : vector<8x64xbf16>, vector<64x128xbf16>, vector<8x128xf32> -> vector<8x128xf32>
    %90 = arith.addf %64, %89 : vector<8x128xf32>
    %91 = arith.addf %1, %90 : vector<8x128xf32>
    %c0_32 = arith.constant 0 : index
    %c0_33 = arith.constant 0 : index
    %92 = vector.load %arg8[%c0_32, %c0_33] : memref<1x128xf32, #tpu.memory_space<vmem>>, vector<1x128xf32>
    %93 = arith.mulf %91, %91 : vector<8x128xf32>
    %cst_34 = arith.constant dense<0.000000e+00> : vector<8xf32>
    %94 = vector.multi_reduction <add>, %93, %cst_34 [1] : vector<8x128xf32> to vector<8xf32>
    %95 = vector.shape_cast %94 : vector<8xf32> to vector<8x1xf32>
    %cst_35 = arith.constant 1.280000e+02 : f32
    %96 = vector.broadcast %cst_35 : f32 to vector<8x1xf32>
    %97 = arith.divf %95, %96 : vector<8x1xf32>
    %cst_36 = arith.constant 9.99999974E-6 : f32
    %98 = vector.broadcast %cst_36 : f32 to vector<8x1xf32>
    %99 = arith.addf %97, %98 : vector<8x1xf32>
    %100 = math.rsqrt %99 : vector<8x1xf32>
    %101 = vector.broadcast %100 : vector<8x1xf32> to vector<8x128xf32>
    %102 = arith.mulf %91, %101 : vector<8x128xf32>
    %103 = vector.broadcast %92 : vector<1x128xf32> to vector<8x128xf32>
    %104 = arith.mulf %102, %103 : vector<8x128xf32>
    %105 = arith.truncf %104 : vector<8x128xf32> to vector<8x128xbf16>
    %c0_37 = arith.constant 0 : index
    %c0_38 = arith.constant 0 : index
    %106 = vector.load %arg9[%c0_37, %c0_38] : memref<128x512xbf16, #tpu.memory_space<vmem>>, vector<128x512xbf16>
    %cst_39 = arith.constant dense<0.000000e+00> : vector<8x512xf32>
    %107 = tpu.matmul %105, %106, %cst_39 {dimension_numbers = #tpu.dot_dimension_numbers<[1], [0], [0], [1], [0, 0, 1, 1], [], []>} : vector<8x128xbf16>, vector<128x512xbf16>, vector<8x512xf32> -> vector<8x512xf32>
    %108 = vector.extract_strided_slice %107 {offsets = [0, 0], sizes = [8, 256], strides = [1, 1]} : vector<8x512xf32> to vector<8x256xf32>
    %109 = arith.negf %108 : vector<8x256xf32>
    %110 = math.exp %109 : vector<8x256xf32>
    %cst_40 = arith.constant 1.000000e+00 : f32
    %111 = vector.broadcast %cst_40 : f32 to vector<8x256xf32>
    %112 = arith.addf %111, %110 : vector<8x256xf32>
    %113 = arith.divf %111, %112 : vector<8x256xf32>
    %114 = arith.mulf %108, %113 : vector<8x256xf32>
    %115 = vector.extract_strided_slice %107 {offsets = [0, 256], sizes = [8, 256], strides = [1, 1]} : vector<8x512xf32> to vector<8x256xf32>
    %116 = arith.mulf %114, %115 : vector<8x256xf32>
    %117 = arith.truncf %116 : vector<8x256xf32> to vector<8x256xbf16>
    %c0_41 = arith.constant 0 : index
    %c0_42 = arith.constant 0 : index
    %118 = vector.load %arg10[%c0_41, %c0_42] : memref<256x128xbf16, #tpu.memory_space<vmem>>, vector<256x128xbf16>
    %cst_43 = arith.constant dense<0.000000e+00> : vector<8x128xf32>
    %119 = tpu.matmul %117, %118, %cst_43 {dimension_numbers = #tpu.dot_dimension_numbers<[1], [0], [0], [1], [0, 0, 1, 1], [], []>} : vector<8x256xbf16>, vector<256x128xbf16>, vector<8x128xf32> -> vector<8x128xf32>
    %120 = arith.addf %91, %119 : vector<8x128xf32>
    %c0_44 = arith.constant 0 : index
    %c0_45 = arith.constant 0 : index
    %121 = vector.load %arg11[%c0_44, %c0_45] : memref<1x128xf32, #tpu.memory_space<vmem>>, vector<1x128xf32>
    %122 = arith.mulf %120, %120 : vector<8x128xf32>
    %cst_46 = arith.constant dense<0.000000e+00> : vector<8xf32>
    %123 = vector.multi_reduction <add>, %122, %cst_46 [1] : vector<8x128xf32> to vector<8xf32>
    %124 = vector.shape_cast %123 : vector<8xf32> to vector<8x1xf32>
    %cst_47 = arith.constant 1.280000e+02 : f32
    %125 = vector.broadcast %cst_47 : f32 to vector<8x1xf32>
    %126 = arith.divf %124, %125 : vector<8x1xf32>
    %cst_48 = arith.constant 9.99999974E-6 : f32
    %127 = vector.broadcast %cst_48 : f32 to vector<8x1xf32>
    %128 = arith.addf %126, %127 : vector<8x1xf32>
    %129 = math.rsqrt %128 : vector<8x1xf32>
    %130 = vector.broadcast %129 : vector<8x1xf32> to vector<8x128xf32>
    %131 = arith.mulf %120, %130 : vector<8x128xf32>
    %132 = vector.broadcast %121 : vector<1x128xf32> to vector<8x128xf32>
    %133 = arith.mulf %131, %132 : vector<8x128xf32>
    %c0_49 = arith.constant 0 : index
    %c0_50 = arith.constant 0 : index
    %c0_51 = arith.constant 0 : index
    %134 = vector.load %arg12[%c0_49, %c0_50, %c0_51] : memref<1x8x128xf32, #tpu.memory_space<vmem>>, vector<1x8x128xf32>
    %135 = vector.shape_cast %134 : vector<1x8x128xf32> to vector<8x128xf32>
    %136 = vector.shape_cast %133 : vector<8x128xf32> to vector<1x8x128xf32>
    tpu.vector_store %arg12[%c0_49, %c0_50, %c0_51], %136 {strides = array<i32>} : memref<1x8x128xf32, #tpu.memory_space<vmem>>, vector<1x8x128xf32>,
    return
  }
  func.func @transform_0(%arg0: i32) -> (i32, i32, i32) {
    %c0_i32 = arith.constant 0 : i32
    %c0_i32_0 = arith.constant 0 : i32
    %c0_i32_1 = arith.constant 0 : i32
    return %arg0, %c0_i32, %c0_i32_0 : i32, i32, i32
  }
  func.func @transform_1(%arg0: i32) -> (i32, i32, i32) {
    %c0_i32 = arith.constant 0 : i32
    %c0_i32_0 = arith.constant 0 : i32
    %c0_i32_1 = arith.constant 0 : i32
    return %arg0, %c0_i32, %c0_i32_0 : i32, i32, i32
  }
  func.func @transform_2(%arg0: i32) -> (i32, i32) {
    %c0_i32 = arith.constant 0 : i32
    %c0_i32_0 = arith.constant 0 : i32
    %c0_i32_1 = arith.constant 0 : i32
    return %c0_i32, %c0_i32_0 : i32, i32
  }
  func.func @transform_3(%arg0: i32) -> (i32, i32) {
    %c0_i32 = arith.constant 0 : i32
    %c0_i32_0 = arith.constant 0 : i32
    %c0_i32_1 = arith.constant 0 : i32
    return %c0_i32, %c0_i32_0 : i32, i32
  }
  func.func @transform_4(%arg0: i32) -> (i32, i32) {
    %c0_i32 = arith.constant 0 : i32
    %c0_i32_0 = arith.constant 0 : i32
    %c0_i32_1 = arith.constant 0 : i32
    return %c0_i32, %c0_i32_0 : i32, i32
  }
  func.func @transform_5(%arg0: i32) -> (i32, i32) {
    %c0_i32 = arith.constant 0 : i32
    %c0_i32_0 = arith.constant 0 : i32
    %c0_i32_1 = arith.constant 0 : i32
    return %c0_i32, %c0_i32_0 : i32, i32
  }
  func.func @transform_6(%arg0: i32) -> (i32, i32) {
    %c0_i32 = arith.constant 0 : i32
    %c0_i32_0 = arith.constant 0 : i32
    %c0_i32_1 = arith.constant 0 : i32
    return %c0_i32, %c0_i32_0 : i32, i32
  }
  func.func @transform_7(%arg0: i32) -> (i32, i32) {
    %c0_i32 = arith.constant 0 : i32
    %c0_i32_0 = arith.constant 0 : i32
    %c0_i32_1 = arith.constant 0 : i32
    return %c0_i32, %c0_i32_0 : i32, i32
  }
  func.func @transform_8(%arg0: i32) -> (i32, i32) {
    %c0_i32 = arith.constant 0 : i32
    %c0_i32_0 = arith.constant 0 : i32
    %c0_i32_1 = arith.constant 0 : i32
    return %c0_i32, %c0_i32_0 : i32, i32
  }
  func.func @transform_9(%arg0: i32) -> (i32, i32) {
    %c0_i32 = arith.constant 0 : i32
    %c0_i32_0 = arith.constant 0 : i32
    %c0_i32_1 = arith.constant 0 : i32
    return %c0_i32, %c0_i32_0 : i32, i32
  }
  func.func @transform_10(%arg0: i32) -> (i32, i32) {
    %c0_i32 = arith.constant 0 : i32
    %c0_i32_0 = arith.constant 0 : i32
    %c0_i32_1 = arith.constant 0 : i32
    return %c0_i32, %c0_i32_0 : i32, i32
  }
  func.func @transform_11(%arg0: i32) -> (i32, i32, i32) {
    %c0_i32 = arith.constant 0 : i32
    %c0_i32_0 = arith.constant 0 : i32
    %c0_i32_1 = arith.constant 0 : i32
    return %arg0, %c0_i32, %c0_i32_0 : i32, i32, i32
  }
}

module attributes {stable_mosaic.version = 11 : i64} {
  func.func @_flash_ce_kernel(%arg0: i32, %arg1: memref<14x128xf32, #tpu.memory_space<vmem>>, %arg2: memref<128x128xbf16, #tpu.memory_space<vmem>>, %arg3: memref<1x128xf32, #tpu.memory_space<vmem>>, %arg4: memref<14x1xi32, #tpu.memory_space<vmem>>, %arg5: memref<14x1xf32, #tpu.memory_space<vmem>>, %arg6: memref<14x1xf32, #tpu.memory_space<vmem>>, %arg7: memref<14x1xf32, #tpu.memory_space<vmem>>, %arg8: memref<14x1xf32, #tpu.memory_space<vmem>>) attributes {dimension_semantics = [#tpu.dimension_semantics<arbitrary>], iteration_bounds = array<i64: 2>, scalar_prefetch = 0 : i64, scratch_operands = 3 : i64, tpu.core_type = #tpu.core_type<tc>, window_params = [{pipeline_mode = #tpu.pipeline_mode<synchronous>, transform_indices = @transform_0, window_bounds = array<i64: 14, 128>}, {transform_indices = @transform_1, window_bounds = array<i64: 128, 128>}, {transform_indices = @transform_2, window_bounds = array<i64: 1, 128>}, {pipeline_mode = #tpu.pipeline_mode<synchronous>, transform_indices = @transform_3, window_bounds = array<i64: 14, 1>}, {pipeline_mode = #tpu.pipeline_mode<synchronous>, transform_indices = @transform_4, window_bounds = array<i64: 14, 1>}]} {
    %c0_i32 = arith.constant 0 : i32
    %0 = arith.cmpi eq, %arg0, %c0_i32 : i32
    %1 = arith.extui %0 : i1 to i32
    %c0_i32_0 = arith.constant 0 : i32
    %2 = arith.cmpi ne, %1, %c0_i32_0 : i32
    scf.if %2 {
      %cst_27 = arith.constant 0xFF800000 : f32
      %44 = vector.broadcast %cst_27 : f32 to vector<14x1xf32>
      %c0_28 = arith.constant 0 : index
      %c0_29 = arith.constant 0 : index
      %45 = vector.load %arg6[%c0_28, %c0_29] : memref<14x1xf32, #tpu.memory_space<vmem>>, vector<14x1xf32>
      tpu.vector_store %arg6[%c0_28, %c0_29], %44 {strides = array<i32>} : memref<14x1xf32, #tpu.memory_space<vmem>>, vector<14x1xf32>,
      %cst_30 = arith.constant 0.000000e+00 : f32
      %46 = vector.broadcast %cst_30 : f32 to vector<14x1xf32>
      %c0_31 = arith.constant 0 : index
      %c0_32 = arith.constant 0 : index
      %47 = vector.load %arg7[%c0_31, %c0_32] : memref<14x1xf32, #tpu.memory_space<vmem>>, vector<14x1xf32>
      tpu.vector_store %arg7[%c0_31, %c0_32], %46 {strides = array<i32>} : memref<14x1xf32, #tpu.memory_space<vmem>>, vector<14x1xf32>,
      %cst_33 = arith.constant 0.000000e+00 : f32
      %48 = vector.broadcast %cst_33 : f32 to vector<14x1xf32>
      %c0_34 = arith.constant 0 : index
      %c0_35 = arith.constant 0 : index
      %49 = vector.load %arg8[%c0_34, %c0_35] : memref<14x1xf32, #tpu.memory_space<vmem>>, vector<14x1xf32>
      tpu.vector_store %arg8[%c0_34, %c0_35], %48 {strides = array<i32>} : memref<14x1xf32, #tpu.memory_space<vmem>>, vector<14x1xf32>,
    } else {
    }
    %c0 = arith.constant 0 : index
    %c0_1 = arith.constant 0 : index
    %3 = vector.load %arg1[%c0, %c0_1] : memref<14x128xf32, #tpu.memory_space<vmem>>, vector<14x128xf32>
    %4 = arith.truncf %3 : vector<14x128xf32> to vector<14x128xbf16>
    %c0_2 = arith.constant 0 : index
    %c0_3 = arith.constant 0 : index
    %5 = vector.load %arg2[%c0_2, %c0_3] : memref<128x128xbf16, #tpu.memory_space<vmem>>, vector<128x128xbf16>
    %cst = arith.constant dense<0.000000e+00> : vector<14x128xf32>
    %6 = tpu.matmul %4, %5, %cst {dimension_numbers = #tpu.dot_dimension_numbers<[1], [0], [0], [1], [0, 0, 1, 1], [], []>} : vector<14x128xbf16>, vector<128x128xbf16>, vector<14x128xf32> -> vector<14x128xf32>
    %c0_4 = arith.constant 0 : index
    %c0_5 = arith.constant 0 : index
    %7 = vector.load %arg3[%c0_4, %c0_5] : memref<1x128xf32, #tpu.memory_space<vmem>>, vector<1x128xf32>
    %8 = vector.broadcast %7 : vector<1x128xf32> to vector<14x128xf32>
    %9 = arith.addf %6, %8 : vector<14x128xf32>
    %c0_6 = arith.constant 0 : index
    %c0_7 = arith.constant 0 : index
    %10 = vector.load %arg6[%c0_6, %c0_7] : memref<14x1xf32, #tpu.memory_space<vmem>>, vector<14x1xf32>
    %cst_8 = arith.constant dense<0xFF800000> : vector<14xf32>
    %11 = vector.multi_reduction <maximumf>, %9, %cst_8 [1] : vector<14x128xf32> to vector<14xf32>
    %12 = vector.shape_cast %11 : vector<14xf32> to vector<14x1xf32>
    %13 = arith.maximumf %10, %12 : vector<14x1xf32>
    %c0_9 = arith.constant 0 : index
    %c0_10 = arith.constant 0 : index
    %14 = vector.load %arg7[%c0_9, %c0_10] : memref<14x1xf32, #tpu.memory_space<vmem>>, vector<14x1xf32>
    %c0_11 = arith.constant 0 : index
    %c0_12 = arith.constant 0 : index
    %15 = vector.load %arg6[%c0_11, %c0_12] : memref<14x1xf32, #tpu.memory_space<vmem>>, vector<14x1xf32>
    %16 = arith.subf %15, %13 : vector<14x1xf32>
    %17 = math.exp %16 : vector<14x1xf32>
    %18 = arith.mulf %14, %17 : vector<14x1xf32>
    %19 = vector.broadcast %13 : vector<14x1xf32> to vector<14x128xf32>
    %20 = arith.subf %9, %19 : vector<14x128xf32>
    %21 = math.exp %20 : vector<14x128xf32>
    %cst_13 = arith.constant dense<0.000000e+00> : vector<14xf32>
    %22 = vector.multi_reduction <add>, %21, %cst_13 [1] : vector<14x128xf32> to vector<14xf32>
    %23 = vector.shape_cast %22 : vector<14xf32> to vector<14x1xf32>
    %24 = arith.addf %18, %23 : vector<14x1xf32>
    %c0_14 = arith.constant 0 : index
    %c0_15 = arith.constant 0 : index
    %25 = vector.load %arg7[%c0_14, %c0_15] : memref<14x1xf32, #tpu.memory_space<vmem>>, vector<14x1xf32>
    tpu.vector_store %arg7[%c0_14, %c0_15], %24 {strides = array<i32>} : memref<14x1xf32, #tpu.memory_space<vmem>>, vector<14x1xf32>,
    %c0_16 = arith.constant 0 : index
    %c0_17 = arith.constant 0 : index
    %26 = vector.load %arg6[%c0_16, %c0_17] : memref<14x1xf32, #tpu.memory_space<vmem>>, vector<14x1xf32>
    tpu.vector_store %arg6[%c0_16, %c0_17], %13 {strides = array<i32>} : memref<14x1xf32, #tpu.memory_space<vmem>>, vector<14x1xf32>,
    %27 = tpu.iota {dimensions = array<i32: 1>} : vector<14x128xi32>
    %c128_i32 = arith.constant 128 : i32
    %28 = arith.muli %arg0, %c128_i32 : i32
    %29 = vector.broadcast %28 : i32 to vector<14x128xi32>
    %30 = arith.addi %27, %29 : vector<14x128xi32>
    %c0_18 = arith.constant 0 : index
    %c0_19 = arith.constant 0 : index
    %31 = vector.load %arg8[%c0_18, %c0_19] : memref<14x1xf32, #tpu.memory_space<vmem>>, vector<14x1xf32>
    %c0_20 = arith.constant 0 : index
    %c0_21 = arith.constant 0 : index
    %32 = vector.load %arg4[%c0_20, %c0_21] : memref<14x1xi32, #tpu.memory_space<vmem>>, vector<14x1xi32>
    %33 = vector.broadcast %32 : vector<14x1xi32> to vector<14x128xi32>
    %34 = arith.cmpi eq, %30, %33 : vector<14x128xi32>
    %cst_22 = arith.constant 0.000000e+00 : f32
    %35 = vector.broadcast %cst_22 : f32 to vector<14x128xf32>
    %36 = arith.select %34, %9, %35 : vector<14x128xi1>, vector<14x128xf32>
    %cst_23 = arith.constant dense<0.000000e+00> : vector<14xf32>
    %37 = vector.multi_reduction <add>, %36, %cst_23 [1] : vector<14x128xf32> to vector<14xf32>
    %38 = vector.shape_cast %37 : vector<14xf32> to vector<14x1xf32>
    %39 = arith.addf %31, %38 : vector<14x1xf32>
    %c0_24 = arith.constant 0 : index
    %c0_25 = arith.constant 0 : index
    %40 = vector.load %arg8[%c0_24, %c0_25] : memref<14x1xf32, #tpu.memory_space<vmem>>, vector<14x1xf32>
    tpu.vector_store %arg8[%c0_24, %c0_25], %39 {strides = array<i32>} : memref<14x1xf32, #tpu.memory_space<vmem>>, vector<14x1xf32>,
    %c1_i32 = arith.constant 1 : i32
    %41 = arith.cmpi eq, %arg0, %c1_i32 : i32
    %42 = arith.extui %41 : i1 to i32
    %c0_i32_26 = arith.constant 0 : i32
    %43 = arith.cmpi ne, %42, %c0_i32_26 : i32
    scf.if %43 {
      %c0_27 = arith.constant 0 : index
      %c0_28 = arith.constant 0 : index
      %44 = vector.load %arg6[%c0_27, %c0_28] : memref<14x1xf32, #tpu.memory_space<vmem>>, vector<14x1xf32>
      %c0_29 = arith.constant 0 : index
      %c0_30 = arith.constant 0 : index
      %45 = vector.load %arg7[%c0_29, %c0_30] : memref<14x1xf32, #tpu.memory_space<vmem>>, vector<14x1xf32>
      %46 = math.log %45 : vector<14x1xf32>
      %47 = arith.addf %44, %46 : vector<14x1xf32>
      %c0_31 = arith.constant 0 : index
      %c0_32 = arith.constant 0 : index
      %48 = vector.load %arg8[%c0_31, %c0_32] : memref<14x1xf32, #tpu.memory_space<vmem>>, vector<14x1xf32>
      %49 = arith.subf %47, %48 : vector<14x1xf32>
      %c0_33 = arith.constant 0 : index
      %c0_34 = arith.constant 0 : index
      %50 = vector.load %arg5[%c0_33, %c0_34] : memref<14x1xf32, #tpu.memory_space<vmem>>, vector<14x1xf32>
      tpu.vector_store %arg5[%c0_33, %c0_34], %49 {strides = array<i32>} : memref<14x1xf32, #tpu.memory_space<vmem>>, vector<14x1xf32>,
    } else {
    }
    return
  }
  func.func @transform_0(%arg0: i32) -> (i32, i32) {
    %c0_i32 = arith.constant 0 : i32
    %c0_i32_0 = arith.constant 0 : i32
    %c0_i32_1 = arith.constant 0 : i32
    return %c0_i32, %c0_i32_0 : i32, i32
  }
  func.func @transform_1(%arg0: i32) -> (i32, i32) {
    %c0_i32 = arith.constant 0 : i32
    %c0_i32_0 = arith.constant 0 : i32
    return %c0_i32, %arg0 : i32, i32
  }
  func.func @transform_2(%arg0: i32) -> (i32, i32) {
    %c0_i32 = arith.constant 0 : i32
    %c0_i32_0 = arith.constant 0 : i32
    return %c0_i32, %arg0 : i32, i32
  }
  func.func @transform_3(%arg0: i32) -> (i32, i32) {
    %c0_i32 = arith.constant 0 : i32
    %c0_i32_0 = arith.constant 0 : i32
    %c0_i32_1 = arith.constant 0 : i32
    return %c0_i32, %c0_i32_0 : i32, i32
  }
  func.func @transform_4(%arg0: i32) -> (i32, i32) {
    %c0_i32 = arith.constant 0 : i32
    %c0_i32_0 = arith.constant 0 : i32
    %c0_i32_1 = arith.constant 0 : i32
    return %c0_i32, %c0_i32_0 : i32, i32
  }
}

</mosaic_0001>

<llo_original>
// kernel: _lambda_.4
$region0: #{_lambda_.4}
  #allocation0 [shape = 'u32[]', space=smem, size = 0x4, offset = 0x4, fixed_abs, tag = 'smem constant byte address 0x4 - core index']
  #allocation1 [shape = 'u32[72,128]{1,0:T(1,128)}', space=vmem, size = 0x9000, scoped, tag = 'internal scratch']
  %s0 = inlined_call_operand.vmem [shape: f32[8,192], index: 0, kind: input, shape index: {}]
  %s1 = inlined_call_operand.vmem [shape: bf16[192,128], index: 1, kind: input, shape index: {}]
  %s2 = inlined_call_operand.vmem [shape: f32[1,128], index: 2, kind: input, shape index: {}]
  %s3 = inlined_call_operand.vmem [shape: f32[8,128], index: 3, kind: output, shape index: {}]
  %s4 = sld [smem:[#allocation0]]
  $region22: #{_lambda_.4} parent=0
    _
  %s6 = ssub.s32 1, %s4
  %s7 = scalar_select 0, %s6, %s4
  // Predicated region
  $region2: #{_lambda_.4} parent=0 // pred_check
    _
  $region3: #{_lambda_.4} parent=0 // pred_check_branch
    %9 = sbr.rel (0) target = $region5
  $region4: #{_lambda_.4} parent=0 // pred_region
    _
  $region5: #{_lambda_.4} parent=0 // pred_fallthru
    _
  // Predicated region
  $region6: #{_lambda_.4} parent=0 // pred_check
    _
  $region7: #{_lambda_.4} parent=0 // pred_check_branch
    %11 = sbr.rel (0) target = $region9
  $region8: #{_lambda_.4} parent=0 // pred_region
    _
  $region9: #{_lambda_.4} parent=0 // pred_fallthru
    _
  // Predicated region
  $region10: #{_lambda_.4} parent=0 // pred_check
    _
  $region11: #{_lambda_.4} parent=0 // pred_check_branch
    %13 = sbr.rel (0) target = $region13
  $region12: #{_lambda_.4} parent=0 // pred_region
    _
  $region13: #{_lambda_.4} parent=0 // pred_fallthru
    _
  %v15 = vld [vmem:[%s0] sm:$0xff]
  %v16 = vld [vmem:[%s0 + $0x8] sm:$0xff]
  %v17 = vpack.c.bf16 %v15, %v15
  %v18 = vpack.c.bf16 %v16, %v16
  %v19 = vld [vmem:[%s1] sm:$0xf]
  %v20 = vld [vmem:[%s1 + $0x4] sm:$0xf]
  %v21 = vld [vmem:[%s1 + $0x8] sm:$0xf]
  %v22 = vld [vmem:[%s1 + $0xc] sm:$0xf]
  %v23 = vld [vmem:[%s1 + $0x10] sm:$0xf]
  %v24 = vld [vmem:[%s1 + $0x14] sm:$0xf]
  %v25 = vld [vmem:[%s1 + $0x18] sm:$0xf]
  %v26 = vld [vmem:[%s1 + $0x1c] sm:$0xf]
  %v27 = vld [vmem:[%s1 + $0x20] sm:$0xf]
  %v28 = vld [vmem:[%s1 + $0x24] sm:$0xf]
  %v29 = vld [vmem:[%s1 + $0x28] sm:$0xf]
  %v30 = vld [vmem:[%s1 + $0x2c] sm:$0xf]
  %v31 = vld [vmem:[%s1 + $0x30] sm:$0xf]
  %v32 = vld [vmem:[%s1 + $0x34] sm:$0xf]
  %v33 = vld [vmem:[%s1 + $0x38] sm:$0xf]
  %v34 = vld [vmem:[%s1 + $0x3c] sm:$0xf]
  %v35 = vld [vmem:[%s1 + $0x40] sm:$0xf]
  %v36 = vld [vmem:[%s1 + $0x44] sm:$0xf]
  %v37 = vld [vmem:[%s1 + $0x48] sm:$0xf]
  %v38 = vld [vmem:[%s1 + $0x4c] sm:$0xf]
  %v39 = vld [vmem:[%s1 + $0x50] sm:$0xf]
  %v40 = vld [vmem:[%s1 + $0x54] sm:$0xf]
  %v41 = vld [vmem:[%s1 + $0x58] sm:$0xf]
  %v42 = vld [vmem:[%s1 + $0x5c] sm:$0xf]
  %v43 = vld [vmem:[%s2] sm:$0x1]
  %v45 = vperm.slane %v43, 0
  %v71 = vunpack.c.l.b16 %v19
  %v72 = vunpack.c.l.b16 %v20
  %v73 = vunpack.c.l.b16 %v21
  %v74 = vunpack.c.l.b16 %v22
  %v75 = vunpack.c.l.b16 %v23
  %v76 = vunpack.c.l.b16 %v24
  %v77 = vunpack.c.l.b16 %v25
  %v78 = vunpack.c.l.b16 %v26
  %v79 = vunpack.c.l.b16 %v27
  %v80 = vunpack.c.l.b16 %v28
  %v81 = vunpack.c.l.b16 %v29
  %v82 = vunpack.c.l.b16 %v30
  %v83 = vunpack.c.l.b16 %v31
  %v84 = vunpack.c.l.b16 %v32
  %v85 = vunpack.c.l.b16 %v33
  %v86 = vunpack.c.l.b16 %v34
  %v87 = vunpack.c.l.b16 %v35
  %v88 = vunpack.c.l.b16 %v36
  %v89 = vunpack.c.l.b16 %v37
  %v90 = vunpack.c.l.b16 %v38
  %v91 = vunpack.c.l.b16 %v39
  %v92 = vunpack.c.l.b16 %v40
  %v93 = vunpack.c.l.b16 %v41
  %v94 = vunpack.c.l.b16 %v42
  %v95 = vpack.c.b16 %v72, %v71
  %v96 = vpack.c.b16 %v74, %v73
  %v97 = vpack.c.b16 %v76, %v75
  %v98 = vpack.c.b16 %v78, %v77
  %v99 = vpack.c.b16 %v80, %v79
  %v100 = vpack.c.b16 %v82, %v81
  %v101 = vpack.c.b16 %v84, %v83
  %v102 = vpack.c.b16 %v86, %v85
  %v103 = vpack.c.b16 %v88, %v87
  %v104 = vpack.c.b16 %v90, %v89
  %v105 = vpack.c.b16 %v92, %v91
  %v106 = vpack.c.b16 %v94, %v93
  %vm119 = vcmask 523264
  %v121 = vsel %vm119, %v18, 0
  %123 = vmatpush.bf16.msra.mxu0 %v102
  %124 = vmatpush.bf16.msra.mxu0 %v101
  %125 = vmatpush.bf16.msra.mxu0 %v100
  %126 = vmatpush.bf16.msra.mxu0 %v99
  %127 = vmatpush.bf16.msra.mxu0 %v98
  %128 = vmatpush.bf16.msra.mxu0 %v97
  %129 = vmatpush.bf16.msra.mxu0 %v96
  %130 = vmatpush.bf16.msra.mxu0 %v95
  %131 = vmatmul.bf16.gmra.mxu0 %v17
  %v132 = vpop.f32.mrf.mxu0
  %v133 = vadd.f32 %v45, %v132
  %v134 = vpop.f32.mrf.mxu0
  %135 = vdwg.mxu0
  %136 = vmatpush.bf16.msra.mxu0 0
  %137 = vmatpush.bf16.msra.mxu0 0
  %138 = vmatpush.bf16.msra.mxu0 0
  %139 = vmatpush.bf16.msra.mxu0 0
  %140 = vmatpush.bf16.msra.mxu0 %v106
  %141 = vmatpush.bf16.msra.mxu0 %v105
  %142 = vmatpush.bf16.msra.mxu0 %v104
  %143 = vmatpush.bf16.msra.mxu0 %v103
  %144 = vmatmul.bf16.gmra.mxu0 %v121
  %v145 = vpop.f32.mrf.mxu0
  %v146 = vadd.f32 %v133, %v145
  %v147 = vpop.f32.mrf.mxu0
  %148 = vdwg.mxu0
  %149 = vst [vmem:[%s3] sm:$0xff] %v146
  // Predicated region
  $region14: #{_lambda_.4} parent=0 // pred_check
    _
  $region15: #{_lambda_.4} parent=0 // pred_check_branch
    %151 = sbr.rel (0) target = $region17
  $region16: #{_lambda_.4} parent=0 // pred_region
    _
  $region17: #{_lambda_.4} parent=0 // pred_fallthru
    _
  // Predicated region
  $region18: #{_lambda_.4} parent=0 // pred_check
    _
  $region19: #{_lambda_.4} parent=0 // pred_check_branch
    %153 = sbr.rel (0) target = $region21
  $region20: #{_lambda_.4} parent=0 // pred_region
    _
  $region21: #{_lambda_.4} parent=0 // pred_fallthru
    _

// kernel: _lambda_.7
$region0: #{_lambda_.7}
  #allocation0 [shape = 'u32[]', space=smem, size = 0x4, offset = 0x4, fixed_abs, tag = 'smem constant byte address 0x4 - core index']
  #allocation1 [shape = 'u32[72,128]{1,0:T(1,128)}', space=vmem, size = 0x9000, scoped, tag = 'internal scratch']
  #allocation2 [shape = 'f32[14,1]{1,0:T(8,128)}', space=vmem, size = 0x2000, scoped, tag = 'scratch operand']
  #allocation3 [shape = 'f32[14,1]{1,0:T(8,128)}', space=vmem, size = 0x2000, scoped, tag = 'scratch operand']
  #allocation4 [shape = 'f32[14,1]{1,0:T(8,128)}', space=vmem, size = 0x2000, scoped, tag = 'scratch operand']
  %s0 = inlined_call_operand.vmem [shape: f32[14,128], index: 0, kind: input, shape index: {}]
  %s1 = inlined_call_operand.vmem [shape: bf16[128,256], index: 1, kind: input, shape index: {}]
  %s2 = inlined_call_operand.vmem [shape: f32[1,256], index: 2, kind: input, shape index: {}]
  %s3 = inlined_call_operand.vmem [shape: s32[14,1], index: 3, kind: input, shape index: {}]
  %s4 = inlined_call_operand.vmem [shape: f32[14,1], index: 4, kind: output, shape index: {}]
  %s5 = sld [smem:[#allocation0]]
  $region98: #{_lambda_.7} parent=0
    _
  %s7 = ssub.s32 1, %s5
  %s8 = scalar_select 0, %s7, %s5
  $region1: #{_lambda_.7} parent=0
    #allocation5 [shape = 'u8[65536]{0}', space=vmem, size = 0x10000, scoped, tag = 'input window, operand 1']
    loop: start=0, step=1, limit=4
    $region2: #{_lambda_.7} parent=1 // loop_pre_header
      _
    $region3: #{_lambda_.7} parent=1 // loop_header
      %s10 = sphi 0, %s14
      %p11 = scmp.ge.s32.totalorder %s10, 4
      %s18 = sphi 0, %s18
      %s20 = sphi 0, %s18
      %s21 = sphi 0, %s20
      %s35 = sphi 0, %s21
      %s41 = sphi 0, %s43
      %s44 = sphi 0, %s41
      %s45 = sphi 0, %s44
      %s61 = sphi 0, %s45
      %s67 = sphi 0, %s69
      %s70 = sphi 0, %s67
      %s71 = sphi 0, %s70
      %s87 = sphi 0, %s71
      %s91 = sphi 0, %s91
      %s93 = sphi 0, %s91
      %s94 = sphi 0, %s93
      %s108 = sphi 0, %s94
      %s112 = sphi 0, %s112
      %s114 = sphi 0, %s112
      %s115 = sphi 0, %s114
      %s129 = sphi 0, %s115
    $region4: #{_lambda_.7} parent=1 // loop_header_branch
      %13 = sbr.rel (%p11) target = $region8
    $region5: #{_lambda_.7} parent=1 // loop_body
      %s15 = ssub.s32 %s10, 1
      %s16 = ssub.s32 %s10, 2
      %s17 = sadd.s32 %s10, 1
      %s19 = sadd.s32 %s18, 1
      %p22 = scmp.eq.s32.totalorder %s10, 1
      %p23 = scmp.ne.s32.totalorder %s18, %s20
      %p24 = scmp.eq.s32.totalorder %s10, 0
      %p25 = por %p23, %p24
      %p26 = scmp.ne.s32.totalorder %s18, %s20
      %p27 = scmp.eq.s32.totalorder %s15, 1
      %p28 = por %p26, %p27
      %p29 = scmp.ne.s32.totalorder %s20, %s21
      %p30 = scmp.eq.s32.totalorder %s15, 0
      %p31 = por %p29, %p30
      %p32 = scmp.ne.s32.totalorder %s20, %s21
      %p33 = scmp.eq.s32.totalorder %s16, 1
      %p34 = por %p32, %p33
      %p36 = scmp.ne.s32.totalorder %s21, %s35
      %p37 = scmp.eq.s32.totalorder %s16, 0
      %p38 = por %p36, %p37
      %s39 = ssub.s32 %s10, %s17
      %p40 = scmp.eq.s32.totalorder %s39, 0
      %s42 = sadd.s32 %s41, 1
      %s43 = scalar_select %p40, %s41, %s42
      %p46 = pneg %p40
      %p47 = scmp.eq.s32.totalorder %s10, 1
      %p48 = por %p46, %p47
      %p49 = scmp.ne.s32.totalorder %s41, %s44
      %p50 = scmp.eq.s32.totalorder %s10, 0
      %p51 = por %p49, %p50
      %p52 = scmp.ne.s32.totalorder %s41, %s44
      %p53 = scmp.eq.s32.totalorder %s15, 1
      %p54 = por %p52, %p53
      %p55 = scmp.ne.s32.totalorder %s44, %s45
      %p56 = scmp.eq.s32.totalorder %s15, 0
      %p57 = por %p55, %p56
      %p58 = scmp.ne.s32.totalorder %s44, %s45
      %p59 = scmp.eq.s32.totalorder %s16, 1
      %p60 = por %p58, %p59
      %p62 = scmp.ne.s32.totalorder %s45, %s61
      %p63 = scmp.eq.s32.totalorder %s16, 0
      %p64 = por %p62, %p63
      %s65 = ssub.s32 %s10, %s17
      %p66 = scmp.eq.s32.totalorder %s65, 0
      %s68 = sadd.s32 %s67, 1
      %s69 = scalar_select %p66, %s67, %s68
      %p72 = pneg %p66
      %p73 = scmp.eq.s32.totalorder %s10, 1
      %p74 = por %p72, %p73
      %p75 = scmp.ne.s32.totalorder %s67, %s70
      %p76 = scmp.eq.s32.totalorder %s10, 0
      %p77 = por %p75, %p76
      %p78 = scmp.ne.s32.totalorder %s67, %s70
      %p79 = scmp.eq.s32.totalorder %s15, 1
      %p80 = por %p78, %p79
      %p81 = scmp.ne.s32.totalorder %s70, %s71
      %p82 = scmp.eq.s32.totalorder %s15, 0
      %p83 = por %p81, %p82
      %p84 = scmp.ne.s32.totalorder %s70, %s71
      %p85 = scmp.eq.s32.totalorder %s16, 1
      %p86 = por %p84, %p85
      %p88 = scmp.ne.s32.totalorder %s71, %s87
      %p89 = scmp.eq.s32.totalorder %s16, 0
      %p90 = por %p88, %p89
      %s92 = sadd.s32 %s91, 1
      %p95 = scmp.eq.s32.totalorder %s10, 1
      %p96 = scmp.ne.s32.totalorder %s91, %s93
      %p97 = scmp.eq.s32.totalorder %s10, 0
      %p98 = por %p96, %p97
      %p99 = scmp.ne.s32.totalorder %s91, %s93
      %p100 = scmp.eq.s32.totalorder %s15, 1
      %p101 = por %p99, %p100
      %p102 = scmp.ne.s32.totalorder %s93, %s94
      %p103 = scmp.eq.s32.totalorder %s15, 0
      %p104 = por %p102, %p103
      %p105 = scmp.ne.s32.totalorder %s93, %s94
      %p106 = scmp.eq.s32.totalorder %s16, 1
      %p107 = por %p105, %p106
      %p109 = scmp.ne.s32.totalorder %s94, %s108
      %p110 = scmp.eq.s32.totalorder %s16, 0
      %p111 = por %p109, %p110
      %s113 = sadd.s32 %s112, 1
      %p116 = scmp.eq.s32.totalorder %s10, 1
      %p117 = scmp.ne.s32.totalorder %s112, %s114
      %p118 = scmp.eq.s32.totalorder %s10, 0
      %p119 = por %p117, %p118
      %p120 = scmp.ne.s32.totalorder %s112, %s114
      %p121 = scmp.eq.s32.totalorder %s15, 1
      %p122 = por %p120, %p121
      %p123 = scmp.ne.s32.totalorder %s114, %s115
      %p124 = scmp.eq.s32.totalorder %s15, 0
      %p125 = por %p123, %p124
      %p126 = scmp.ne.s32.totalorder %s114, %s115
      %p127 = scmp.eq.s32.totalorder %s16, 1
      %p128 = por %p126, %p127
      %p130 = scmp.ne.s32.totalorder %s115, %s129
      %p131 = scmp.eq.s32.totalorder %s16, 0
      %p132 = por %p130, %p131
      %p133 = scmp.le.s32.totalorder 1, %s10
      %p134 = scmp.lt.s32.totalorder %s10, 3
      %p135 = pnand %p133, %p134
      %p136 = pneg %p135
      // Predicated region
      $region9: #{_lambda_.7} parent=5 // pred_check
        _
      $region10: #{_lambda_.7} parent=5 // pred_check_branch
        %138 = sbr.rel (%p135) target = $region12
      $region11: #{_lambda_.7} parent=5 // pred_region
        %s139 = ssub.s32 %s10, 1
        // Predicated region
        $region13: #{_lambda_.7} parent=11 // pred_check
          %p140 = pneg %p31
        $region14: #{_lambda_.7} parent=11 // pred_check_branch
          %142 = sbr.rel (%p140) target = $region16
        $region15: #{_lambda_.7} parent=11 // pred_region
          _
        $region16: #{_lambda_.7} parent=11 // pred_fallthru
          _
        // Predicated region
        $region17: #{_lambda_.7} parent=11 // pred_check
          %p143 = pneg %p104
        $region18: #{_lambda_.7} parent=11 // pred_check_branch
          %145 = sbr.rel (%p143) target = $region20
        $region19: #{_lambda_.7} parent=11 // pred_region
          _
        $region20: #{_lambda_.7} parent=11 // pred_fallthru
          _
      $region12: #{_lambda_.7} parent=5 // pred_fallthru
        _
      %p146 = scmp.lt.s32.totalorder %s10, 2
      // Predicated region
      $region21: #{_lambda_.7} parent=5 // pred_check
        %p147 = pneg %p146
      $region22: #{_lambda_.7} parent=5 // pred_check_branch
        %149 = sbr.rel (%p147) target = $region24
      $region23: #{_lambda_.7} parent=5 // pred_region
        // Predicated region
        $region25: #{_lambda_.7} parent=23 // pred_check
          %p150 = pneg %p51
        $region26: #{_lambda_.7} parent=23 // pred_check_branch
          %152 = sbr.rel (%p150) target = $region28
        $region27: #{_lambda_.7} parent=23 // pred_region
          %s153 = sand.u32 %s41, 1
          %s154 = sand.u32 %s41, 1
          %s155 = smul.addr %s154, 64
          %s156 = scalar_lea.vmem [#allocation5], %s155
          %s157 = smul.addr %s10, 4
          %s158 = scalar_lea.vmem %s1, %s157
          // Predicated region
          $region29: #{_lambda_.7} parent=27 // pred_check
            _
          $region30: #{_lambda_.7} parent=27 // pred_check_branch
            %160 = sbr.rel (0) target = $region32
          $region31: #{_lambda_.7} parent=27 // pred_region
            // Predicated region
            $region33: #{_lambda_.7} parent=31 // pred_check
              _
            $region34: #{_lambda_.7} parent=31 // pred_check_branch
              %162 = sbr.rel target = $region36
            $region35: #{_lambda_.7} parent=31 // pred_region
              // Predicated region
              $region48: #{_lambda_.7} parent=35 // pred_check
                _
              $region49: #{_lambda_.7} parent=35 // pred_check_branch
                %208 = sbr.rel (0) target = $region51
              $region50: #{_lambda_.7} parent=35 // pred_region
                loop: start=0, step=1, limit=1
                $region52: #{_lambda_.7} parent=50 // loop_pre_header
                  _
                $region53: #{_lambda_.7} parent=50 // loop_header
                  %s210 = sphi 0, %s214
                  %p211 = scmp.ge.s32.totalorder %s210, 1
                  %s215 = sphi %s158, %s158
                  %s216 = sphi %s156, %s156
                $region54: #{_lambda_.7} parent=50 // loop_header_branch
                  %213 = sbr.rel (%p211) target = $region58
                $region55: #{_lambda_.7} parent=50 // loop_body
                  _
                $region56: #{_lambda_.7} parent=50 // loop_footer
                  %s214 = sadd.s32 1, %s210
                $region57: #{_lambda_.7} parent=50 // loop_footer_branch
                  %209 = sbr.rel target = $region53
                $region58: #{_lambda_.7} parent=50 // loop_exit
                  _
                %s218 = ssub.s32 16, 1
                loop: start=0, step=1, limit=1
                $region59: #{_lambda_.7} parent=50 // loop_pre_header
                  _
                $region60: #{_lambda_.7} parent=50 // loop_header
                  %s220 = sphi 0, %s224
                  %p221 = scmp.ge.s32.totalorder %s220, 1
                  %s225 = sphi %s158, %s158
                  %s226 = sphi %s156, %s156
                $region61: #{_lambda_.7} parent=50 // loop_header_branch
                  %223 = sbr.rel (%p221) target = $region65
                $region62: #{_lambda_.7} parent=50 // loop_body
                  %v227 = vld [vmem:[%s225] sm:%s218]
                  %228 = vst [vmem:[%s226] sm:%s218] %v227
                  %v229 = vld [vmem:[%s225 + $0x8] sm:%s218]
                  %230 = vst [vmem:[%s226 + $0x4] sm:%s218] %v229
                  %v231 = vld [vmem:[%s225 + $0x10] sm:%s218]
                  %232 = vst [vmem:[%s226 + $0x8] sm:%s218] %v231
                  %v233 = vld [vmem:[%s225 + $0x18] sm:%s218]
                  %234 = vst [vmem:[%s226 + $0xc] sm:%s218] %v233
                  %v235 = vld [vmem:[%s225 + $0x20] sm:%s218]
                  %236 = vst [vmem:[%s226 + $0x10] sm:%s218] %v235
                  %v237 = vld [vmem:[%s225 + $0x28] sm:%s218]
                  %238 = vst [vmem:[%s226 + $0x14] sm:%s218] %v237
                  %v239 = vld [vmem:[%s225 + $0x30] sm:%s218]
                  %240 = vst [vmem:[%s226 + $0x18] sm:%s218] %v239
                  %v241 = vld [vmem:[%s225 + $0x38] sm:%s218]
                  %242 = vst [vmem:[%s226 + $0x1c] sm:%s218] %v241
                  %v243 = vld [vmem:[%s225 + $0x40] sm:%s218]
                  %244 = vst [vmem:[%s226 + $0x20] sm:%s218] %v243
                  %v245 = vld [vmem:[%s225 + $0x48] sm:%s218]
                  %246 = vst [vmem:[%s226 + $0x24] sm:%s218] %v245
                  %v247 = vld [vmem:[%s225 + $0x50] sm:%s218]
                  %248 = vst [vmem:[%s226 + $0x28] sm:%s218] %v247
                  %v249 = vld [vmem:[%s225 + $0x58] sm:%s218]
                  %250 = vst [vmem:[%s226 + $0x2c] sm:%s218] %v249
                  %v251 = vld [vmem:[%s225 + $0x60] sm:%s218]
                  %252 = vst [vmem:[%s226 + $0x30] sm:%s218] %v251
                  %v253 = vld [vmem:[%s225 + $0x68] sm:%s218]
                  %254 = vst [vmem:[%s226 + $0x34] sm:%s218] %v253
                  %v255 = vld [vmem:[%s225 + $0x70] sm:%s218]
                  %256 = vst [vmem:[%s226 + $0x38] sm:%s218] %v255
                  %v257 = vld [vmem:[%s225 + $0x78] sm:%s218]
                  %258 = vst [vmem:[%s226 + $0x3c] sm:%s218] %v257
                $region63: #{_lambda_.7} parent=50 // loop_footer
                  %s224 = sadd.s32 1, %s220
                $region64: #{_lambda_.7} parent=50 // loop_footer_branch
                  %219 = sbr.rel target = $region60
                $region65: #{_lambda_.7} parent=50 // loop_exit
                  _
              $region51: #{_lambda_.7} parent=35 // pred_fallthru
                _
            $region36: #{_lambda_.7} parent=31 // pred_fallthru
              _
            // Predicated region
            $region37: #{_lambda_.7} parent=31 // pred_check
              _
            $region38: #{_lambda_.7} parent=31 // pred_check_branch
              %164 = sbr.rel (0) target = $region40
            $region39: #{_lambda_.7} parent=31 // pred_region
              %s166 = ssub.s32 16, 1
              loop: start=0, step=1, limit=1
              $region41: #{_lambda_.7} parent=39 // loop_pre_header
                _
              $region42: #{_lambda_.7} parent=39 // loop_header
                %s168 = sphi 0, %s172
                %p169 = scmp.ge.s32.totalorder %s168, 1
                %s173 = sphi %s158, %s158
                %s174 = sphi %s156, %s156
              $region43: #{_lambda_.7} parent=39 // loop_header_branch
                %171 = sbr.rel (%p169) target = $region47
              $region44: #{_lambda_.7} parent=39 // loop_body
                %v175 = vld [vmem:[%s173] sm:%s166]
                %176 = vst [vmem:[%s174] sm:%s166] %v175
                %v177 = vld [vmem:[%s173 + $0x8] sm:%s166]
                %178 = vst [vmem:[%s174 + $0x4] sm:%s166] %v177
                %v179 = vld [vmem:[%s173 + $0x10] sm:%s166]
                %180 = vst [vmem:[%s174 + $0x8] sm:%s166] %v179
                %v181 = vld [vmem:[%s173 + $0x18] sm:%s166]
                %182 = vst [vmem:[%s174 + $0xc] sm:%s166] %v181
                %v183 = vld [vmem:[%s173 + $0x20] sm:%s166]
                %184 = vst [vmem:[%s174 + $0x10] sm:%s166] %v183
                %v185 = vld [vmem:[%s173 + $0x28] sm:%s166]
                %186 = vst [vmem:[%s174 + $0x14] sm:%s166] %v185
                %v187 = vld [vmem:[%s173 + $0x30] sm:%s166]
                %188 = vst [vmem:[%s174 + $0x18] sm:%s166] %v187
                %v189 = vld [vmem:[%s173 + $0x38] sm:%s166]
                %190 = vst [vmem:[%s174 + $0x1c] sm:%s166] %v189
                %v191 = vld [vmem:[%s173 + $0x40] sm:%s166]
                %192 = vst [vmem:[%s174 + $0x20] sm:%s166] %v191
                %v193 = vld [vmem:[%s173 + $0x48] sm:%s166]
                %194 = vst [vmem:[%s174 + $0x24] sm:%s166] %v193
                %v195 = vld [vmem:[%s173 + $0x50] sm:%s166]
                %196 = vst [vmem:[%s174 + $0x28] sm:%s166] %v195
                %v197 = vld [vmem:[%s173 + $0x58] sm:%s166]
                %198 = vst [vmem:[%s174 + $0x2c] sm:%s166] %v197
                %v199 = vld [vmem:[%s173 + $0x60] sm:%s166]
                %200 = vst [vmem:[%s174 + $0x30] sm:%s166] %v199
                %v201 = vld [vmem:[%s173 + $0x68] sm:%s166]
                %202 = vst [vmem:[%s174 + $0x34] sm:%s166] %v201
                %v203 = vld [vmem:[%s173 + $0x70] sm:%s166]
                %204 = vst [vmem:[%s174 + $0x38] sm:%s166] %v203
                %v205 = vld [vmem:[%s173 + $0x78] sm:%s166]
                %206 = vst [vmem:[%s174 + $0x3c] sm:%s166] %v205
              $region45: #{_lambda_.7} parent=39 // loop_footer
                %s172 = sadd.s32 1, %s168
              $region46: #{_lambda_.7} parent=39 // loop_footer_branch
                %167 = sbr.rel target = $region42
              $region47: #{_lambda_.7} parent=39 // loop_exit
                _
            $region40: #{_lambda_.7} parent=31 // pred_fallthru
              _
          $region32: #{_lambda_.7} parent=27 // pred_fallthru
            _
          %259 = vnop
        $region28: #{_lambda_.7} parent=23 // pred_fallthru
          _
        // Predicated region
        $region66: #{_lambda_.7} parent=23 // pred_check
          %p260 = pneg %p77
        $region67: #{_lambda_.7} parent=23 // pred_check_branch
          %262 = sbr.rel (%p260) target = $region69
        $region68: #{_lambda_.7} parent=23 // pred_region
          %p263 = scmp.lt.s32.totalorder %s10, 1
          %s264 = scalar_select %p263, %s10, 1
          %s265 = scalar_lea.vmem %s2, %s264
        $region69: #{_lambda_.7} parent=23 // pred_fallthru
          _
      $region24: #{_lambda_.7} parent=5 // pred_fallthru
        _
      %p266 = scmp.le.s32.totalorder 1, %s10
      %p267 = scmp.lt.s32.totalorder %s10, 3
      %p268 = pnand %p266, %p267
      %p269 = pneg %p268
      // Predicated region
      $region70: #{_lambda_.7} parent=5 // pred_check
        _
      $region71: #{_lambda_.7} parent=5 // pred_check_branch
        %271 = sbr.rel (%p268) target = $region73
      $region72: #{_lambda_.7} parent=5 // pred_region
        %s272 = ssub.s32 %s10, 1
        %s273 = sand.u32 %s44, 1
        %s274 = sand.u32 %s44, 1
        %s275 = smul.addr %s274, 64
        %s276 = scalar_lea.vmem [#allocation5], %s275
        // Predicated region
        $region74: #{_lambda_.7} parent=72 // pred_check
          %p277 = pneg %p57
        $region75: #{_lambda_.7} parent=72 // pred_check_branch
          %279 = sbr.rel (%p277) target = $region77
        $region76: #{_lambda_.7} parent=72 // pred_region
          _
        $region77: #{_lambda_.7} parent=72 // pred_fallthru
          _
        %p280 = pneg %p31
        %p281 = pneg %p28
        %s282 = sand.u32 %s44, 1
        %s283 = sand.u32 %s44, 1
        %s284 = smul.addr %s283, 64
        %s285 = scalar_lea.vmem [#allocation5], %s284
        %p286 = pneg %p57
        %p287 = pneg %p54
        %p288 = scmp.lt.s32.totalorder %s15, 1
        %s289 = scalar_select %p288, %s15, 1
        %s290 = scalar_lea.vmem %s2, %s289
        %p291 = pneg %p83
        %p292 = pneg %p80
        %p293 = pneg %p104
        %p294 = pneg %p101
        %p295 = pneg %p125
        %p296 = pneg %p122
        %p297 = scmp.lt.s32.totalorder %s15, 1
        %s298 = scalar_select %p297, %s15, 1
        %s299 = scalar_lea.vmem %s2, %s298
        %p300 = scmp.eq.s32.totalorder %s15, 0
        // Predicated region
        $region78: #{_lambda_.7} parent=72 // pred_check
          %p301 = pneg %p300
        $region79: #{_lambda_.7} parent=72 // pred_check_branch
          %303 = sbr.rel (%p301) target = $region81
        $region80: #{_lambda_.7} parent=72 // pred_region
          %vm304 = vcmask 7168
          %305 = vst.msk [vmem:[#allocation2] sm:$0xff] %vm304, -inf
          %vm306 = vcmask 5120
          %307 = vst.msk [vmem:[#allocation2 + $0x8] sm:$0x3f] %vm306, -inf
          %308 = vst.msk [vmem:[#allocation3] sm:$0xff] %vm304, 0.0
          %309 = vst.msk [vmem:[#allocation3 + $0x8] sm:$0x3f] %vm306, 0.0
          %310 = vst.msk [vmem:[#allocation4] sm:$0xff] %vm304, 0.0
          %311 = vst.msk [vmem:[#allocation4 + $0x8] sm:$0x3f] %vm306, 0.0
        $region81: #{_lambda_.7} parent=72 // pred_fallthru
          _
        %v312 = vld [vmem:[%s0] sm:$0xff]
        %v313 = vld [vmem:[%s0 + $0x8] sm:$0x3f]
        %v314 = vpack.c.bf16 %v313, %v312
        %v315 = vld [vmem:[%s276] sm:$0xf]
        %v316 = vld [vmem:[%s276 + $0x4] sm:$0xf]
        %v317 = vld [vmem:[%s276 + $0x8] sm:$0xf]
        %v318 = vld [vmem:[%s276 + $0xc] sm:$0xf]
        %v319 = vld [vmem:[%s276 + $0x10] sm:$0xf]
        %v320 = vld [vmem:[%s276 + $0x14] sm:$0xf]
        %v321 = vld [vmem:[%s276 + $0x18] sm:$0xf]
        %v322 = vld [vmem:[%s276 + $0x1c] sm:$0xf]
        %v323 = vld [vmem:[%s276 + $0x20] sm:$0xf]
        %v324 = vld [vmem:[%s276 + $0x24] sm:$0xf]
        %v325 = vld [vmem:[%s276 + $0x28] sm:$0xf]
        %v326 = vld [vmem:[%s276 + $0x2c] sm:$0xf]
        %v327 = vld [vmem:[%s276 + $0x30] sm:$0xf]
        %v328 = vld [vmem:[%s276 + $0x34] sm:$0xf]
        %v329 = vld [vmem:[%s276 + $0x38] sm:$0xf]
        %v330 = vld [vmem:[%s276 + $0x3c] sm:$0xf]
        %v331 = vld [vmem:[%s299] sm:$0x1]
        %v333 = vperm.slane %v331, 0
        %v351 = vunpack.c.l.b16 %v315
        %v352 = vunpack.c.l.b16 %v316
        %v353 = vunpack.c.l.b16 %v317
        %v354 = vunpack.c.l.b16 %v318
        %v355 = vunpack.c.l.b16 %v319
        %v356 = vunpack.c.l.b16 %v320
        %v357 = vunpack.c.l.b16 %v321
        %v358 = vunpack.c.l.b16 %v322
        %v359 = vunpack.c.l.b16 %v323
        %v360 = vunpack.c.l.b16 %v324
        %v361 = vunpack.c.l.b16 %v325
        %v362 = vunpack.c.l.b16 %v326
        %v363 = vunpack.c.l.b16 %v327
        %v364 = vunpack.c.l.b16 %v328
        %v365 = vunpack.c.l.b16 %v329
        %v366 = vunpack.c.l.b16 %v330
        %v367 = vpack.c.b16 %v352, %v351
        %v368 = vpack.c.b16 %v354, %v353
        %v369 = vpack.c.b16 %v356, %v355
        %v370 = vpack.c.b16 %v358, %v357
        %v371 = vpack.c.b16 %v360, %v359
        %v372 = vpack.c.b16 %v362, %v361
        %v373 = vpack.c.b16 %v364, %v363
        %v374 = vpack.c.b16 %v366, %v365
        %383 = vmatpush.bf16.msra.mxu0 %v374
        %384 = vmatpush.bf16.msra.mxu0 %v373
        %385 = vmatpush.bf16.msra.mxu0 %v372
        %386 = vmatpush.bf16.msra.mxu0 %v371
        %387 = vmatpush.bf16.msra.mxu0 %v370
        %388 = vmatpush.bf16.msra.mxu0 %v369
        %389 = vmatpush.bf16.msra.mxu0 %v368
        %390 = vmatpush.bf16.msra.mxu0 %v367
        %391 = vmatmul.bf16.gmra.mxu0 %v314
        %v392 = vpop.f32.mrf.mxu0
        %v393 = vadd.f32 %v333, %v392
        %v394 = vpop.f32.mrf.mxu0
        %v395 = vadd.f32 %v333, %v394
        %396 = vdwg.mxu0
        %v397 = vld [vmem:[#allocation2] sm:$0xff]
        %v398 = vld [vmem:[#allocation2 + $0x8] sm:$0x3f]
        %399 = vmax.xlane.f32.xlu0 %v393
        %v400 = vpop.xlane.xlu0 %399
        %vm401 = vcmask 1045504
        %v402 = vsel %vm401, %v395, -inf
        %403 = vmax.xlane.f32.xlu0 %v402
        %v404 = vpop.xlane.xlu0 %403
        %v405 = vmax.f32 %v397, %v400
        %v406 = vmax.f32 %v398, %v404
        %v407 = vld [vmem:[#allocation3] sm:$0xff]
        %v408 = vld [vmem:[#allocation3 + $0x8] sm:$0x3f]
        %v409 = vsub.f32 %v397, %v405
        %v410 = vsub.f32 %v398, %v406
        %v411 = vmul.f32 %v409, 1.442695
        %v412 = vpow.pop %v411
        %v413 = vmul.f32 %v410, 1.442695
        %v414 = vpow.pop %v413
        %v415 = vmul.f32 %v407, %v412
        %v416 = vmul.f32 %v408, %v414
        %418 = vset.pattern.permute.xlu0 0
        %419 = vperm.xlu0 %418, %v405
        %v420 = vpop.permute.xlu0 %419
        %423 = vset.pattern.permute.xlu0 0
        %424 = vperm.xlu0 %423, %v406
        %v425 = vpop.permute.xlu0 %424
        %v427 = vsub.f32 %v393, %v420
        %v428 = vsub.f32 %v395, %v425
        %v429 = vmul.f32 %v427, 1.442695
        %v430 = vpow.pop %v429
        %v431 = vmul.f32 %v428, 1.442695
        %v432 = vpow.pop %v431
        %433 = vadd.xlane.f32.xlu0 %v430
        %v434 = vpop.xlane.xlu0 %433
        %v435 = vsel %vm401, %v432, 0.0
        %436 = vadd.xlane.f32.xlu0 %v435
        %v437 = vpop.xlane.xlu0 %436
        %v438 = vadd.f32 %v415, %v434
        %v439 = vadd.f32 %v416, %v437
        %vm440 = vcmask 7168
        %441 = vst.msk [vmem:[#allocation3] sm:$0xff] %vm440, %v438
        %vm442 = vcmask 5120
        %443 = vst.msk [vmem:[#allocation3 + $0x8] sm:$0x3f] %vm442, %v439
        %444 = vst.msk [vmem:[#allocation2] sm:$0xff] %vm440, %v405
        %445 = vst.msk [vmem:[#allocation2 + $0x8] sm:$0x3f] %vm442, %v406
        %v446 = vlaneseq
        %v447 = vand.u32 %v446, 127
        %s448 = smul.u32 %s15, 128
        %v449 = vstv %s448
        %v450 = vadd.s32 %v447, %v449
        %v451 = vld [vmem:[#allocation4] sm:$0xff]
        %v452 = vld [vmem:[#allocation4 + $0x8] sm:$0x3f]
        %v453 = vld [vmem:[%s3] sm:$0xff]
        %v454 = vld [vmem:[%s3 + $0x8] sm:$0x3f]
        %455 = vset.pattern.permute.xlu0 0
        %456 = vperm.xlu0 %455, %v453
        %v457 = vpop.permute.xlu0 %456
        %458 = vset.pattern.permute.xlu0 0
        %459 = vperm.xlu0 %458, %v454
        %v460 = vpop.permute.xlu0 %459
        %vm461 = vcmp.eq.s32.totalorder %v450, %v457
        %vm462 = vcmp.eq.s32.totalorder %v450, %v460
        %v463 = vsel %vm461, %v393, 0.0
        %v464 = vsel %vm462, %v395, 0.0
        %465 = vadd.xlane.f32.xlu0 %v463
        %v466 = vpop.xlane.xlu0 %465
        %v467 = vsel %vm401, %v464, 0.0
        %468 = vadd.xlane.f32.xlu0 %v467
        %v469 = vpop.xlane.xlu0 %468
        %v470 = vadd.f32 %v451, %v466
        %v471 = vadd.f32 %v452, %v469
        %472 = vst.msk [vmem:[#allocation4] sm:$0xff] %vm440, %v470
        %473 = vst.msk [vmem:[#allocation4 + $0x8] sm:$0x3f] %vm442, %v471
        %p474 = scmp.eq.s32.totalorder %s15, 1
        // Predicated region
        $region82: #{_lambda_.7} parent=72 // pred_check
          %p475 = pneg %p474
        $region83: #{_lambda_.7} parent=72 // pred_check_branch
          %477 = sbr.rel (%p475) target = $region85
        $region84: #{_lambda_.7} parent=72 // pred_region
          %v478 = vld [vmem:[#allocation2] sm:$0xff]
          %v479 = vld [vmem:[#allocation2 + $0x8] sm:$0x3f]
          %v480 = vld [vmem:[#allocation3] sm:$0xff]
          %v481 = vld [vmem:[#allocation3 + $0x8] sm:$0x3f]
          %v482 = vlog2.pop %v480
          %v483 = vmul.f32 %v482, 0.6931472
          %v484 = vlog2.pop %v481
          %v485 = vmul.f32 %v484, 0.6931472
          %v486 = vadd.f32 %v478, %v483
          %v487 = vadd.f32 %v479, %v485
          %v488 = vld [vmem:[#allocation4] sm:$0xff]
          %v489 = vld [vmem:[#allocation4 + $0x8] sm:$0x3f]
          %v490 = vsub.f32 %v486, %v488
          %v491 = vsub.f32 %v487, %v489
          %492 = vst.msk [vmem:[%s4] sm:$0xff] %vm440, %v490
          %493 = vst.msk [vmem:[%s4 + $0x8] sm:$0x3f] %vm442, %v491
        $region85: #{_lambda_.7} parent=72 // pred_fallthru
          _
        // Predicated region
        $region86: #{_lambda_.7} parent=72 // pred_check
          %p494 = pneg %p122
        $region87: #{_lambda_.7} parent=72 // pred_check_branch
          %496 = sbr.rel (%p494) target = $region89
        $region88: #{_lambda_.7} parent=72 // pred_region
          _
        $region89: #{_lambda_.7} parent=72 // pred_fallthru
          _
        // Predicated region
        $region90: #{_lambda_.7} parent=72 // pred_check
          %p497 = pneg %p122
        $region91: #{_lambda_.7} parent=72 // pred_check_branch
          %499 = sbr.rel (%p497) target = $region93
        $region92: #{_lambda_.7} parent=72 // pred_region
          _
        $region93: #{_lambda_.7} parent=72 // pred_fallthru
          _
      $region73: #{_lambda_.7} parent=5 // pred_fallthru
        _
      %p500 = scmp.le.s32.totalorder 2, %s10
      // Predicated region
      $region94: #{_lambda_.7} parent=5 // pred_check
        %p501 = pneg %p500
      $region95: #{_lambda_.7} parent=5 // pred_check_branch
        %503 = sbr.rel (%p501) target = $region97
      $region96: #{_lambda_.7} parent=5 // pred_region
        %s504 = ssub.s32 %s10, 2
      $region97: #{_lambda_.7} parent=5 // pred_fallthru
        _
    $region6: #{_lambda_.7} parent=1 // loop_footer
      %s14 = sadd.s32 1, %s10
    $region7: #{_lambda_.7} parent=1 // loop_footer_branch
      %9 = sbr.rel target = $region3
    $region8: #{_lambda_.7} parent=1 // loop_exit
      _

// kernel: _lambda_.5
$region0: #{_lambda_.5}
  #allocation0 [shape = 'u32[]', space=smem, size = 0x4, offset = 0x4, fixed_abs, tag = 'smem constant byte address 0x4 - core index']
  #allocation1 [shape = 'u32[72,128]{1,0:T(1,128)}', space=vmem, size = 0x9000, scoped, tag = 'internal scratch']
  %s0 = inlined_call_operand.vmem [shape: f32[2,5,128], index: 0, kind: input, shape index: {}]
  %s1 = inlined_call_operand.vmem [shape: f32[1,128], index: 1, kind: input, shape index: {}]
  %s2 = inlined_call_operand.vmem [shape: f32[1,128], index: 2, kind: input, shape index: {}]
  %s3 = inlined_call_operand.vmem [shape: bf16[128,384], index: 3, kind: input, shape index: {}]
  %s4 = inlined_call_operand.vmem [shape: f32[1,384], index: 4, kind: input, shape index: {}]
  %s5 = inlined_call_operand.vmem [shape: bf16[128,128], index: 5, kind: input, shape index: {}]
  %s6 = inlined_call_operand.vmem [shape: f32[1,128], index: 6, kind: input, shape index: {}]
  %s7 = inlined_call_operand.vmem [shape: f32[1,128], index: 7, kind: input, shape index: {}]
  %s8 = inlined_call_operand.vmem [shape: f32[1,128], index: 8, kind: input, shape index: {}]
  %s9 = inlined_call_operand.vmem [shape: bf16[128,256], index: 9, kind: input, shape index: {}]
  %s10 = inlined_call_operand.vmem [shape: f32[1,256], index: 10, kind: input, shape index: {}]
  %s11 = inlined_call_operand.vmem [shape: bf16[256,128], index: 11, kind: input, shape index: {}]
  %s12 = inlined_call_operand.vmem [shape: f32[1,128], index: 12, kind: input, shape index: {}]
  %s13 = inlined_call_operand.vmem [shape: f32[1,128], index: 13, kind: input, shape index: {}]
  %s14 = inlined_call_operand.vmem [shape: f32[1,128], index: 14, kind: input, shape index: {}]
  %s15 = inlined_call_operand.vmem [shape: bf16[128,128], index: 15, kind: input, shape index: {}]
  %s16 = inlined_call_operand.vmem [shape: f32[1,128], index: 16, kind: input, shape index: {}]
  %s17 = inlined_call_operand.vmem [shape: bf16[128,128], index: 17, kind: input, shape index: {}]
  %s18 = inlined_call_operand.vmem [shape: f32[1,128], index: 18, kind: input, shape index: {}]
  %s19 = inlined_call_operand.vmem [shape: f32[2,1,128], index: 19, kind: output, shape index: {}]
  %s20 = sld [smem:[#allocation0]]
  $region109: #{_lambda_.5} parent=0
    _
  %s22 = ssub.s32 1, %s20
  %s23 = scalar_select 0, %s22, %s20
  loop: start=0, step=1, limit=4
  $region2: #{_lambda_.5} parent=0 // loop_pre_header
    _
  $region3: #{_lambda_.5} parent=0 // loop_header
    %s25 = sphi 0, %s29
    %p26 = scmp.ge.s32.totalorder %s25, 4
    %s35 = sphi 0, %s37
    %s38 = sphi 0, %s35
    %s39 = sphi 0, %s38
    %s55 = sphi 0, %s39
    %s59 = sphi 0, %s59
    %s61 = sphi 0, %s59
    %s62 = sphi 0, %s61
    %s76 = sphi 0, %s62
    %s80 = sphi 0, %s80
    %s82 = sphi 0, %s80
    %s83 = sphi 0, %s82
    %s97 = sphi 0, %s83
    %s101 = sphi 0, %s101
    %s103 = sphi 0, %s101
    %s104 = sphi 0, %s103
    %s118 = sphi 0, %s104
    %s122 = sphi 0, %s122
    %s124 = sphi 0, %s122
    %s125 = sphi 0, %s124
    %s139 = sphi 0, %s125
    %s143 = sphi 0, %s143
    %s145 = sphi 0, %s143
    %s146 = sphi 0, %s145
    %s160 = sphi 0, %s146
    %s164 = sphi 0, %s164
    %s166 = sphi 0, %s164
    %s167 = sphi 0, %s166
    %s181 = sphi 0, %s167
    %s185 = sphi 0, %s185
    %s187 = sphi 0, %s185
    %s188 = sphi 0, %s187
    %s202 = sphi 0, %s188
    %s206 = sphi 0, %s206
    %s208 = sphi 0, %s206
    %s209 = sphi 0, %s208
    %s223 = sphi 0, %s209
    %s227 = sphi 0, %s227
    %s229 = sphi 0, %s227
    %s230 = sphi 0, %s229
    %s244 = sphi 0, %s230
    %s248 = sphi 0, %s248
    %s250 = sphi 0, %s248
    %s251 = sphi 0, %s250
    %s265 = sphi 0, %s251
    %s269 = sphi 0, %s269
    %s271 = sphi 0, %s269
    %s272 = sphi 0, %s271
    %s286 = sphi 0, %s272
    %s290 = sphi 0, %s290
    %s292 = sphi 0, %s290
    %s293 = sphi 0, %s292
    %s307 = sphi 0, %s293
    %s311 = sphi 0, %s311
    %s313 = sphi 0, %s311
    %s314 = sphi 0, %s313
    %s328 = sphi 0, %s314
    %s332 = sphi 0, %s332
    %s334 = sphi 0, %s332
    %s335 = sphi 0, %s334
    %s349 = sphi 0, %s335
    %s353 = sphi 0, %s353
    %s355 = sphi 0, %s353
    %s356 = sphi 0, %s355
    %s370 = sphi 0, %s356
    %s374 = sphi 0, %s374
    %s376 = sphi 0, %s374
    %s377 = sphi 0, %s376
    %s391 = sphi 0, %s377
    %s395 = sphi 0, %s395
    %s397 = sphi 0, %s395
    %s398 = sphi 0, %s397
    %s412 = sphi 0, %s398
    %s416 = sphi 0, %s416
    %s418 = sphi 0, %s416
    %s419 = sphi 0, %s418
    %s433 = sphi 0, %s419
    %s439 = sphi 0, %s441
    %s442 = sphi 0, %s439
    %s443 = sphi 0, %s442
    %s459 = sphi 0, %s443
  $region4: #{_lambda_.5} parent=0 // loop_header_branch
    %28 = sbr.rel (%p26) target = $region8
  $region5: #{_lambda_.5} parent=0 // loop_body
    %s30 = ssub.s32 %s25, 1
    %s31 = ssub.s32 %s25, 2
    %s32 = sadd.s32 %s25, 1
    %s33 = ssub.s32 %s25, %s32
    %p34 = scmp.eq.s32.totalorder %s33, 0
    %s36 = sadd.s32 %s35, 1
    %s37 = scalar_select %p34, %s35, %s36
    %p40 = pneg %p34
    %p41 = scmp.eq.s32.totalorder %s25, 1
    %p42 = por %p40, %p41
    %p43 = scmp.ne.s32.totalorder %s35, %s38
    %p44 = scmp.eq.s32.totalorder %s25, 0
    %p45 = por %p43, %p44
    %p46 = scmp.ne.s32.totalorder %s35, %s38
    %p47 = scmp.eq.s32.totalorder %s30, 1
    %p48 = por %p46, %p47
    %p49 = scmp.ne.s32.totalorder %s38, %s39
    %p50 = scmp.eq.s32.totalorder %s30, 0
    %p51 = por %p49, %p50
    %p52 = scmp.ne.s32.totalorder %s38, %s39
    %p53 = scmp.eq.s32.totalorder %s31, 1
    %p54 = por %p52, %p53
    %p56 = scmp.ne.s32.totalorder %s39, %s55
    %p57 = scmp.eq.s32.totalorder %s31, 0
    %p58 = por %p56, %p57
    %s60 = sadd.s32 %s59, 1
    %p63 = scmp.eq.s32.totalorder %s25, 1
    %p64 = scmp.ne.s32.totalorder %s59, %s61
    %p65 = scmp.eq.s32.totalorder %s25, 0
    %p66 = por %p64, %p65
    %p67 = scmp.ne.s32.totalorder %s59, %s61
    %p68 = scmp.eq.s32.totalorder %s30, 1
    %p69 = por %p67, %p68
    %p70 = scmp.ne.s32.totalorder %s61, %s62
    %p71 = scmp.eq.s32.totalorder %s30, 0
    %p72 = por %p70, %p71
    %p73 = scmp.ne.s32.totalorder %s61, %s62
    %p74 = scmp.eq.s32.totalorder %s31, 1
    %p75 = por %p73, %p74
    %p77 = scmp.ne.s32.totalorder %s62, %s76
    %p78 = scmp.eq.s32.totalorder %s31, 0
    %p79 = por %p77, %p78
    %s81 = sadd.s32 %s80, 1
    %p84 = scmp.eq.s32.totalorder %s25, 1
    %p85 = scmp.ne.s32.totalorder %s80, %s82
    %p86 = scmp.eq.s32.totalorder %s25, 0
    %p87 = por %p85, %p86
    %p88 = scmp.ne.s32.totalorder %s80, %s82
    %p89 = scmp.eq.s32.totalorder %s30, 1
    %p90 = por %p88, %p89
    %p91 = scmp.ne.s32.totalorder %s82, %s83
    %p92 = scmp.eq.s32.totalorder %s30, 0
    %p93 = por %p91, %p92
    %p94 = scmp.ne.s32.totalorder %s82, %s83
    %p95 = scmp.eq.s32.totalorder %s31, 1
    %p96 = por %p94, %p95
    %p98 = scmp.ne.s32.totalorder %s83, %s97
    %p99 = scmp.eq.s32.totalorder %s31, 0
    %p100 = por %p98, %p99
    %s102 = sadd.s32 %s101, 1
    %p105 = scmp.eq.s32.totalorder %s25, 1
    %p106 = scmp.ne.s32.totalorder %s101, %s103
    %p107 = scmp.eq.s32.totalorder %s25, 0
    %p108 = por %p106, %p107
    %p109 = scmp.ne.s32.totalorder %s101, %s103
    %p110 = scmp.eq.s32.totalorder %s30, 1
    %p111 = por %p109, %p110
    %p112 = scmp.ne.s32.totalorder %s103, %s104
    %p113 = scmp.eq.s32.totalorder %s30, 0
    %p114 = por %p112, %p113
    %p115 = scmp.ne.s32.totalorder %s103, %s104
    %p116 = scmp.eq.s32.totalorder %s31, 1
    %p117 = por %p115, %p116
    %p119 = scmp.ne.s32.totalorder %s104, %s118
    %p120 = scmp.eq.s32.totalorder %s31, 0
    %p121 = por %p119, %p120
    %s123 = sadd.s32 %s122, 1
    %p126 = scmp.eq.s32.totalorder %s25, 1
    %p127 = scmp.ne.s32.totalorder %s122, %s124
    %p128 = scmp.eq.s32.totalorder %s25, 0
    %p129 = por %p127, %p128
    %p130 = scmp.ne.s32.totalorder %s122, %s124
    %p131 = scmp.eq.s32.totalorder %s30, 1
    %p132 = por %p130, %p131
    %p133 = scmp.ne.s32.totalorder %s124, %s125
    %p134 = scmp.eq.s32.totalorder %s30, 0
    %p135 = por %p133, %p134
    %p136 = scmp.ne.s32.totalorder %s124, %s125
    %p137 = scmp.eq.s32.totalorder %s31, 1
    %p138 = por %p136, %p137
    %p140 = scmp.ne.s32.totalorder %s125, %s139
    %p141 = scmp.eq.s32.totalorder %s31, 0
    %p142 = por %p140, %p141
    %s144 = sadd.s32 %s143, 1
    %p147 = scmp.eq.s32.totalorder %s25, 1
    %p148 = scmp.ne.s32.totalorder %s143, %s145
    %p149 = scmp.eq.s32.totalorder %s25, 0
    %p150 = por %p148, %p149
    %p151 = scmp.ne.s32.totalorder %s143, %s145
    %p152 = scmp.eq.s32.totalorder %s30, 1
    %p153 = por %p151, %p152
    %p154 = scmp.ne.s32.totalorder %s145, %s146
    %p155 = scmp.eq.s32.totalorder %s30, 0
    %p156 = por %p154, %p155
    %p157 = scmp.ne.s32.totalorder %s145, %s146
    %p158 = scmp.eq.s32.totalorder %s31, 1
    %p159 = por %p157, %p158
    %p161 = scmp.ne.s32.totalorder %s146, %s160
    %p162 = scmp.eq.s32.totalorder %s31, 0
    %p163 = por %p161, %p162
    %s165 = sadd.s32 %s164, 1
    %p168 = scmp.eq.s32.totalorder %s25, 1
    %p169 = scmp.ne.s32.totalorder %s164, %s166
    %p170 = scmp.eq.s32.totalorder %s25, 0
    %p171 = por %p169, %p170
    %p172 = scmp.ne.s32.totalorder %s164, %s166
    %p173 = scmp.eq.s32.totalorder %s30, 1
    %p174 = por %p172, %p173
    %p175 = scmp.ne.s32.totalorder %s166, %s167
    %p176 = scmp.eq.s32.totalorder %s30, 0
    %p177 = por %p175, %p176
    %p178 = scmp.ne.s32.totalorder %s166, %s167
    %p179 = scmp.eq.s32.totalorder %s31, 1
    %p180 = por %p178, %p179
    %p182 = scmp.ne.s32.totalorder %s167, %s181
    %p183 = scmp.eq.s32.totalorder %s31, 0
    %p184 = por %p182, %p183
    %s186 = sadd.s32 %s185, 1
    %p189 = scmp.eq.s32.totalorder %s25, 1
    %p190 = scmp.ne.s32.totalorder %s185, %s187
    %p191 = scmp.eq.s32.totalorder %s25, 0
    %p192 = por %p190, %p191
    %p193 = scmp.ne.s32.totalorder %s185, %s187
    %p194 = scmp.eq.s32.totalorder %s30, 1
    %p195 = por %p193, %p194
    %p196 = scmp.ne.s32.totalorder %s187, %s188
    %p197 = scmp.eq.s32.totalorder %s30, 0
    %p198 = por %p196, %p197
    %p199 = scmp.ne.s32.totalorder %s187, %s188
    %p200 = scmp.eq.s32.totalorder %s31, 1
    %p201 = por %p199, %p200
    %p203 = scmp.ne.s32.totalorder %s188, %s202
    %p204 = scmp.eq.s32.totalorder %s31, 0
    %p205 = por %p203, %p204
    %s207 = sadd.s32 %s206, 1
    %p210 = scmp.eq.s32.totalorder %s25, 1
    %p211 = scmp.ne.s32.totalorder %s206, %s208
    %p212 = scmp.eq.s32.totalorder %s25, 0
    %p213 = por %p211, %p212
    %p214 = scmp.ne.s32.totalorder %s206, %s208
    %p215 = scmp.eq.s32.totalorder %s30, 1
    %p216 = por %p214, %p215
    %p217 = scmp.ne.s32.totalorder %s208, %s209
    %p218 = scmp.eq.s32.totalorder %s30, 0
    %p219 = por %p217, %p218
    %p220 = scmp.ne.s32.totalorder %s208, %s209
    %p221 = scmp.eq.s32.totalorder %s31, 1
    %p222 = por %p220, %p221
    %p224 = scmp.ne.s32.totalorder %s209, %s223
    %p225 = scmp.eq.s32.totalorder %s31, 0
    %p226 = por %p224, %p225
    %s228 = sadd.s32 %s227, 1
    %p231 = scmp.eq.s32.totalorder %s25, 1
    %p232 = scmp.ne.s32.totalorder %s227, %s229
    %p233 = scmp.eq.s32.totalorder %s25, 0
    %p234 = por %p232, %p233
    %p235 = scmp.ne.s32.totalorder %s227, %s229
    %p236 = scmp.eq.s32.totalorder %s30, 1
    %p237 = por %p235, %p236
    %p238 = scmp.ne.s32.totalorder %s229, %s230
    %p239 = scmp.eq.s32.totalorder %s30, 0
    %p240 = por %p238, %p239
    %p241 = scmp.ne.s32.totalorder %s229, %s230
    %p242 = scmp.eq.s32.totalorder %s31, 1
    %p243 = por %p241, %p242
    %p245 = scmp.ne.s32.totalorder %s230, %s244
    %p246 = scmp.eq.s32.totalorder %s31, 0
    %p247 = por %p245, %p246
    %s249 = sadd.s32 %s248, 1
    %p252 = scmp.eq.s32.totalorder %s25, 1
    %p253 = scmp.ne.s32.totalorder %s248, %s250
    %p254 = scmp.eq.s32.totalorder %s25, 0
    %p255 = por %p253, %p254
    %p256 = scmp.ne.s32.totalorder %s248, %s250
    %p257 = scmp.eq.s32.totalorder %s30, 1
    %p258 = por %p256, %p257
    %p259 = scmp.ne.s32.totalorder %s250, %s251
    %p260 = scmp.eq.s32.totalorder %s30, 0
    %p261 = por %p259, %p260
    %p262 = scmp.ne.s32.totalorder %s250, %s251
    %p263 = scmp.eq.s32.totalorder %s31, 1
    %p264 = por %p262, %p263
    %p266 = scmp.ne.s32.totalorder %s251, %s265
    %p267 = scmp.eq.s32.totalorder %s31, 0
    %p268 = por %p266, %p267
    %s270 = sadd.s32 %s269, 1
    %p273 = scmp.eq.s32.totalorder %s25, 1
    %p274 = scmp.ne.s32.totalorder %s269, %s271
    %p275 = scmp.eq.s32.totalorder %s25, 0
    %p276 = por %p274, %p275
    %p277 = scmp.ne.s32.totalorder %s269, %s271
    %p278 = scmp.eq.s32.totalorder %s30, 1
    %p279 = por %p277, %p278
    %p280 = scmp.ne.s32.totalorder %s271, %s272
    %p281 = scmp.eq.s32.totalorder %s30, 0
    %p282 = por %p280, %p281
    %p283 = scmp.ne.s32.totalorder %s271, %s272
    %p284 = scmp.eq.s32.totalorder %s31, 1
    %p285 = por %p283, %p284
    %p287 = scmp.ne.s32.totalorder %s272, %s286
    %p288 = scmp.eq.s32.totalorder %s31, 0
    %p289 = por %p287, %p288
    %s291 = sadd.s32 %s290, 1
    %p294 = scmp.eq.s32.totalorder %s25, 1
    %p295 = scmp.ne.s32.totalorder %s290, %s292
    %p296 = scmp.eq.s32.totalorder %s25, 0
    %p297 = por %p295, %p296
    %p298 = scmp.ne.s32.totalorder %s290, %s292
    %p299 = scmp.eq.s32.totalorder %s30, 1
    %p300 = por %p298, %p299
    %p301 = scmp.ne.s32.totalorder %s292, %s293
    %p302 = scmp.eq.s32.totalorder %s30, 0
    %p303 = por %p301, %p302
    %p304 = scmp.ne.s32.totalorder %s292, %s293
    %p305 = scmp.eq.s32.totalorder %s31, 1
    %p306 = por %p304, %p305
    %p308 = scmp.ne.s32.totalorder %s293, %s307
    %p309 = scmp.eq.s32.totalorder %s31, 0
    %p310 = por %p308, %p309
    %s312 = sadd.s32 %s311, 1
    %p315 = scmp.eq.s32.totalorder %s25, 1
    %p316 = scmp.ne.s32.totalorder %s311, %s313
    %p317 = scmp.eq.s32.totalorder %s25, 0
    %p318 = por %p316, %p317
    %p319 = scmp.ne.s32.totalorder %s311, %s313
    %p320 = scmp.eq.s32.totalorder %s30, 1
    %p321 = por %p319, %p320
    %p322 = scmp.ne.s32.totalorder %s313, %s314
    %p323 = scmp.eq.s32.totalorder %s30, 0
    %p324 = por %p322, %p323
    %p325 = scmp.ne.s32.totalorder %s313, %s314
    %p326 = scmp.eq.s32.totalorder %s31, 1
    %p327 = por %p325, %p326
    %p329 = scmp.ne.s32.totalorder %s314, %s328
    %p330 = scmp.eq.s32.totalorder %s31, 0
    %p331 = por %p329, %p330
    %s333 = sadd.s32 %s332, 1
    %p336 = scmp.eq.s32.totalorder %s25, 1
    %p337 = scmp.ne.s32.totalorder %s332, %s334
    %p338 = scmp.eq.s32.totalorder %s25, 0
    %p339 = por %p337, %p338
    %p340 = scmp.ne.s32.totalorder %s332, %s334
    %p341 = scmp.eq.s32.totalorder %s30, 1
    %p342 = por %p340, %p341
    %p343 = scmp.ne.s32.totalorder %s334, %s335
    %p344 = scmp.eq.s32.totalorder %s30, 0
    %p345 = por %p343, %p344
    %p346 = scmp.ne.s32.totalorder %s334, %s335
    %p347 = scmp.eq.s32.totalorder %s31, 1
    %p348 = por %p346, %p347
    %p350 = scmp.ne.s32.totalorder %s335, %s349
    %p351 = scmp.eq.s32.totalorder %s31, 0
    %p352 = por %p350, %p351
    %s354 = sadd.s32 %s353, 1
    %p357 = scmp.eq.s32.totalorder %s25, 1
    %p358 = scmp.ne.s32.totalorder %s353, %s355
    %p359 = scmp.eq.s32.totalorder %s25, 0
    %p360 = por %p358, %p359
    %p361 = scmp.ne.s32.totalorder %s353, %s355
    %p362 = scmp.eq.s32.totalorder %s30, 1
    %p363 = por %p361, %p362
    %p364 = scmp.ne.s32.totalorder %s355, %s356
    %p365 = scmp.eq.s32.totalorder %s30, 0
    %p366 = por %p364, %p365
    %p367 = scmp.ne.s32.totalorder %s355, %s356
    %p368 = scmp.eq.s32.totalorder %s31, 1
    %p369 = por %p367, %p368
    %p371 = scmp.ne.s32.totalorder %s356, %s370
    %p372 = scmp.eq.s32.totalorder %s31, 0
    %p373 = por %p371, %p372
    %s375 = sadd.s32 %s374, 1
    %p378 = scmp.eq.s32.totalorder %s25, 1
    %p379 = scmp.ne.s32.totalorder %s374, %s376
    %p380 = scmp.eq.s32.totalorder %s25, 0
    %p381 = por %p379, %p380
    %p382 = scmp.ne.s32.totalorder %s374, %s376
    %p383 = scmp.eq.s32.totalorder %s30, 1
    %p384 = por %p382, %p383
    %p385 = scmp.ne.s32.totalorder %s376, %s377
    %p386 = scmp.eq.s32.totalorder %s30, 0
    %p387 = por %p385, %p386
    %p388 = scmp.ne.s32.totalorder %s376, %s377
    %p389 = scmp.eq.s32.totalorder %s31, 1
    %p390 = por %p388, %p389
    %p392 = scmp.ne.s32.totalorder %s377, %s391
    %p393 = scmp.eq.s32.totalorder %s31, 0
    %p394 = por %p392, %p393
    %s396 = sadd.s32 %s395, 1
    %p399 = scmp.eq.s32.totalorder %s25, 1
    %p400 = scmp.ne.s32.totalorder %s395, %s397
    %p401 = scmp.eq.s32.totalorder %s25, 0
    %p402 = por %p400, %p401
    %p403 = scmp.ne.s32.totalorder %s395, %s397
    %p404 = scmp.eq.s32.totalorder %s30, 1
    %p405 = por %p403, %p404
    %p406 = scmp.ne.s32.totalorder %s397, %s398
    %p407 = scmp.eq.s32.totalorder %s30, 0
    %p408 = por %p406, %p407
    %p409 = scmp.ne.s32.totalorder %s397, %s398
    %p410 = scmp.eq.s32.totalorder %s31, 1
    %p411 = por %p409, %p410
    %p413 = scmp.ne.s32.totalorder %s398, %s412
    %p414 = scmp.eq.s32.totalorder %s31, 0
    %p415 = por %p413, %p414
    %s417 = sadd.s32 %s416, 1
    %p420 = scmp.eq.s32.totalorder %s25, 1
    %p421 = scmp.ne.s32.totalorder %s416, %s418
    %p422 = scmp.eq.s32.totalorder %s25, 0
    %p423 = por %p421, %p422
    %p424 = scmp.ne.s32.totalorder %s416, %s418
    %p425 = scmp.eq.s32.totalorder %s30, 1
    %p426 = por %p424, %p425
    %p427 = scmp.ne.s32.totalorder %s418, %s419
    %p428 = scmp.eq.s32.totalorder %s30, 0
    %p429 = por %p427, %p428
    %p430 = scmp.ne.s32.totalorder %s418, %s419
    %p431 = scmp.eq.s32.totalorder %s31, 1
    %p432 = por %p430, %p431
    %p434 = scmp.ne.s32.totalorder %s419, %s433
    %p435 = scmp.eq.s32.totalorder %s31, 0
    %p436 = por %p434, %p435
    %s437 = ssub.s32 %s25, %s32
    %p438 = scmp.eq.s32.totalorder %s437, 0
    %s440 = sadd.s32 %s439, 1
    %s441 = scalar_select %p438, %s439, %s440
    %p444 = pneg %p438
    %p445 = scmp.eq.s32.totalorder %s25, 1
    %p446 = por %p444, %p445
    %p447 = scmp.ne.s32.totalorder %s439, %s442
    %p448 = scmp.eq.s32.totalorder %s25, 0
    %p449 = por %p447, %p448
    %p450 = scmp.ne.s32.totalorder %s439, %s442
    %p451 = scmp.eq.s32.totalorder %s30, 1
    %p452 = por %p450, %p451
    %p453 = scmp.ne.s32.totalorder %s442, %s443
    %p454 = scmp.eq.s32.totalorder %s30, 0
    %p455 = por %p453, %p454
    %p456 = scmp.ne.s32.totalorder %s442, %s443
    %p457 = scmp.eq.s32.totalorder %s31, 1
    %p458 = por %p456, %p457
    %p460 = scmp.ne.s32.totalorder %s443, %s459
    %p461 = scmp.eq.s32.totalorder %s31, 0
    %p462 = por %p460, %p461
    %p463 = scmp.le.s32.totalorder 1, %s25
    %p464 = scmp.lt.s32.totalorder %s25, 3
    %p465 = pnand %p463, %p464
    %p466 = pneg %p465
    // Predicated region
    $region9: #{_lambda_.5} parent=5 // pred_check
      _
    $region10: #{_lambda_.5} parent=5 // pred_check_branch
      %468 = sbr.rel (%p465) target = $region12
    $region11: #{_lambda_.5} parent=5 // pred_region
      %s469 = ssub.s32 %s25, 1
      // Predicated region
      $region13: #{_lambda_.5} parent=11 // pred_check
        %p470 = pneg %p72
      $region14: #{_lambda_.5} parent=11 // pred_check_branch
        %472 = sbr.rel (%p470) target = $region16
      $region15: #{_lambda_.5} parent=11 // pred_region
        _
      $region16: #{_lambda_.5} parent=11 // pred_fallthru
        _
      // Predicated region
      $region17: #{_lambda_.5} parent=11 // pred_check
        %p473 = pneg %p93
      $region18: #{_lambda_.5} parent=11 // pred_check_branch
        %475 = sbr.rel (%p473) target = $region20
      $region19: #{_lambda_.5} parent=11 // pred_region
        _
      $region20: #{_lambda_.5} parent=11 // pred_fallthru
        _
      // Predicated region
      $region21: #{_lambda_.5} parent=11 // pred_check
        %p476 = pneg %p114
      $region22: #{_lambda_.5} parent=11 // pred_check_branch
        %478 = sbr.rel (%p476) target = $region24
      $region23: #{_lambda_.5} parent=11 // pred_region
        _
      $region24: #{_lambda_.5} parent=11 // pred_fallthru
        _
      // Predicated region
      $region25: #{_lambda_.5} parent=11 // pred_check
        %p479 = pneg %p135
      $region26: #{_lambda_.5} parent=11 // pred_check_branch
        %481 = sbr.rel (%p479) target = $region28
      $region27: #{_lambda_.5} parent=11 // pred_region
        _
      $region28: #{_lambda_.5} parent=11 // pred_fallthru
        _
      // Predicated region
      $region29: #{_lambda_.5} parent=11 // pred_check
        %p482 = pneg %p156
      $region30: #{_lambda_.5} parent=11 // pred_check_branch
        %484 = sbr.rel (%p482) target = $region32
      $region31: #{_lambda_.5} parent=11 // pred_region
        _
      $region32: #{_lambda_.5} parent=11 // pred_fallthru
        _
      // Predicated region
      $region33: #{_lambda_.5} parent=11 // pred_check
        %p485 = pneg %p177
      $region34: #{_lambda_.5} parent=11 // pred_check_branch
        %487 = sbr.rel (%p485) target = $region36
      $region35: #{_lambda_.5} parent=11 // pred_region
        _
      $region36: #{_lambda_.5} parent=11 // pred_fallthru
        _
      // Predicated region
      $region37: #{_lambda_.5} parent=11 // pred_check
        %p488 = pneg %p198
      $region38: #{_lambda_.5} parent=11 // pred_check_branch
        %490 = sbr.rel (%p488) target = $region40
      $region39: #{_lambda_.5} parent=11 // pred_region
        _
      $region40: #{_lambda_.5} parent=11 // pred_fallthru
        _
      // Predicated region
      $region41: #{_lambda_.5} parent=11 // pred_check
        %p491 = pneg %p219
      $region42: #{_lambda_.5} parent=11 // pred_check_branch
        %493 = sbr.rel (%p491) target = $region44
      $region43: #{_lambda_.5} parent=11 // pred_region
        _
      $region44: #{_lambda_.5} parent=11 // pred_fallthru
        _
      // Predicated region
      $region45: #{_lambda_.5} parent=11 // pred_check
        %p494 = pneg %p240
      $region46: #{_lambda_.5} parent=11 // pred_check_branch
        %496 = sbr.rel (%p494) target = $region48
      $region47: #{_lambda_.5} parent=11 // pred_region
        _
      $region48: #{_lambda_.5} parent=11 // pred_fallthru
        _
      // Predicated region
      $region49: #{_lambda_.5} parent=11 // pred_check
        %p497 = pneg %p261
      $region50: #{_lambda_.5} parent=11 // pred_check_branch
        %499 = sbr.rel (%p497) target = $region52
      $region51: #{_lambda_.5} parent=11 // pred_region
        _
      $region52: #{_lambda_.5} parent=11 // pred_fallthru
        _
      // Predicated region
      $region53: #{_lambda_.5} parent=11 // pred_check
        %p500 = pneg %p282
      $region54: #{_lambda_.5} parent=11 // pred_check_branch
        %502 = sbr.rel (%p500) target = $region56
      $region55: #{_lambda_.5} parent=11 // pred_region
        _
      $region56: #{_lambda_.5} parent=11 // pred_fallthru
        _
      // Predicated region
      $region57: #{_lambda_.5} parent=11 // pred_check
        %p503 = pneg %p303
      $region58: #{_lambda_.5} parent=11 // pred_check_branch
        %505 = sbr.rel (%p503) target = $region60
      $region59: #{_lambda_.5} parent=11 // pred_region
        _
      $region60: #{_lambda_.5} parent=11 // pred_fallthru
        _
      // Predicated region
      $region61: #{_lambda_.5} parent=11 // pred_check
        %p506 = pneg %p324
      $region62: #{_lambda_.5} parent=11 // pred_check_branch
        %508 = sbr.rel (%p506) target = $region64
      $region63: #{_lambda_.5} parent=11 // pred_region
        _
      $region64: #{_lambda_.5} parent=11 // pred_fallthru
        _
      // Predicated region
      $region65: #{_lambda_.5} parent=11 // pred_check
        %p509 = pneg %p345
      $region66: #{_lambda_.5} parent=11 // pred_check_branch
        %511 = sbr.rel (%p509) target = $region68
      $region67: #{_lambda_.5} parent=11 // pred_region
        _
      $region68: #{_lambda_.5} parent=11 // pred_fallthru
        _
      // Predicated region
      $region69: #{_lambda_.5} parent=11 // pred_check
        %p512 = pneg %p366
      $region70: #{_lambda_.5} parent=11 // pred_check_branch
        %514 = sbr.rel (%p512) target = $region72
      $region71: #{_lambda_.5} parent=11 // pred_region
        _
      $region72: #{_lambda_.5} parent=11 // pred_fallthru
        _
      // Predicated region
      $region73: #{_lambda_.5} parent=11 // pred_check
        %p515 = pneg %p387
      $region74: #{_lambda_.5} parent=11 // pred_check_branch
        %517 = sbr.rel (%p515) target = $region76
      $region75: #{_lambda_.5} parent=11 // pred_region
        _
      $region76: #{_lambda_.5} parent=11 // pred_fallthru
        _
      // Predicated region
      $region77: #{_lambda_.5} parent=11 // pred_check
        %p518 = pneg %p408
      $region78: #{_lambda_.5} parent=11 // pred_check_branch
        %520 = sbr.rel (%p518) target = $region80
      $region79: #{_lambda_.5} parent=11 // pred_region
        _
      $region80: #{_lambda_.5} parent=11 // pred_fallthru
        _
      // Predicated region
      $region81: #{_lambda_.5} parent=11 // pred_check
        %p521 = pneg %p429
      $region82: #{_lambda_.5} parent=11 // pred_check_branch
        %523 = sbr.rel (%p521) target = $region84
      $region83: #{_lambda_.5} parent=11 // pred_region
        _
      $region84: #{_lambda_.5} parent=11 // pred_fallthru
        _
    $region12: #{_lambda_.5} parent=5 // pred_fallthru
      _
    %p524 = scmp.lt.s32.totalorder %s25, 2
    // Predicated region
    $region85: #{_lambda_.5} parent=5 // pred_check
      %p525 = pneg %p524
    $region86: #{_lambda_.5} parent=5 // pred_check_branch
      %527 = sbr.rel (%p525) target = $region88
    $region87: #{_lambda_.5} parent=5 // pred_region
      // Predicated region
      $region89: #{_lambda_.5} parent=87 // pred_check
        %p528 = pneg %p45
      $region90: #{_lambda_.5} parent=87 // pred_check_branch
        %530 = sbr.rel (%p528) target = $region92
      $region91: #{_lambda_.5} parent=87 // pred_region
        %p531 = scmp.lt.s32.totalorder %s25, 1
        %s532 = scalar_select %p531, %s25, 1
        %s533 = smul.addr %s532, 8
        %s534 = scalar_lea.vmem %s0, %s533
      $region92: #{_lambda_.5} parent=87 // pred_fallthru
        _
    $region88: #{_lambda_.5} parent=5 // pred_fallthru
      _
    %p535 = scmp.le.s32.totalorder 1, %s25
    %p536 = scmp.lt.s32.totalorder %s25, 3
    %p537 = pnand %p535, %p536
    %p538 = pneg %p537
    // Predicated region
    $region93: #{_lambda_.5} parent=5 // pred_check
      _
    $region94: #{_lambda_.5} parent=5 // pred_check_branch
      %540 = sbr.rel (%p537) target = $region96
    $region95: #{_lambda_.5} parent=5 // pred_region
      %s541 = ssub.s32 %s25, 1
      %p542 = scmp.lt.s32.totalorder %s30, 1
      %s543 = scalar_select %p542, %s30, 1
      %s544 = smul.addr %s543, 8
      %s545 = scalar_lea.vmem %s0, %s544
      %p546 = pneg %p51
      %p547 = pneg %p48
      %p548 = pneg %p72
      %p549 = pneg %p69
      %p550 = pneg %p93
      %p551 = pneg %p90
      %p552 = pneg %p114
      %p553 = pneg %p111
      %p554 = pneg %p135
      %p555 = pneg %p132
      %p556 = pneg %p156
      %p557 = pneg %p153
      %p558 = pneg %p177
      %p559 = pneg %p174
      %p560 = pneg %p198
      %p561 = pneg %p195
      %p562 = pneg %p219
      %p563 = pneg %p216
      %p564 = pneg %p240
      %p565 = pneg %p237
      %p566 = pneg %p261
      %p567 = pneg %p258
      %p568 = pneg %p282
      %p569 = pneg %p279
      %p570 = pneg %p303
      %p571 = pneg %p300
      %p572 = pneg %p324
      %p573 = pneg %p321
      %p574 = pneg %p345
      %p575 = pneg %p342
      %p576 = pneg %p366
      %p577 = pneg %p363
      %p578 = pneg %p387
      %p579 = pneg %p384
      %p580 = pneg %p408
      %p581 = pneg %p405
      %p582 = pneg %p429
      %p583 = pneg %p426
      %p584 = pneg %p455
      %p585 = pneg %p452
      %p586 = scmp.lt.s32.totalorder %s30, 1
      %s587 = scalar_select %p586, %s30, 1
      %s588 = scalar_lea.vmem %s19, %s587
      %p589 = scmp.lt.s32.totalorder %s30, 1
      %s590 = scalar_select %p589, %s30, 1
      %s591 = smul.addr %s590, 8
      %s592 = scalar_lea.vmem %s0, %s591
      %p593 = scmp.lt.s32.totalorder %s30, 1
      %s594 = scalar_select %p593, %s30, 1
      %s595 = scalar_lea.vmem %s19, %s594
      %v597 = vld [vmem:[%s592] sm:$0x1f]
      %v598 = vld [vmem:[%s1] sm:$0x1]
      %v599 = vld [vmem:[%s2] sm:$0x1]
      %vm600 = vcmask 1044480
      %v601 = vsel %vm600, %v597, 0.0
      %602 = vadd.xlane.f32.xlu0 %v601
      %v603 = vpop.xlane.xlu0 %602
      %v604 = vrcp.pop 128.0
      %v605 = vmul.f32 128.0, %v604
      %v606 = vsub.f32 1.0, %v605
      %v607 = vmul.f32 %v604, %v606
      %v608 = vadd.f32 %v604, %v607
      %vm609 = vweird.f32 %v604
      %v610 = vsel %vm609, %v604, %v608
      %v611 = vmul.f32 %v603, %v610
      %v612 = vsub.f32 %v597, %v611
      %v613 = vmul.f32 %v612, %v612
      %v614 = vsel %vm600, %v613, 0.0
      %615 = vadd.xlane.f32.xlu0 %v614
      %v616 = vpop.xlane.xlu0 %615
      %v617 = vmul.f32 %v616, %v610
      %v618 = vadd.f32 %v617, 1e-06
      %v619 = vrsqrt.pop %v618
      %v620 = vmul.f32 %v619, %v618
      %v621 = vmul.f32 %v620, %v619
      %v622 = vmul.f32 0.5, %v621
      %v623 = vsub.f32 1.5, %v622
      %v624 = vmul.f32 %v619, %v623
      %vm625 = vweird.f32 %v618
      %vm626 = vweird.f32 %v619
      %vm627 = vmor %vm625, %vm626
      %v628 = vsel %vm627, %v619, %v624
      %v629 = vmul.f32 %v612, %v628
      %v631 = vperm.slane %v598, 0
      %v633 = vmul.f32 %v629, %v631
      %v635 = vperm.slane %v599, 0
      %v637 = vadd.f32 %v633, %v635
      %v638 = vld [vmem:[%s3] sm:$0xff]
      %v639 = vld [vmem:[%s3 + $0x8] sm:$0xf]
      %v640 = vld [vmem:[%s3 + $0xc] sm:$0xff]
      %v641 = vld [vmem:[%s3 + $0x14] sm:$0xf]
      %v642 = vld [vmem:[%s3 + $0x18] sm:$0xff]
      %v643 = vld [vmem:[%s3 + $0x20] sm:$0xf]
      %v644 = vld [vmem:[%s3 + $0x24] sm:$0xff]
      %v645 = vld [vmem:[%s3 + $0x2c] sm:$0xf]
      %v646 = vld [vmem:[%s3 + $0x30] sm:$0xff]
      %v647 = vld [vmem:[%s3 + $0x38] sm:$0xf]
      %v648 = vld [vmem:[%s3 + $0x3c] sm:$0xff]
      %v649 = vld [vmem:[%s3 + $0x44] sm:$0xf]
      %v650 = vld [vmem:[%s3 + $0x48] sm:$0xff]
      %v651 = vld [vmem:[%s3 + $0x50] sm:$0xf]
      %v652 = vld [vmem:[%s3 + $0x54] sm:$0xff]
      %v653 = vld [vmem:[%s3 + $0x5c] sm:$0xf]
      %v654 = vld [vmem:[%s3 + $0x60] sm:$0xff]
      %v655 = vld [vmem:[%s3 + $0x68] sm:$0xf]
      %v656 = vld [vmem:[%s3 + $0x6c] sm:$0xff]
      %v657 = vld [vmem:[%s3 + $0x74] sm:$0xf]
      %v658 = vld [vmem:[%s3 + $0x78] sm:$0xff]
      %v659 = vld [vmem:[%s3 + $0x80] sm:$0xf]
      %v660 = vld [vmem:[%s3 + $0x84] sm:$0xff]
      %v661 = vld [vmem:[%s3 + $0x8c] sm:$0xf]
      %v662 = vld [vmem:[%s3 + $0x90] sm:$0xff]
      %v663 = vld [vmem:[%s3 + $0x98] sm:$0xf]
      %v664 = vld [vmem:[%s3 + $0x9c] sm:$0xff]
      %v665 = vld [vmem:[%s3 + $0xa4] sm:$0xf]
      %v666 = vld [vmem:[%s3 + $0xa8] sm:$0xff]
      %v667 = vld [vmem:[%s3 + $0xb0] sm:$0xf]
      %v668 = vld [vmem:[%s3 + $0xb4] sm:$0xff]
      %v669 = vld [vmem:[%s3 + $0xbc] sm:$0xf]
      %v670 = vld [vmem:[%s4] sm:$0x7]
      %v671 = vld [vmem:[%s5] sm:$0xf]
      %v672 = vld [vmem:[%s5 + $0x4] sm:$0xf]
      %v673 = vld [vmem:[%s5 + $0x8] sm:$0xf]
      %v674 = vld [vmem:[%s5 + $0xc] sm:$0xf]
      %v675 = vld [vmem:[%s5 + $0x10] sm:$0xf]
      %v676 = vld [vmem:[%s5 + $0x14] sm:$0xf]
      %v677 = vld [vmem:[%s5 + $0x18] sm:$0xf]
      %v678 = vld [vmem:[%s5 + $0x1c] sm:$0xf]
      %v679 = vld [vmem:[%s5 + $0x20] sm:$0xf]
      %v680 = vld [vmem:[%s5 + $0x24] sm:$0xf]
      %v681 = vld [vmem:[%s5 + $0x28] sm:$0xf]
      %v682 = vld [vmem:[%s5 + $0x2c] sm:$0xf]
      %v683 = vld [vmem:[%s5 + $0x30] sm:$0xf]
      %v684 = vld [vmem:[%s5 + $0x34] sm:$0xf]
      %v685 = vld [vmem:[%s5 + $0x38] sm:$0xf]
      %v686 = vld [vmem:[%s5 + $0x3c] sm:$0xf]
      %v687 = vld [vmem:[%s6] sm:$0x1]
      %v688 = vpack.c.bf16 %v637, %v637
      %v690 = vperm.slane %v670, 0
      %v691 = vperm.slane %v670, 1
      %v692 = vperm.slane %v670, 2
      %v728 = vunpack.c.l.b16 %v638
      %v729 = vunpack.c.h.b16 %v638
      %v730 = vunpack.c.l.b16 %v639
      %v731 = vunpack.c.l.b16 %v640
      %v732 = vunpack.c.h.b16 %v640
      %v733 = vunpack.c.l.b16 %v641
      %v734 = vunpack.c.l.b16 %v642
      %v735 = vunpack.c.h.b16 %v642
      %v736 = vunpack.c.l.b16 %v643
      %v737 = vunpack.c.l.b16 %v644
      %v738 = vunpack.c.h.b16 %v644
      %v739 = vunpack.c.l.b16 %v645
      %v740 = vunpack.c.l.b16 %v646
      %v741 = vunpack.c.h.b16 %v646
      %v742 = vunpack.c.l.b16 %v647
      %v743 = vunpack.c.l.b16 %v648
      %v744 = vunpack.c.h.b16 %v648
      %v745 = vunpack.c.l.b16 %v649
      %v746 = vunpack.c.l.b16 %v650
      %v747 = vunpack.c.h.b16 %v650
      %v748 = vunpack.c.l.b16 %v651
      %v749 = vunpack.c.l.b16 %v652
      %v750 = vunpack.c.h.b16 %v652
      %v751 = vunpack.c.l.b16 %v653
      %v752 = vunpack.c.l.b16 %v654
      %v753 = vunpack.c.h.b16 %v654
      %v754 = vunpack.c.l.b16 %v655
      %v755 = vunpack.c.l.b16 %v656
      %v756 = vunpack.c.h.b16 %v656
      %v757 = vunpack.c.l.b16 %v657
      %v758 = vunpack.c.l.b16 %v658
      %v759 = vunpack.c.h.b16 %v658
      %v760 = vunpack.c.l.b16 %v659
      %v761 = vunpack.c.l.b16 %v660
      %v762 = vunpack.c.h.b16 %v660
      %v763 = vunpack.c.l.b16 %v661
      %v764 = vunpack.c.l.b16 %v662
      %v765 = vunpack.c.h.b16 %v662
      %v766 = vunpack.c.l.b16 %v663
      %v767 = vunpack.c.l.b16 %v664
      %v768 = vunpack.c.h.b16 %v664
      %v769 = vunpack.c.l.b16 %v665
      %v770 = vunpack.c.l.b16 %v666
      %v771 = vunpack.c.h.b16 %v666
      %v772 = vunpack.c.l.b16 %v667
      %v773 = vunpack.c.l.b16 %v668
      %v774 = vunpack.c.h.b16 %v668
      %v775 = vunpack.c.l.b16 %v669
      %v776 = vpack.c.b16 %v731, %v728
      %v777 = vpack.c.b16 %v732, %v729
      %v778 = vpack.c.b16 %v733, %v730
      %v779 = vpack.c.b16 %v737, %v734
      %v780 = vpack.c.b16 %v738, %v735
      %v781 = vpack.c.b16 %v739, %v736
      %v782 = vpack.c.b16 %v743, %v740
      %v783 = vpack.c.b16 %v744, %v741
      %v784 = vpack.c.b16 %v745, %v742
      %v785 = vpack.c.b16 %v749, %v746
      %v786 = vpack.c.b16 %v750, %v747
      %v787 = vpack.c.b16 %v751, %v748
      %v788 = vpack.c.b16 %v755, %v752
      %v789 = vpack.c.b16 %v756, %v753
      %v790 = vpack.c.b16 %v757, %v754
      %v791 = vpack.c.b16 %v761, %v758
      %v792 = vpack.c.b16 %v762, %v759
      %v793 = vpack.c.b16 %v763, %v760
      %v794 = vpack.c.b16 %v767, %v764
      %v795 = vpack.c.b16 %v768, %v765
      %v796 = vpack.c.b16 %v769, %v766
      %v797 = vpack.c.b16 %v773, %v770
      %v798 = vpack.c.b16 %v774, %v771
      %v799 = vpack.c.b16 %v775, %v772
      %824 = vmatpush.bf16.msra.mxu0 %v797
      %825 = vmatpush.bf16.msra.mxu0 %v794
      %826 = vmatpush.bf16.msra.mxu0 %v791
      %827 = vmatpush.bf16.msra.mxu0 %v788
      %828 = vmatpush.bf16.msra.mxu0 %v785
      %829 = vmatpush.bf16.msra.mxu0 %v782
      %830 = vmatpush.bf16.msra.mxu0 %v779
      %831 = vmatpush.bf16.msra.mxu0 %v776
      %832 = vmatmul.bf16.gmra.mxu0 %v688
      %v833 = vpop.f32.mrf.mxu0
      %v834 = vadd.f32 %v690, %v833
      %v835 = vpop.f32.mrf.mxu0
      %836 = vdwg.mxu0
      %837 = vmatpush.bf16.msra.mxu0 %v798
      %838 = vmatpush.bf16.msra.mxu0 %v795
      %839 = vmatpush.bf16.msra.mxu0 %v792
      %840 = vmatpush.bf16.msra.mxu0 %v789
      %841 = vmatpush.bf16.msra.mxu0 %v786
      %842 = vmatpush.bf16.msra.mxu0 %v783
      %843 = vmatpush.bf16.msra.mxu0 %v780
      %844 = vmatpush.bf16.msra.mxu0 %v777
      %845 = vmatmul.bf16.gmra.mxu0 %v688
      %v846 = vpop.f32.mrf.mxu0
      %v847 = vadd.f32 %v691, %v846
      %v848 = vpop.f32.mrf.mxu0
      %849 = vdwg.mxu0
      %850 = vmatpush.bf16.msra.mxu0 %v799
      %851 = vmatpush.bf16.msra.mxu0 %v796
      %852 = vmatpush.bf16.msra.mxu0 %v793
      %853 = vmatpush.bf16.msra.mxu0 %v790
      %854 = vmatpush.bf16.msra.mxu0 %v787
      %855 = vmatpush.bf16.msra.mxu0 %v784
      %856 = vmatpush.bf16.msra.mxu0 %v781
      %857 = vmatpush.bf16.msra.mxu0 %v778
      %858 = vmatmul.bf16.gmra.mxu0 %v688
      %v859 = vpop.f32.mrf.mxu0
      %v860 = vadd.f32 %v692, %v859
      %v861 = vpop.f32.mrf.mxu0
      %862 = vdwg.mxu0
      %v863 = vpack.c.bf16 %v834, %v834
      %v864 = vpack.c.bf16 %v847, %v847
      %v865 = vpack.c.bf16 %v860, %v860
      %vm866 = vcmask 523264
      %v868 = vsel %vm866, %v863, 0
      %v871 = vsel %vm866, %v864, 0
      %873 = vmatpush.bf16.xpose.msra.mxu0 0
      %874 = vmatpush.bf16.xpose.msra.mxu0 0
      %875 = vmatpush.bf16.xpose.msra.mxu0 0
      %876 = vmatpush.bf16.xpose.msra.mxu0 0
      %877 = vmatpush.bf16.xpose.msra.mxu0 0
      %878 = vmatpush.bf16.xpose.msra.mxu0 0
      %879 = vmatpush.bf16.xpose.msra.mxu0 0
      %880 = vmatpush.bf16.xpose.msra.mxu0 %v871
      %881 = vmatmul.bf16.gmra.mxu0 %v868
      %v882 = vpop.f32.mrf.mxu0
      %v883 = vadd.f32 0.0, %v882
      %v884 = vpop.f32.mrf.mxu0
      %885 = vdwg.mxu0
      %v886 = vmul.f32 %v883, 0.125
      %vm887 = vcmask 36864
      %v888 = vsel %vm887, %v886, -inf
      %889 = vmax.xlane.f32.xlu0 %v888
      %v890 = vpop.xlane.xlu0 %889
      %v891 = vsub.f32 %v886, %v890
      %v892 = vmul.f32 %v891, 1.442695
      %v893 = vpow.pop %v892
      %v894 = vsel %vm887, %v893, 0.0
      %895 = vadd.xlane.f32.xlu0 %v894
      %v896 = vpop.xlane.xlu0 %895
      %v897 = vrcp.pop %v896
      %v898 = vmul.f32 %v893, %v897
      %v899 = vpack.c.bf16 %v898, %v898
      %vm900 = vcmask 39936
      %v902 = vsel %vm900, %v899, 0
      %vm904 = vcmask 1041408
      %vm905 = vcmask 1042432
      %v906 = vsel %vm904, 4294967295, 65535
      %v907 = vsel %vm905, %v906, 0
      %v909 = vand.u32 %v865, %v907
      %911 = vmatpush.bf16.msra.mxu0 0
      %912 = vmatpush.bf16.msra.mxu0 0
      %913 = vmatpush.bf16.msra.mxu0 0
      %914 = vmatpush.bf16.msra.mxu0 0
      %915 = vmatpush.bf16.msra.mxu0 0
      %916 = vmatpush.bf16.msra.mxu0 0
      %917 = vmatpush.bf16.msra.mxu0 0
      %918 = vmatpush.bf16.msra.mxu0 %v909
      %919 = vmatmul.bf16.gmra.mxu0 %v902
      %v920 = vpop.f32.mrf.mxu0
      %v921 = vadd.f32 0.0, %v920
      %v922 = vpop.f32.mrf.mxu0
      %923 = vdwg.mxu0
      %v924 = vpack.c.bf16 %v921, %v921
      %v933 = vunpack.c.l.b16 %v671
      %v934 = vunpack.c.l.b16 %v672
      %v935 = vunpack.c.l.b16 %v673
      %v936 = vunpack.c.l.b16 %v674
      %v937 = vunpack.c.l.b16 %v675
      %v938 = vunpack.c.l.b16 %v676
      %v939 = vunpack.c.l.b16 %v677
      %v940 = vunpack.c.l.b16 %v678
      %v941 = vpack.c.b16 %v934, %v933
      %v942 = vpack.c.b16 %v936, %v935
      %v943 = vpack.c.b16 %v938, %v937
      %v944 = vpack.c.b16 %v940, %v939
      %v950 = vsel %vm866, %v924, 0
      %952 = vmatpush.bf16.msra.mxu0 0
      %953 = vmatpush.bf16.msra.mxu0 0
      %954 = vmatpush.bf16.msra.mxu0 0
      %955 = vmatpush.bf16.msra.mxu0 0
      %956 = vmatpush.bf16.msra.mxu0 %v944
      %957 = vmatpush.bf16.msra.mxu0 %v943
      %958 = vmatpush.bf16.msra.mxu0 %v942
      %959 = vmatpush.bf16.msra.mxu0 %v941
      %960 = vmatmul.bf16.gmra.mxu0 %v950
      %v961 = vpop.f32.mrf.mxu0
      %v962 = vadd.f32 0.0, %v961
      %v963 = vpop.f32.mrf.mxu0
      %964 = vdwg.mxu0
      %v966 = vperm.slane %v687, 0
      %v968 = vadd.f32 %v966, %v962
      %970 = vrot.lane.b32.xlu0 %v863, 64
      %v971 = vpop.permute.xlu0 %970
      %973 = vrot.lane.b32.xlu0 %v864, 64
      %v974 = vpop.permute.xlu0 %973
      %v976 = vsel %vm866, %v971, 0
      %v979 = vsel %vm866, %v974, 0
      %981 = vmatpush.bf16.xpose.msra.mxu0 0
      %982 = vmatpush.bf16.xpose.msra.mxu0 0
      %983 = vmatpush.bf16.xpose.msra.mxu0 0
      %984 = vmatpush.bf16.xpose.msra.mxu0 0
      %985 = vmatpush.bf16.xpose.msra.mxu0 0
      %986 = vmatpush.bf16.xpose.msra.mxu0 0
      %987 = vmatpush.bf16.xpose.msra.mxu0 0
      %988 = vmatpush.bf16.xpose.msra.mxu0 %v979
      %989 = vmatmul.bf16.gmra.mxu0 %v976
      %v990 = vpop.f32.mrf.mxu0
      %v991 = vadd.f32 0.0, %v990
      %v992 = vpop.f32.mrf.mxu0
      %993 = vdwg.mxu0
      %v994 = vmul.f32 %v991, 0.125
      %v995 = vsel %vm887, %v994, -inf
      %996 = vmax.xlane.f32.xlu0 %v995
      %v997 = vpop.xlane.xlu0 %996
      %v998 = vsub.f32 %v994, %v997
      %v999 = vmul.f32 %v998, 1.442695
      %v1000 = vpow.pop %v999
      %v1001 = vsel %vm887, %v1000, 0.0
      %1002 = vadd.xlane.f32.xlu0 %v1001
      %v1003 = vpop.xlane.xlu0 %1002
      %v1004 = vrcp.pop %v1003
      %v1005 = vmul.f32 %v1000, %v1004
      %v1006 = vpack.c.bf16 %v1005, %v1005
      %1008 = vrot.lane.b32.xlu0 %v865, 64
      %v1009 = vpop.permute.xlu0 %1008
      %v1011 = vsel %vm900, %v1006, 0
      %v1014 = vand.u32 %v1009, %v907
      %1016 = vmatpush.bf16.msra.mxu0 0
      %1017 = vmatpush.bf16.msra.mxu0 0
      %1018 = vmatpush.bf16.msra.mxu0 0
      %1019 = vmatpush.bf16.msra.mxu0 0
      %1020 = vmatpush.bf16.msra.mxu0 0
      %1021 = vmatpush.bf16.msra.mxu0 0
      %1022 = vmatpush.bf16.msra.mxu0 0
      %1023 = vmatpush.bf16.msra.mxu0 %v1014
      %1024 = vmatmul.bf16.gmra.mxu0 %v1011
      %v1025 = vpop.f32.mrf.mxu0
      %v1026 = vadd.f32 0.0, %v1025
      %v1027 = vpop.f32.mrf.mxu0
      %1028 = vdwg.mxu0
      %v1029 = vpack.c.bf16 %v1026, %v1026
      %v1038 = vunpack.c.l.b16 %v679
      %v1039 = vunpack.c.l.b16 %v680
      %v1040 = vunpack.c.l.b16 %v681
      %v1041 = vunpack.c.l.b16 %v682
      %v1042 = vunpack.c.l.b16 %v683
      %v1043 = vunpack.c.l.b16 %v684
      %v1044 = vunpack.c.l.b16 %v685
      %v1045 = vunpack.c.l.b16 %v686
      %v1046 = vpack.c.b16 %v1039, %v1038
      %v1047 = vpack.c.b16 %v1041, %v1040
      %v1048 = vpack.c.b16 %v1043, %v1042
      %v1049 = vpack.c.b16 %v1045, %v1044
      %v1055 = vsel %vm866, %v1029, 0
      %1057 = vmatpush.bf16.msra.mxu0 0
      %1058 = vmatpush.bf16.msra.mxu0 0
      %1059 = vmatpush.bf16.msra.mxu0 0
      %1060 = vmatpush.bf16.msra.mxu0 0
      %1061 = vmatpush.bf16.msra.mxu0 %v1049
      %1062 = vmatpush.bf16.msra.mxu0 %v1048
      %1063 = vmatpush.bf16.msra.mxu0 %v1047
      %1064 = vmatpush.bf16.msra.mxu0 %v1046
      %1065 = vmatmul.bf16.gmra.mxu0 %v1055
      %v1066 = vpop.f32.mrf.mxu0
      %v1067 = vadd.f32 0.0, %v1066
      %v1068 = vpop.f32.mrf.mxu0
      %1069 = vdwg.mxu0
      %v1070 = vadd.f32 %v968, %v1067
      %v1071 = vadd.f32 %v597, %v1070
      %v1072 = vld [vmem:[%s7] sm:$0x1]
      %v1073 = vld [vmem:[%s8] sm:$0x1]
      %vm1074 = vcmask 1040384
      %v1075 = vsel %vm1074, %v1071, 0.0
      %1076 = vadd.xlane.f32.xlu0 %v1075
      %v1077 = vpop.xlane.xlu0 %1076
      %v1078 = vmul.f32 %v1077, %v610
      %v1079 = vsub.f32 %v1071, %v1078
      %v1080 = vmul.f32 %v1079, %v1079
      %v1081 = vsel %vm1074, %v1080, 0.0
      %1082 = vadd.xlane.f32.xlu0 %v1081
      %v1083 = vpop.xlane.xlu0 %1082
      %v1084 = vmul.f32 %v1083, %v610
      %v1085 = vadd.f32 %v1084, 1e-06
      %v1086 = vrsqrt.pop %v1085
      %v1087 = vmul.f32 %v1086, %v1085
      %v1088 = vmul.f32 %v1087, %v1086
      %v1089 = vmul.f32 0.5, %v1088
      %v1090 = vsub.f32 1.5, %v1089
      %v1091 = vmul.f32 %v1086, %v1090
      %vm1092 = vweird.f32 %v1085
      %vm1093 = vweird.f32 %v1086
      %vm1094 = vmor %vm1092, %vm1093
      %v1095 = vsel %vm1094, %v1086, %v1091
      %v1096 = vmul.f32 %v1079, %v1095
      %v1097 = vmul.f32 %v1096, %v1072
      %v1098 = vadd.f32 %v1097, %v1073
      %v1099 = vpack.c.bf16 %v1098, %v1098
      %v1100 = vld [vmem:[%s9] sm:$0xff]
      %v1101 = vld [vmem:[%s9 + $0x8] sm:$0xff]
      %v1102 = vld [vmem:[%s9 + $0x10] sm:$0xff]
      %v1103 = vld [vmem:[%s9 + $0x18] sm:$0xff]
      %v1104 = vld [vmem:[%s9 + $0x20] sm:$0xff]
      %v1105 = vld [vmem:[%s9 + $0x28] sm:$0xff]
      %v1106 = vld [vmem:[%s9 + $0x30] sm:$0xff]
      %v1107 = vld [vmem:[%s9 + $0x38] sm:$0xff]
      %v1108 = vld [vmem:[%s9 + $0x40] sm:$0xff]
      %v1109 = vld [vmem:[%s9 + $0x48] sm:$0xff]
      %v1110 = vld [vmem:[%s9 + $0x50] sm:$0xff]
      %v1111 = vld [vmem:[%s9 + $0x58] sm:$0xff]
      %v1112 = vld [vmem:[%s9 + $0x60] sm:$0xff]
      %v1113 = vld [vmem:[%s9 + $0x68] sm:$0xff]
      %v1114 = vld [vmem:[%s9 + $0x70] sm:$0xff]
      %v1115 = vld [vmem:[%s9 + $0x78] sm:$0xff]
      %v1116 = vld [vmem:[%s10] sm:$0x3]
      %v1133 = vunpack.c.l.b16 %v1100
      %v1134 = vunpack.c.h.b16 %v1100
      %v1135 = vunpack.c.l.b16 %v1101
      %v1136 = vunpack.c.h.b16 %v1101
      %v1137 = vunpack.c.l.b16 %v1102
      %v1138 = vunpack.c.h.b16 %v1102
      %v1139 = vunpack.c.l.b16 %v1103
      %v1140 = vunpack.c.h.b16 %v1103
      %v1141 = vunpack.c.l.b16 %v1104
      %v1142 = vunpack.c.h.b16 %v1104
      %v1143 = vunpack.c.l.b16 %v1105
      %v1144 = vunpack.c.h.b16 %v1105
      %v1145 = vunpack.c.l.b16 %v1106
      %v1146 = vunpack.c.h.b16 %v1106
      %v1147 = vunpack.c.l.b16 %v1107
      %v1148 = vunpack.c.h.b16 %v1107
      %v1149 = vunpack.c.l.b16 %v1108
      %v1150 = vunpack.c.h.b16 %v1108
      %v1151 = vunpack.c.l.b16 %v1109
      %v1152 = vunpack.c.h.b16 %v1109
      %v1153 = vunpack.c.l.b16 %v1110
      %v1154 = vunpack.c.h.b16 %v1110
      %v1155 = vunpack.c.l.b16 %v1111
      %v1156 = vunpack.c.h.b16 %v1111
      %v1157 = vunpack.c.l.b16 %v1112
      %v1158 = vunpack.c.h.b16 %v1112
      %v1159 = vunpack.c.l.b16 %v1113
      %v1160 = vunpack.c.h.b16 %v1113
      %v1161 = vunpack.c.l.b16 %v1114
      %v1162 = vunpack.c.h.b16 %v1114
      %v1163 = vunpack.c.l.b16 %v1115
      %v1164 = vunpack.c.h.b16 %v1115
      %v1165 = vpack.c.b16 %v1135, %v1133
      %v1166 = vpack.c.b16 %v1136, %v1134
      %v1167 = vpack.c.b16 %v1139, %v1137
      %v1168 = vpack.c.b16 %v1140, %v1138
      %v1169 = vpack.c.b16 %v1143, %v1141
      %v1170 = vpack.c.b16 %v1144, %v1142
      %v1171 = vpack.c.b16 %v1147, %v1145
      %v1172 = vpack.c.b16 %v1148, %v1146
      %v1173 = vpack.c.b16 %v1151, %v1149
      %v1174 = vpack.c.b16 %v1152, %v1150
      %v1175 = vpack.c.b16 %v1155, %v1153
      %v1176 = vpack.c.b16 %v1156, %v1154
      %v1177 = vpack.c.b16 %v1159, %v1157
      %v1178 = vpack.c.b16 %v1160, %v1158
      %v1179 = vpack.c.b16 %v1163, %v1161
      %v1180 = vpack.c.b16 %v1164, %v1162
      %v1198 = vperm.slane %v1116, 0
      %v1199 = vperm.slane %v1116, 1
      %1202 = vmatpush.bf16.msra.mxu0 %v1179
      %1203 = vmatpush.bf16.msra.mxu0 %v1177
      %1204 = vmatpush.bf16.msra.mxu0 %v1175
      %1205 = vmatpush.bf16.msra.mxu0 %v1173
      %1206 = vmatpush.bf16.msra.mxu0 %v1171
      %1207 = vmatpush.bf16.msra.mxu0 %v1169
      %1208 = vmatpush.bf16.msra.mxu0 %v1167
      %1209 = vmatpush.bf16.msra.mxu0 %v1165
      %1210 = vmatmul.bf16.gmra.mxu0 %v1099
      %v1211 = vpop.f32.mrf.mxu0
      %v1212 = vadd.f32 %v1198, %v1211
      %v1213 = vpop.f32.mrf.mxu0
      %1214 = vdwg.mxu0
      %1215 = vmatpush.bf16.msra.mxu0 %v1180
      %1216 = vmatpush.bf16.msra.mxu0 %v1178
      %1217 = vmatpush.bf16.msra.mxu0 %v1176
      %1218 = vmatpush.bf16.msra.mxu0 %v1174
      %1219 = vmatpush.bf16.msra.mxu0 %v1172
      %1220 = vmatpush.bf16.msra.mxu0 %v1170
      %1221 = vmatpush.bf16.msra.mxu0 %v1168
      %1222 = vmatpush.bf16.msra.mxu0 %v1166
      %1223 = vmatmul.bf16.gmra.mxu0 %v1099
      %v1224 = vpop.f32.mrf.mxu0
      %v1225 = vadd.f32 %v1199, %v1224
      %v1226 = vpop.f32.mrf.mxu0
      %1227 = vdwg.mxu0
      %v1228 = vmul.f32 %v1212, %v1212
      %v1229 = vmul.f32 %v1225, %v1225
      %v1230 = vmul.f32 %v1212, %v1228
      %v1231 = vmul.f32 %v1225, %v1229
      %v1232 = vmul.f32 %v1230, 0.044715
      %v1233 = vmul.f32 %v1231, 0.044715
      %v1234 = vadd.f32 %v1212, %v1232
      %v1235 = vadd.f32 %v1225, %v1233
      %v1236 = vmul.f32 %v1234, 0.7978846
      %v1237 = vmul.f32 %v1235, 0.7978846
      %v1238 = vtanh.pop %v1236
      %v1239 = vtanh.pop %v1237
      %v1240 = vadd.f32 %v1238, 1.0
      %v1241 = vadd.f32 %v1239, 1.0
      %v1242 = vmul.f32 %v1240, 0.5
      %v1243 = vmul.f32 %v1241, 0.5
      %v1244 = vmul.f32 %v1212, %v1242
      %v1245 = vmul.f32 %v1225, %v1243
      %v1246 = vpack.c.bf16 %v1244, %v1244
      %v1247 = vpack.c.bf16 %v1245, %v1245
      %v1248 = vld [vmem:[%s11] sm:$0xf]
      %v1249 = vld [vmem:[%s11 + $0x4] sm:$0xf]
      %v1250 = vld [vmem:[%s11 + $0x8] sm:$0xf]
      %v1251 = vld [vmem:[%s11 + $0xc] sm:$0xf]
      %v1252 = vld [vmem:[%s11 + $0x10] sm:$0xf]
      %v1253 = vld [vmem:[%s11 + $0x14] sm:$0xf]
      %v1254 = vld [vmem:[%s11 + $0x18] sm:$0xf]
      %v1255 = vld [vmem:[%s11 + $0x1c] sm:$0xf]
      %v1256 = vld [vmem:[%s11 + $0x20] sm:$0xf]
      %v1257 = vld [vmem:[%s11 + $0x24] sm:$0xf]
      %v1258 = vld [vmem:[%s11 + $0x28] sm:$0xf]
      %v1259 = vld [vmem:[%s11 + $0x2c] sm:$0xf]
      %v1260 = vld [vmem:[%s11 + $0x30] sm:$0xf]
      %v1261 = vld [vmem:[%s11 + $0x34] sm:$0xf]
      %v1262 = vld [vmem:[%s11 + $0x38] sm:$0xf]
      %v1263 = vld [vmem:[%s11 + $0x3c] sm:$0xf]
      %v1264 = vld [vmem:[%s11 + $0x40] sm:$0xf]
      %v1265 = vld [vmem:[%s11 + $0x44] sm:$0xf]
      %v1266 = vld [vmem:[%s11 + $0x48] sm:$0xf]
      %v1267 = vld [vmem:[%s11 + $0x4c] sm:$0xf]
      %v1268 = vld [vmem:[%s11 + $0x50] sm:$0xf]
      %v1269 = vld [vmem:[%s11 + $0x54] sm:$0xf]
      %v1270 = vld [vmem:[%s11 + $0x58] sm:$0xf]
      %v1271 = vld [vmem:[%s11 + $0x5c] sm:$0xf]
      %v1272 = vld [vmem:[%s11 + $0x60] sm:$0xf]
      %v1273 = vld [vmem:[%s11 + $0x64] sm:$0xf]
      %v1274 = vld [vmem:[%s11 + $0x68] sm:$0xf]
      %v1275 = vld [vmem:[%s11 + $0x6c] sm:$0xf]
      %v1276 = vld [vmem:[%s11 + $0x70] sm:$0xf]
      %v1277 = vld [vmem:[%s11 + $0x74] sm:$0xf]
      %v1278 = vld [vmem:[%s11 + $0x78] sm:$0xf]
      %v1279 = vld [vmem:[%s11 + $0x7c] sm:$0xf]
      %v1280 = vld [vmem:[%s12] sm:$0x1]
      %v1313 = vunpack.c.l.b16 %v1248
      %v1314 = vunpack.c.l.b16 %v1249
      %v1315 = vunpack.c.l.b16 %v1250
      %v1316 = vunpack.c.l.b16 %v1251
      %v1317 = vunpack.c.l.b16 %v1252
      %v1318 = vunpack.c.l.b16 %v1253
      %v1319 = vunpack.c.l.b16 %v1254
      %v1320 = vunpack.c.l.b16 %v1255
      %v1321 = vunpack.c.l.b16 %v1256
      %v1322 = vunpack.c.l.b16 %v1257
      %v1323 = vunpack.c.l.b16 %v1258
      %v1324 = vunpack.c.l.b16 %v1259
      %v1325 = vunpack.c.l.b16 %v1260
      %v1326 = vunpack.c.l.b16 %v1261
      %v1327 = vunpack.c.l.b16 %v1262
      %v1328 = vunpack.c.l.b16 %v1263
      %v1329 = vunpack.c.l.b16 %v1264
      %v1330 = vunpack.c.l.b16 %v1265
      %v1331 = vunpack.c.l.b16 %v1266
      %v1332 = vunpack.c.l.b16 %v1267
      %v1333 = vunpack.c.l.b16 %v1268
      %v1334 = vunpack.c.l.b16 %v1269
      %v1335 = vunpack.c.l.b16 %v1270
      %v1336 = vunpack.c.l.b16 %v1271
      %v1337 = vunpack.c.l.b16 %v1272
      %v1338 = vunpack.c.l.b16 %v1273
      %v1339 = vunpack.c.l.b16 %v1274
      %v1340 = vunpack.c.l.b16 %v1275
      %v1341 = vunpack.c.l.b16 %v1276
      %v1342 = vunpack.c.l.b16 %v1277
      %v1343 = vunpack.c.l.b16 %v1278
      %v1344 = vunpack.c.l.b16 %v1279
      %v1345 = vpack.c.b16 %v1314, %v1313
      %v1346 = vpack.c.b16 %v1316, %v1315
      %v1347 = vpack.c.b16 %v1318, %v1317
      %v1348 = vpack.c.b16 %v1320, %v1319
      %v1349 = vpack.c.b16 %v1322, %v1321
      %v1350 = vpack.c.b16 %v1324, %v1323
      %v1351 = vpack.c.b16 %v1326, %v1325
      %v1352 = vpack.c.b16 %v1328, %v1327
      %v1353 = vpack.c.b16 %v1330, %v1329
      %v1354 = vpack.c.b16 %v1332, %v1331
      %v1355 = vpack.c.b16 %v1334, %v1333
      %v1356 = vpack.c.b16 %v1336, %v1335
      %v1357 = vpack.c.b16 %v1338, %v1337
      %v1358 = vpack.c.b16 %v1340, %v1339
      %v1359 = vpack.c.b16 %v1342, %v1341
      %v1360 = vpack.c.b16 %v1344, %v1343
      %1377 = vmatpush.bf16.msra.mxu0 %v1352
      %1378 = vmatpush.bf16.msra.mxu0 %v1351
      %1379 = vmatpush.bf16.msra.mxu0 %v1350
      %1380 = vmatpush.bf16.msra.mxu0 %v1349
      %1381 = vmatpush.bf16.msra.mxu0 %v1348
      %1382 = vmatpush.bf16.msra.mxu0 %v1347
      %1383 = vmatpush.bf16.msra.mxu0 %v1346
      %1384 = vmatpush.bf16.msra.mxu0 %v1345
      %1385 = vmatmul.bf16.gmra.mxu0 %v1246
      %v1386 = vpop.f32.mrf.mxu0
      %v1387 = vadd.f32 %v1280, %v1386
      %v1388 = vpop.f32.mrf.mxu0
      %1389 = vdwg.mxu0
      %1390 = vmatpush.bf16.msra.mxu0 %v1360
      %1391 = vmatpush.bf16.msra.mxu0 %v1359
      %1392 = vmatpush.bf16.msra.mxu0 %v1358
      %1393 = vmatpush.bf16.msra.mxu0 %v1357
      %1394 = vmatpush.bf16.msra.mxu0 %v1356
      %1395 = vmatpush.bf16.msra.mxu0 %v1355
      %1396 = vmatpush.bf16.msra.mxu0 %v1354
      %1397 = vmatpush.bf16.msra.mxu0 %v1353
      %1398 = vmatmul.bf16.gmra.mxu0 %v1247
      %v1399 = vpop.f32.mrf.mxu0
      %v1400 = vadd.f32 %v1387, %v1399
      %v1401 = vpop.f32.mrf.mxu0
      %1402 = vdwg.mxu0
      %v1403 = vadd.f32 %v1071, %v1400
      %v1404 = vld [vmem:[%s13] sm:$0x1]
      %v1405 = vld [vmem:[%s14] sm:$0x1]
      %v1406 = vsel %vm1074, %v1403, 0.0
      %1407 = vadd.xlane.f32.xlu0 %v1406
      %v1408 = vpop.xlane.xlu0 %1407
      %v1409 = vmul.f32 %v1408, %v610
      %v1410 = vsub.f32 %v1403, %v1409
      %v1411 = vmul.f32 %v1410, %v1410
      %v1412 = vsel %vm1074, %v1411, 0.0
      %1413 = vadd.xlane.f32.xlu0 %v1412
      %v1414 = vpop.xlane.xlu0 %1413
      %v1415 = vmul.f32 %v1414, %v610
      %v1416 = vadd.f32 %v1415, 1e-06
      %v1417 = vrsqrt.pop %v1416
      %v1418 = vmul.f32 %v1417, %v1416
      %v1419 = vmul.f32 %v1418, %v1417
      %v1420 = vmul.f32 0.5, %v1419
      %v1421 = vsub.f32 1.5, %v1420
      %v1422 = vmul.f32 %v1417, %v1421
      %vm1423 = vweird.f32 %v1416
      %vm1424 = vweird.f32 %v1417
      %vm1425 = vmor %vm1423, %vm1424
      %v1426 = vsel %vm1425, %v1417, %v1422
      %v1427 = vmul.f32 %v1410, %v1426
      %v1428 = vmul.f32 %v1427, %v1404
      %v1429 = vadd.f32 %v1428, %v1405
      %v1430 = vpack.c.bf16 %v1429, %v1429
      %v1431 = vld [vmem:[%s15] sm:$0xf]
      %v1432 = vld [vmem:[%s15 + $0x4] sm:$0xf]
      %v1433 = vld [vmem:[%s15 + $0x8] sm:$0xf]
      %v1434 = vld [vmem:[%s15 + $0xc] sm:$0xf]
      %v1435 = vld [vmem:[%s15 + $0x10] sm:$0xf]
      %v1436 = vld [vmem:[%s15 + $0x14] sm:$0xf]
      %v1437 = vld [vmem:[%s15 + $0x18] sm:$0xf]
      %v1438 = vld [vmem:[%s15 + $0x1c] sm:$0xf]
      %v1439 = vld [vmem:[%s15 + $0x20] sm:$0xf]
      %v1440 = vld [vmem:[%s15 + $0x24] sm:$0xf]
      %v1441 = vld [vmem:[%s15 + $0x28] sm:$0xf]
      %v1442 = vld [vmem:[%s15 + $0x2c] sm:$0xf]
      %v1443 = vld [vmem:[%s15 + $0x30] sm:$0xf]
      %v1444 = vld [vmem:[%s15 + $0x34] sm:$0xf]
      %v1445 = vld [vmem:[%s15 + $0x38] sm:$0xf]
      %v1446 = vld [vmem:[%s15 + $0x3c] sm:$0xf]
      %v1447 = vld [vmem:[%s16] sm:$0x1]
      %v1464 = vunpack.c.l.b16 %v1431
      %v1465 = vunpack.c.l.b16 %v1432
      %v1466 = vunpack.c.l.b16 %v1433
      %v1467 = vunpack.c.l.b16 %v1434
      %v1468 = vunpack.c.l.b16 %v1435
      %v1469 = vunpack.c.l.b16 %v1436
      %v1470 = vunpack.c.l.b16 %v1437
      %v1471 = vunpack.c.l.b16 %v1438
      %v1472 = vunpack.c.l.b16 %v1439
      %v1473 = vunpack.c.l.b16 %v1440
      %v1474 = vunpack.c.l.b16 %v1441
      %v1475 = vunpack.c.l.b16 %v1442
      %v1476 = vunpack.c.l.b16 %v1443
      %v1477 = vunpack.c.l.b16 %v1444
      %v1478 = vunpack.c.l.b16 %v1445
      %v1479 = vunpack.c.l.b16 %v1446
      %v1480 = vpack.c.b16 %v1465, %v1464
      %v1481 = vpack.c.b16 %v1467, %v1466
      %v1482 = vpack.c.b16 %v1469, %v1468
      %v1483 = vpack.c.b16 %v1471, %v1470
      %v1484 = vpack.c.b16 %v1473, %v1472
      %v1485 = vpack.c.b16 %v1475, %v1474
      %v1486 = vpack.c.b16 %v1477, %v1476
      %v1487 = vpack.c.b16 %v1479, %v1478
      %1496 = vmatpush.bf16.msra.mxu0 %v1487
      %1497 = vmatpush.bf16.msra.mxu0 %v1486
      %1498 = vmatpush.bf16.msra.mxu0 %v1485
      %1499 = vmatpush.bf16.msra.mxu0 %v1484
      %1500 = vmatpush.bf16.msra.mxu0 %v1483
      %1501 = vmatpush.bf16.msra.mxu0 %v1482
      %1502 = vmatpush.bf16.msra.mxu0 %v1481
      %1503 = vmatpush.bf16.msra.mxu0 %v1480
      %1504 = vmatmul.bf16.gmra.mxu0 %v1430
      %v1505 = vpop.f32.mrf.mxu0
      %v1506 = vadd.f32 %v1447, %v1505
      %v1507 = vpop.f32.mrf.mxu0
      %1508 = vdwg.mxu0
      %v1509 = vmax.f32 %v1506, 0.0
      %v1510 = vpack.c.bf16 %v1509, %v1509
      %v1511 = vld [vmem:[%s17] sm:$0xf]
      %v1512 = vld [vmem:[%s17 + $0x4] sm:$0xf]
      %v1513 = vld [vmem:[%s17 + $0x8] sm:$0xf]
      %v1514 = vld [vmem:[%s17 + $0xc] sm:$0xf]
      %v1515 = vld [vmem:[%s17 + $0x10] sm:$0xf]
      %v1516 = vld [vmem:[%s17 + $0x14] sm:$0xf]
      %v1517 = vld [vmem:[%s17 + $0x18] sm:$0xf]
      %v1518 = vld [vmem:[%s17 + $0x1c] sm:$0xf]
      %v1519 = vld [vmem:[%s17 + $0x20] sm:$0xf]
      %v1520 = vld [vmem:[%s17 + $0x24] sm:$0xf]
      %v1521 = vld [vmem:[%s17 + $0x28] sm:$0xf]
      %v1522 = vld [vmem:[%s17 + $0x2c] sm:$0xf]
      %v1523 = vld [vmem:[%s17 + $0x30] sm:$0xf]
      %v1524 = vld [vmem:[%s17 + $0x34] sm:$0xf]
      %v1525 = vld [vmem:[%s17 + $0x38] sm:$0xf]
      %v1526 = vld [vmem:[%s17 + $0x3c] sm:$0xf]
      %v1527 = vld [vmem:[%s18] sm:$0x1]
      %v1544 = vunpack.c.l.b16 %v1511
      %v1545 = vunpack.c.l.b16 %v1512
      %v1546 = vunpack.c.l.b16 %v1513
      %v1547 = vunpack.c.l.b16 %v1514
      %v1548 = vunpack.c.l.b16 %v1515
      %v1549 = vunpack.c.l.b16 %v1516
      %v1550 = vunpack.c.l.b16 %v1517
      %v1551 = vunpack.c.l.b16 %v1518
      %v1552 = vunpack.c.l.b16 %v1519
      %v1553 = vunpack.c.l.b16 %v1520
      %v1554 = vunpack.c.l.b16 %v1521
      %v1555 = vunpack.c.l.b16 %v1522
      %v1556 = vunpack.c.l.b16 %v1523
      %v1557 = vunpack.c.l.b16 %v1524
      %v1558 = vunpack.c.l.b16 %v1525
      %v1559 = vunpack.c.l.b16 %v1526
      %v1560 = vpack.c.b16 %v1545, %v1544
      %v1561 = vpack.c.b16 %v1547, %v1546
      %v1562 = vpack.c.b16 %v1549, %v1548
      %v1563 = vpack.c.b16 %v1551, %v1550
      %v1564 = vpack.c.b16 %v1553, %v1552
      %v1565 = vpack.c.b16 %v1555, %v1554
      %v1566 = vpack.c.b16 %v1557, %v1556
      %v1567 = vpack.c.b16 %v1559, %v1558
      %1576 = vmatpush.bf16.msra.mxu0 %v1567
      %1577 = vmatpush.bf16.msra.mxu0 %v1566
      %1578 = vmatpush.bf16.msra.mxu0 %v1565
      %1579 = vmatpush.bf16.msra.mxu0 %v1564
      %1580 = vmatpush.bf16.msra.mxu0 %v1563
      %1581 = vmatpush.bf16.msra.mxu0 %v1562
      %1582 = vmatpush.bf16.msra.mxu0 %v1561
      %1583 = vmatpush.bf16.msra.mxu0 %v1560
      %1584 = vmatmul.bf16.gmra.mxu0 %v1510
      %v1585 = vpop.f32.mrf.mxu0
      %v1586 = vadd.f32 %v1527, %v1585
      %v1587 = vpop.f32.mrf.mxu0
      %1588 = vdwg.mxu0
      %1589 = vst [vmem:[%s595] sm:$0x1] %v1586
      %p1590 = scmp.lt.s32.totalorder %s30, 1
      %s1591 = scalar_select %p1590, %s30, 1
      %s1592 = scalar_lea.vmem %s19, %s1591
      // Predicated region
      $region97: #{_lambda_.5} parent=95 // pred_check
        %p1593 = pneg %p452
      $region98: #{_lambda_.5} parent=95 // pred_check_branch
        %1595 = sbr.rel (%p1593) target = $region100
      $region99: #{_lambda_.5} parent=95 // pred_region
        _
      $region100: #{_lambda_.5} parent=95 // pred_fallthru
        _
    $region96: #{_lambda_.5} parent=5 // pred_fallthru
      _
    %p1596 = scmp.le.s32.totalorder 2, %s25
    // Predicated region
    $region101: #{_lambda_.5} parent=5 // pred_check
      %p1597 = pneg %p1596
    $region102: #{_lambda_.5} parent=5 // pred_check_branch
      %1599 = sbr.rel (%p1597) target = $region104
    $region103: #{_lambda_.5} parent=5 // pred_region
      %s1600 = ssub.s32 %s25, 2
      // Predicated region
      $region105: #{_lambda_.5} parent=103 // pred_check
        %p1601 = pneg %p458
      $region106: #{_lambda_.5} parent=103 // pred_check_branch
        %1603 = sbr.rel (%p1601) target = $region108
      $region107: #{_lambda_.5} parent=103 // pred_region
        %p1604 = scmp.lt.s32.totalorder %s31, 1
        %s1605 = scalar_select %p1604, %s31, 1
        %s1606 = scalar_lea.vmem %s19, %s1605
      $region108: #{_lambda_.5} parent=103 // pred_fallthru
        _
    $region104: #{_lambda_.5} parent=5 // pred_fallthru
      _
  $region6: #{_lambda_.5} parent=0 // loop_footer
    %s29 = sadd.s32 1, %s25
  $region7: #{_lambda_.5} parent=0 // loop_footer_branch
    %24 = sbr.rel target = $region3
  $region8: #{_lambda_.5} parent=0 // loop_exit
    _

// kernel: _lambda_.6
$region0: #{_lambda_.6}
  #allocation0 [shape = 'u32[]', space=smem, size = 0x4, offset = 0x4, fixed_abs, tag = 'smem constant byte address 0x4 - core index']
  #allocation1 [shape = 'u32[72,128]{1,0:T(1,128)}', space=vmem, size = 0x9000, scoped, tag = 'internal scratch']
  %s0 = inlined_call_operand.vmem [shape: f32[2,8,128], index: 0, kind: input, shape index: {}]
  %s1 = inlined_call_operand.vmem [shape: s32[2,1,8], index: 1, kind: input, shape index: {}]
  %s2 = inlined_call_operand.vmem [shape: f32[1,128], index: 2, kind: input, shape index: {}]
  %s3 = inlined_call_operand.vmem [shape: bf16[128,384], index: 3, kind: input, shape index: {}]
  %s4 = inlined_call_operand.vmem [shape: f32[1,384], index: 4, kind: input, shape index: {}]
  %s5 = inlined_call_operand.vmem [shape: bf16[128,128], index: 5, kind: input, shape index: {}]
  %s6 = inlined_call_operand.vmem [shape: f32[1,128], index: 6, kind: input, shape index: {}]
  %s7 = inlined_call_operand.vmem [shape: f32[1,128], index: 7, kind: input, shape index: {}]
  %s8 = inlined_call_operand.vmem [shape: bf16[128,512], index: 8, kind: input, shape index: {}]
  %s9 = inlined_call_operand.vmem [shape: bf16[256,128], index: 9, kind: input, shape index: {}]
  %s10 = inlined_call_operand.vmem [shape: f32[1,128], index: 10, kind: input, shape index: {}]
  %s11 = inlined_call_operand.vmem [shape: f32[2,8,128], index: 11, kind: output, shape index: {}]
  %s12 = sld [smem:[#allocation0]]
  $region77: #{_lambda_.6} parent=0
    _
  %s14 = ssub.s32 1, %s12
  %s15 = scalar_select 0, %s14, %s12
  loop: start=0, step=1, limit=4
  $region2: #{_lambda_.6} parent=0 // loop_pre_header
    _
  $region3: #{_lambda_.6} parent=0 // loop_header
    %s17 = sphi 0, %s21
    %p18 = scmp.ge.s32.totalorder %s17, 4
    %s27 = sphi 0, %s29
    %s30 = sphi 0, %s27
    %s31 = sphi 0, %s30
    %s47 = sphi 0, %s31
    %s53 = sphi 0, %s55
    %s56 = sphi 0, %s53
    %s57 = sphi 0, %s56
    %s73 = sphi 0, %s57
    %s77 = sphi 0, %s77
    %s79 = sphi 0, %s77
    %s80 = sphi 0, %s79
    %s94 = sphi 0, %s80
    %s98 = sphi 0, %s98
    %s100 = sphi 0, %s98
    %s101 = sphi 0, %s100
    %s115 = sphi 0, %s101
    %s119 = sphi 0, %s119
    %s121 = sphi 0, %s119
    %s122 = sphi 0, %s121
    %s136 = sphi 0, %s122
    %s140 = sphi 0, %s140
    %s142 = sphi 0, %s140
    %s143 = sphi 0, %s142
    %s157 = sphi 0, %s143
    %s161 = sphi 0, %s161
    %s163 = sphi 0, %s161
    %s164 = sphi 0, %s163
    %s178 = sphi 0, %s164
    %s182 = sphi 0, %s182
    %s184 = sphi 0, %s182
    %s185 = sphi 0, %s184
    %s199 = sphi 0, %s185
    %s203 = sphi 0, %s203
    %s205 = sphi 0, %s203
    %s206 = sphi 0, %s205
    %s220 = sphi 0, %s206
    %s224 = sphi 0, %s224
    %s226 = sphi 0, %s224
    %s227 = sphi 0, %s226
    %s241 = sphi 0, %s227
    %s245 = sphi 0, %s245
    %s247 = sphi 0, %s245
    %s248 = sphi 0, %s247
    %s262 = sphi 0, %s248
    %s268 = sphi 0, %s270
    %s271 = sphi 0, %s268
    %s272 = sphi 0, %s271
    %s288 = sphi 0, %s272
  $region4: #{_lambda_.6} parent=0 // loop_header_branch
    %20 = sbr.rel (%p18) target = $region8
  $region5: #{_lambda_.6} parent=0 // loop_body
    %s22 = ssub.s32 %s17, 1
    %s23 = ssub.s32 %s17, 2
    %s24 = sadd.s32 %s17, 1
    %s25 = ssub.s32 %s17, %s24
    %p26 = scmp.eq.s32.totalorder %s25, 0
    %s28 = sadd.s32 %s27, 1
    %s29 = scalar_select %p26, %s27, %s28
    %p32 = pneg %p26
    %p33 = scmp.eq.s32.totalorder %s17, 1
    %p34 = por %p32, %p33
    %p35 = scmp.ne.s32.totalorder %s27, %s30
    %p36 = scmp.eq.s32.totalorder %s17, 0
    %p37 = por %p35, %p36
    %p38 = scmp.ne.s32.totalorder %s27, %s30
    %p39 = scmp.eq.s32.totalorder %s22, 1
    %p40 = por %p38, %p39
    %p41 = scmp.ne.s32.totalorder %s30, %s31
    %p42 = scmp.eq.s32.totalorder %s22, 0
    %p43 = por %p41, %p42
    %p44 = scmp.ne.s32.totalorder %s30, %s31
    %p45 = scmp.eq.s32.totalorder %s23, 1
    %p46 = por %p44, %p45
    %p48 = scmp.ne.s32.totalorder %s31, %s47
    %p49 = scmp.eq.s32.totalorder %s23, 0
    %p50 = por %p48, %p49
    %s51 = ssub.s32 %s17, %s24
    %p52 = scmp.eq.s32.totalorder %s51, 0
    %s54 = sadd.s32 %s53, 1
    %s55 = scalar_select %p52, %s53, %s54
    %p58 = pneg %p52
    %p59 = scmp.eq.s32.totalorder %s17, 1
    %p60 = por %p58, %p59
    %p61 = scmp.ne.s32.totalorder %s53, %s56
    %p62 = scmp.eq.s32.totalorder %s17, 0
    %p63 = por %p61, %p62
    %p64 = scmp.ne.s32.totalorder %s53, %s56
    %p65 = scmp.eq.s32.totalorder %s22, 1
    %p66 = por %p64, %p65
    %p67 = scmp.ne.s32.totalorder %s56, %s57
    %p68 = scmp.eq.s32.totalorder %s22, 0
    %p69 = por %p67, %p68
    %p70 = scmp.ne.s32.totalorder %s56, %s57
    %p71 = scmp.eq.s32.totalorder %s23, 1
    %p72 = por %p70, %p71
    %p74 = scmp.ne.s32.totalorder %s57, %s73
    %p75 = scmp.eq.s32.totalorder %s23, 0
    %p76 = por %p74, %p75
    %s78 = sadd.s32 %s77, 1
    %p81 = scmp.eq.s32.totalorder %s17, 1
    %p82 = scmp.ne.s32.totalorder %s77, %s79
    %p83 = scmp.eq.s32.totalorder %s17, 0
    %p84 = por %p82, %p83
    %p85 = scmp.ne.s32.totalorder %s77, %s79
    %p86 = scmp.eq.s32.totalorder %s22, 1
    %p87 = por %p85, %p86
    %p88 = scmp.ne.s32.totalorder %s79, %s80
    %p89 = scmp.eq.s32.totalorder %s22, 0
    %p90 = por %p88, %p89
    %p91 = scmp.ne.s32.totalorder %s79, %s80
    %p92 = scmp.eq.s32.totalorder %s23, 1
    %p93 = por %p91, %p92
    %p95 = scmp.ne.s32.totalorder %s80, %s94
    %p96 = scmp.eq.s32.totalorder %s23, 0
    %p97 = por %p95, %p96
    %s99 = sadd.s32 %s98, 1
    %p102 = scmp.eq.s32.totalorder %s17, 1
    %p103 = scmp.ne.s32.totalorder %s98, %s100
    %p104 = scmp.eq.s32.totalorder %s17, 0
    %p105 = por %p103, %p104
    %p106 = scmp.ne.s32.totalorder %s98, %s100
    %p107 = scmp.eq.s32.totalorder %s22, 1
    %p108 = por %p106, %p107
    %p109 = scmp.ne.s32.totalorder %s100, %s101
    %p110 = scmp.eq.s32.totalorder %s22, 0
    %p111 = por %p109, %p110
    %p112 = scmp.ne.s32.totalorder %s100, %s101
    %p113 = scmp.eq.s32.totalorder %s23, 1
    %p114 = por %p112, %p113
    %p116 = scmp.ne.s32.totalorder %s101, %s115
    %p117 = scmp.eq.s32.totalorder %s23, 0
    %p118 = por %p116, %p117
    %s120 = sadd.s32 %s119, 1
    %p123 = scmp.eq.s32.totalorder %s17, 1
    %p124 = scmp.ne.s32.totalorder %s119, %s121
    %p125 = scmp.eq.s32.totalorder %s17, 0
    %p126 = por %p124, %p125
    %p127 = scmp.ne.s32.totalorder %s119, %s121
    %p128 = scmp.eq.s32.totalorder %s22, 1
    %p129 = por %p127, %p128
    %p130 = scmp.ne.s32.totalorder %s121, %s122
    %p131 = scmp.eq.s32.totalorder %s22, 0
    %p132 = por %p130, %p131
    %p133 = scmp.ne.s32.totalorder %s121, %s122
    %p134 = scmp.eq.s32.totalorder %s23, 1
    %p135 = por %p133, %p134
    %p137 = scmp.ne.s32.totalorder %s122, %s136
    %p138 = scmp.eq.s32.totalorder %s23, 0
    %p139 = por %p137, %p138
    %s141 = sadd.s32 %s140, 1
    %p144 = scmp.eq.s32.totalorder %s17, 1
    %p145 = scmp.ne.s32.totalorder %s140, %s142
    %p146 = scmp.eq.s32.totalorder %s17, 0
    %p147 = por %p145, %p146
    %p148 = scmp.ne.s32.totalorder %s140, %s142
    %p149 = scmp.eq.s32.totalorder %s22, 1
    %p150 = por %p148, %p149
    %p151 = scmp.ne.s32.totalorder %s142, %s143
    %p152 = scmp.eq.s32.totalorder %s22, 0
    %p153 = por %p151, %p152
    %p154 = scmp.ne.s32.totalorder %s142, %s143
    %p155 = scmp.eq.s32.totalorder %s23, 1
    %p156 = por %p154, %p155
    %p158 = scmp.ne.s32.totalorder %s143, %s157
    %p159 = scmp.eq.s32.totalorder %s23, 0
    %p160 = por %p158, %p159
    %s162 = sadd.s32 %s161, 1
    %p165 = scmp.eq.s32.totalorder %s17, 1
    %p166 = scmp.ne.s32.totalorder %s161, %s163
    %p167 = scmp.eq.s32.totalorder %s17, 0
    %p168 = por %p166, %p167
    %p169 = scmp.ne.s32.totalorder %s161, %s163
    %p170 = scmp.eq.s32.totalorder %s22, 1
    %p171 = por %p169, %p170
    %p172 = scmp.ne.s32.totalorder %s163, %s164
    %p173 = scmp.eq.s32.totalorder %s22, 0
    %p174 = por %p172, %p173
    %p175 = scmp.ne.s32.totalorder %s163, %s164
    %p176 = scmp.eq.s32.totalorder %s23, 1
    %p177 = por %p175, %p176
    %p179 = scmp.ne.s32.totalorder %s164, %s178
    %p180 = scmp.eq.s32.totalorder %s23, 0
    %p181 = por %p179, %p180
    %s183 = sadd.s32 %s182, 1
    %p186 = scmp.eq.s32.totalorder %s17, 1
    %p187 = scmp.ne.s32.totalorder %s182, %s184
    %p188 = scmp.eq.s32.totalorder %s17, 0
    %p189 = por %p187, %p188
    %p190 = scmp.ne.s32.totalorder %s182, %s184
    %p191 = scmp.eq.s32.totalorder %s22, 1
    %p192 = por %p190, %p191
    %p193 = scmp.ne.s32.totalorder %s184, %s185
    %p194 = scmp.eq.s32.totalorder %s22, 0
    %p195 = por %p193, %p194
    %p196 = scmp.ne.s32.totalorder %s184, %s185
    %p197 = scmp.eq.s32.totalorder %s23, 1
    %p198 = por %p196, %p197
    %p200 = scmp.ne.s32.totalorder %s185, %s199
    %p201 = scmp.eq.s32.totalorder %s23, 0
    %p202 = por %p200, %p201
    %s204 = sadd.s32 %s203, 1
    %p207 = scmp.eq.s32.totalorder %s17, 1
    %p208 = scmp.ne.s32.totalorder %s203, %s205
    %p209 = scmp.eq.s32.totalorder %s17, 0
    %p210 = por %p208, %p209
    %p211 = scmp.ne.s32.totalorder %s203, %s205
    %p212 = scmp.eq.s32.totalorder %s22, 1
    %p213 = por %p211, %p212
    %p214 = scmp.ne.s32.totalorder %s205, %s206
    %p215 = scmp.eq.s32.totalorder %s22, 0
    %p216 = por %p214, %p215
    %p217 = scmp.ne.s32.totalorder %s205, %s206
    %p218 = scmp.eq.s32.totalorder %s23, 1
    %p219 = por %p217, %p218
    %p221 = scmp.ne.s32.totalorder %s206, %s220
    %p222 = scmp.eq.s32.totalorder %s23, 0
    %p223 = por %p221, %p222
    %s225 = sadd.s32 %s224, 1
    %p228 = scmp.eq.s32.totalorder %s17, 1
    %p229 = scmp.ne.s32.totalorder %s224, %s226
    %p230 = scmp.eq.s32.totalorder %s17, 0
    %p231 = por %p229, %p230
    %p232 = scmp.ne.s32.totalorder %s224, %s226
    %p233 = scmp.eq.s32.totalorder %s22, 1
    %p234 = por %p232, %p233
    %p235 = scmp.ne.s32.totalorder %s226, %s227
    %p236 = scmp.eq.s32.totalorder %s22, 0
    %p237 = por %p235, %p236
    %p238 = scmp.ne.s32.totalorder %s226, %s227
    %p239 = scmp.eq.s32.totalorder %s23, 1
    %p240 = por %p238, %p239
    %p242 = scmp.ne.s32.totalorder %s227, %s241
    %p243 = scmp.eq.s32.totalorder %s23, 0
    %p244 = por %p242, %p243
    %s246 = sadd.s32 %s245, 1
    %p249 = scmp.eq.s32.totalorder %s17, 1
    %p250 = scmp.ne.s32.totalorder %s245, %s247
    %p251 = scmp.eq.s32.totalorder %s17, 0
    %p252 = por %p250, %p251
    %p253 = scmp.ne.s32.totalorder %s245, %s247
    %p254 = scmp.eq.s32.totalorder %s22, 1
    %p255 = por %p253, %p254
    %p256 = scmp.ne.s32.totalorder %s247, %s248
    %p257 = scmp.eq.s32.totalorder %s22, 0
    %p258 = por %p256, %p257
    %p259 = scmp.ne.s32.totalorder %s247, %s248
    %p260 = scmp.eq.s32.totalorder %s23, 1
    %p261 = por %p259, %p260
    %p263 = scmp.ne.s32.totalorder %s248, %s262
    %p264 = scmp.eq.s32.totalorder %s23, 0
    %p265 = por %p263, %p264
    %s266 = ssub.s32 %s17, %s24
    %p267 = scmp.eq.s32.totalorder %s266, 0
    %s269 = sadd.s32 %s268, 1
    %s270 = scalar_select %p267, %s268, %s269
    %p273 = pneg %p267
    %p274 = scmp.eq.s32.totalorder %s17, 1
    %p275 = por %p273, %p274
    %p276 = scmp.ne.s32.totalorder %s268, %s271
    %p277 = scmp.eq.s32.totalorder %s17, 0
    %p278 = por %p276, %p277
    %p279 = scmp.ne.s32.totalorder %s268, %s271
    %p280 = scmp.eq.s32.totalorder %s22, 1
    %p281 = por %p279, %p280
    %p282 = scmp.ne.s32.totalorder %s271, %s272
    %p283 = scmp.eq.s32.totalorder %s22, 0
    %p284 = por %p282, %p283
    %p285 = scmp.ne.s32.totalorder %s271, %s272
    %p286 = scmp.eq.s32.totalorder %s23, 1
    %p287 = por %p285, %p286
    %p289 = scmp.ne.s32.totalorder %s272, %s288
    %p290 = scmp.eq.s32.totalorder %s23, 0
    %p291 = por %p289, %p290
    %p292 = scmp.le.s32.totalorder 1, %s17
    %p293 = scmp.lt.s32.totalorder %s17, 3
    %p294 = pnand %p292, %p293
    %p295 = pneg %p294
    // Predicated region
    $region9: #{_lambda_.6} parent=5 // pred_check
      _
    $region10: #{_lambda_.6} parent=5 // pred_check_branch
      %297 = sbr.rel (%p294) target = $region12
    $region11: #{_lambda_.6} parent=5 // pred_region
      %s298 = ssub.s32 %s17, 1
      // Predicated region
      $region13: #{_lambda_.6} parent=11 // pred_check
        %p299 = pneg %p90
      $region14: #{_lambda_.6} parent=11 // pred_check_branch
        %301 = sbr.rel (%p299) target = $region16
      $region15: #{_lambda_.6} parent=11 // pred_region
        _
      $region16: #{_lambda_.6} parent=11 // pred_fallthru
        _
      // Predicated region
      $region17: #{_lambda_.6} parent=11 // pred_check
        %p302 = pneg %p111
      $region18: #{_lambda_.6} parent=11 // pred_check_branch
        %304 = sbr.rel (%p302) target = $region20
      $region19: #{_lambda_.6} parent=11 // pred_region
        _
      $region20: #{_lambda_.6} parent=11 // pred_fallthru
        _
      // Predicated region
      $region21: #{_lambda_.6} parent=11 // pred_check
        %p305 = pneg %p132
      $region22: #{_lambda_.6} parent=11 // pred_check_branch
        %307 = sbr.rel (%p305) target = $region24
      $region23: #{_lambda_.6} parent=11 // pred_region
        _
      $region24: #{_lambda_.6} parent=11 // pred_fallthru
        _
      // Predicated region
      $region25: #{_lambda_.6} parent=11 // pred_check
        %p308 = pneg %p153
      $region26: #{_lambda_.6} parent=11 // pred_check_branch
        %310 = sbr.rel (%p308) target = $region28
      $region27: #{_lambda_.6} parent=11 // pred_region
        _
      $region28: #{_lambda_.6} parent=11 // pred_fallthru
        _
      // Predicated region
      $region29: #{_lambda_.6} parent=11 // pred_check
        %p311 = pneg %p174
      $region30: #{_lambda_.6} parent=11 // pred_check_branch
        %313 = sbr.rel (%p311) target = $region32
      $region31: #{_lambda_.6} parent=11 // pred_region
        _
      $region32: #{_lambda_.6} parent=11 // pred_fallthru
        _
      // Predicated region
      $region33: #{_lambda_.6} parent=11 // pred_check
        %p314 = pneg %p195
      $region34: #{_lambda_.6} parent=11 // pred_check_branch
        %316 = sbr.rel (%p314) target = $region36
      $region35: #{_lambda_.6} parent=11 // pred_region
        _
      $region36: #{_lambda_.6} parent=11 // pred_fallthru
        _
      // Predicated region
      $region37: #{_lambda_.6} parent=11 // pred_check
        %p317 = pneg %p216
      $region38: #{_lambda_.6} parent=11 // pred_check_branch
        %319 = sbr.rel (%p317) target = $region40
      $region39: #{_lambda_.6} parent=11 // pred_region
        _
      $region40: #{_lambda_.6} parent=11 // pred_fallthru
        _
      // Predicated region
      $region41: #{_lambda_.6} parent=11 // pred_check
        %p320 = pneg %p237
      $region42: #{_lambda_.6} parent=11 // pred_check_branch
        %322 = sbr.rel (%p320) target = $region44
      $region43: #{_lambda_.6} parent=11 // pred_region
        _
      $region44: #{_lambda_.6} parent=11 // pred_fallthru
        _
      // Predicated region
      $region45: #{_lambda_.6} parent=11 // pred_check
        %p323 = pneg %p258
      $region46: #{_lambda_.6} parent=11 // pred_check_branch
        %325 = sbr.rel (%p323) target = $region48
      $region47: #{_lambda_.6} parent=11 // pred_region
        _
      $region48: #{_lambda_.6} parent=11 // pred_fallthru
        _
    $region12: #{_lambda_.6} parent=5 // pred_fallthru
      _
    %p326 = scmp.lt.s32.totalorder %s17, 2
    // Predicated region
    $region49: #{_lambda_.6} parent=5 // pred_check
      %p327 = pneg %p326
    $region50: #{_lambda_.6} parent=5 // pred_check_branch
      %329 = sbr.rel (%p327) target = $region52
    $region51: #{_lambda_.6} parent=5 // pred_region
      // Predicated region
      $region53: #{_lambda_.6} parent=51 // pred_check
        %p330 = pneg %p37
      $region54: #{_lambda_.6} parent=51 // pred_check_branch
        %332 = sbr.rel (%p330) target = $region56
      $region55: #{_lambda_.6} parent=51 // pred_region
        %p333 = scmp.lt.s32.totalorder %s17, 1
        %s334 = scalar_select %p333, %s17, 1
        %s335 = smul.addr %s334, 8
        %s336 = scalar_lea.vmem %s0, %s335
      $region56: #{_lambda_.6} parent=51 // pred_fallthru
        _
      // Predicated region
      $region57: #{_lambda_.6} parent=51 // pred_check
        %p337 = pneg %p63
      $region58: #{_lambda_.6} parent=51 // pred_check_branch
        %339 = sbr.rel (%p337) target = $region60
      $region59: #{_lambda_.6} parent=51 // pred_region
        %p340 = scmp.lt.s32.totalorder %s17, 1
        %s341 = scalar_select %p340, %s17, 1
        %s342 = scalar_lea.vmem %s1, %s341
      $region60: #{_lambda_.6} parent=51 // pred_fallthru
        _
    $region52: #{_lambda_.6} parent=5 // pred_fallthru
      _
    %p343 = scmp.le.s32.totalorder 1, %s17
    %p344 = scmp.lt.s32.totalorder %s17, 3
    %p345 = pnand %p343, %p344
    %p346 = pneg %p345
    // Predicated region
    $region61: #{_lambda_.6} parent=5 // pred_check
      _
    $region62: #{_lambda_.6} parent=5 // pred_check_branch
      %348 = sbr.rel (%p345) target = $region64
    $region63: #{_lambda_.6} parent=5 // pred_region
      %s349 = ssub.s32 %s17, 1
      %p350 = scmp.lt.s32.totalorder %s22, 1
      %s351 = scalar_select %p350, %s22, 1
      %s352 = smul.addr %s351, 8
      %s353 = scalar_lea.vmem %s0, %s352
      %p354 = pneg %p43
      %p355 = pneg %p40
      %p356 = scmp.lt.s32.totalorder %s22, 1
      %s357 = scalar_select %p356, %s22, 1
      %s358 = scalar_lea.vmem %s1, %s357
      %p359 = pneg %p69
      %p360 = pneg %p66
      %p361 = pneg %p90
      %p362 = pneg %p87
      %p363 = pneg %p111
      %p364 = pneg %p108
      %p365 = pneg %p132
      %p366 = pneg %p129
      %p367 = pneg %p153
      %p368 = pneg %p150
      %p369 = pneg %p174
      %p370 = pneg %p171
      %p371 = pneg %p195
      %p372 = pneg %p192
      %p373 = pneg %p216
      %p374 = pneg %p213
      %p375 = pneg %p237
      %p376 = pneg %p234
      %p377 = pneg %p258
      %p378 = pneg %p255
      %p379 = pneg %p284
      %p380 = pneg %p281
      %p381 = scmp.lt.s32.totalorder %s22, 1
      %s382 = scalar_select %p381, %s22, 1
      %s383 = smul.addr %s382, 8
      %s384 = scalar_lea.vmem %s11, %s383
      %p385 = scmp.lt.s32.totalorder %s22, 1
      %s386 = scalar_select %p385, %s22, 1
      %s387 = smul.addr %s386, 8
      %s388 = scalar_lea.vmem %s0, %s387
      %p389 = scmp.lt.s32.totalorder %s22, 1
      %s390 = scalar_select %p389, %s22, 1
      %s391 = scalar_lea.vmem %s1, %s390
      %p392 = scmp.lt.s32.totalorder %s22, 1
      %s393 = scalar_select %p392, %s22, 1
      %s394 = smul.addr %s393, 8
      %s395 = scalar_lea.vmem %s11, %s394
      %v397 = vld [vmem:[%s388] sm:$0xff]
      %v398 = vlaneseq
      %v399 = vshrl.u32 %v398, 7
      %v400 = vlaneseq
      %v401 = vand.u32 %v400, 127
      %vm402 = vcmp.le.s32.totalorder %v401, %v399
      %v403 = vld [vmem:[%s391] sm:$0x1]
      %vm404 = vcmp.gt.s32.totalorder %v403, 0
      %v405 = vsel %vm404, 1, 0
      %v406 = vperm.slane %v405, 0
      %vm407 = vcmp.eq.s32.totalorder %v406, 1
      %vm408 = vmand %vm402, %vm407
      %v409 = vsel %vm408, 0.0, -1e+09
      %v410 = vld [vmem:[%s2] sm:$0x1]
      %v411 = vmul.f32 %v397, %v397
      %412 = vadd.xlane.f32.xlu0 %v411
      %v413 = vpop.xlane.xlu0 %412
      %v414 = vrcp.pop 128.0
      %v415 = vmul.f32 128.0, %v414
      %v416 = vsub.f32 1.0, %v415
      %v417 = vmul.f32 %v414, %v416
      %v418 = vadd.f32 %v414, %v417
      %vm419 = vweird.f32 %v414
      %v420 = vsel %vm419, %v414, %v418
      %v421 = vmul.f32 %v413, %v420
      %v422 = vadd.f32 %v421, 1e-05
      %v423 = vrsqrt.pop %v422
      %v424 = vmul.f32 %v423, %v422
      %v425 = vmul.f32 %v424, %v423
      %v426 = vmul.f32 0.5, %v425
      %v427 = vsub.f32 1.5, %v426
      %v428 = vmul.f32 %v423, %v427
      %vm429 = vweird.f32 %v422
      %vm430 = vweird.f32 %v423
      %vm431 = vmor %vm429, %vm430
      %v432 = vsel %vm431, %v423, %v428
      %v433 = vmul.f32 %v397, %v432
      %v435 = vperm.slane %v410, 0
      %v437 = vmul.f32 %v433, %v435
      %v438 = vld [vmem:[%s3] sm:$0xff]
      %v439 = vld [vmem:[%s3 + $0x8] sm:$0xf]
      %v440 = vld [vmem:[%s3 + $0xc] sm:$0xff]
      %v441 = vld [vmem:[%s3 + $0x14] sm:$0xf]
      %v442 = vld [vmem:[%s3 + $0x18] sm:$0xff]
      %v443 = vld [vmem:[%s3 + $0x20] sm:$0xf]
      %v444 = vld [vmem:[%s3 + $0x24] sm:$0xff]
      %v445 = vld [vmem:[%s3 + $0x2c] sm:$0xf]
      %v446 = vld [vmem:[%s3 + $0x30] sm:$0xff]
      %v447 = vld [vmem:[%s3 + $0x38] sm:$0xf]
      %v448 = vld [vmem:[%s3 + $0x3c] sm:$0xff]
      %v449 = vld [vmem:[%s3 + $0x44] sm:$0xf]
      %v450 = vld [vmem:[%s3 + $0x48] sm:$0xff]
      %v451 = vld [vmem:[%s3 + $0x50] sm:$0xf]
      %v452 = vld [vmem:[%s3 + $0x54] sm:$0xff]
      %v453 = vld [vmem:[%s3 + $0x5c] sm:$0xf]
      %v454 = vld [vmem:[%s3 + $0x60] sm:$0xff]
      %v455 = vld [vmem:[%s3 + $0x68] sm:$0xf]
      %v456 = vld [vmem:[%s3 + $0x6c] sm:$0xff]
      %v457 = vld [vmem:[%s3 + $0x74] sm:$0xf]
      %v458 = vld [vmem:[%s3 + $0x78] sm:$0xff]
      %v459 = vld [vmem:[%s3 + $0x80] sm:$0xf]
      %v460 = vld [vmem:[%s3 + $0x84] sm:$0xff]
      %v461 = vld [vmem:[%s3 + $0x8c] sm:$0xf]
      %v462 = vld [vmem:[%s3 + $0x90] sm:$0xff]
      %v463 = vld [vmem:[%s3 + $0x98] sm:$0xf]
      %v464 = vld [vmem:[%s3 + $0x9c] sm:$0xff]
      %v465 = vld [vmem:[%s3 + $0xa4] sm:$0xf]
      %v466 = vld [vmem:[%s3 + $0xa8] sm:$0xff]
      %v467 = vld [vmem:[%s3 + $0xb0] sm:$0xf]
      %v468 = vld [vmem:[%s3 + $0xb4] sm:$0xff]
      %v469 = vld [vmem:[%s3 + $0xbc] sm:$0xf]
      %v470 = vld [vmem:[%s4] sm:$0x7]
      %v471 = vld [vmem:[%s5] sm:$0xf]
      %v472 = vld [vmem:[%s5 + $0x4] sm:$0xf]
      %v473 = vld [vmem:[%s5 + $0x8] sm:$0xf]
      %v474 = vld [vmem:[%s5 + $0xc] sm:$0xf]
      %v475 = vld [vmem:[%s5 + $0x10] sm:$0xf]
      %v476 = vld [vmem:[%s5 + $0x14] sm:$0xf]
      %v477 = vld [vmem:[%s5 + $0x18] sm:$0xf]
      %v478 = vld [vmem:[%s5 + $0x1c] sm:$0xf]
      %v479 = vld [vmem:[%s5 + $0x20] sm:$0xf]
      %v480 = vld [vmem:[%s5 + $0x24] sm:$0xf]
      %v481 = vld [vmem:[%s5 + $0x28] sm:$0xf]
      %v482 = vld [vmem:[%s5 + $0x2c] sm:$0xf]
      %v483 = vld [vmem:[%s5 + $0x30] sm:$0xf]
      %v484 = vld [vmem:[%s5 + $0x34] sm:$0xf]
      %v485 = vld [vmem:[%s5 + $0x38] sm:$0xf]
      %v486 = vld [vmem:[%s5 + $0x3c] sm:$0xf]
      %v487 = vld [vmem:[%s6] sm:$0x1]
      %v488 = vpack.c.bf16 %v437, %v437
      %v490 = vperm.slane %v470, 0
      %v491 = vperm.slane %v470, 1
      %v492 = vperm.slane %v470, 2
      %v528 = vunpack.c.l.b16 %v438
      %v529 = vunpack.c.h.b16 %v438
      %v530 = vunpack.c.l.b16 %v439
      %v531 = vunpack.c.l.b16 %v440
      %v532 = vunpack.c.h.b16 %v440
      %v533 = vunpack.c.l.b16 %v441
      %v534 = vunpack.c.l.b16 %v442
      %v535 = vunpack.c.h.b16 %v442
      %v536 = vunpack.c.l.b16 %v443
      %v537 = vunpack.c.l.b16 %v444
      %v538 = vunpack.c.h.b16 %v444
      %v539 = vunpack.c.l.b16 %v445
      %v540 = vunpack.c.l.b16 %v446
      %v541 = vunpack.c.h.b16 %v446
      %v542 = vunpack.c.l.b16 %v447
      %v543 = vunpack.c.l.b16 %v448
      %v544 = vunpack.c.h.b16 %v448
      %v545 = vunpack.c.l.b16 %v449
      %v546 = vunpack.c.l.b16 %v450
      %v547 = vunpack.c.h.b16 %v450
      %v548 = vunpack.c.l.b16 %v451
      %v549 = vunpack.c.l.b16 %v452
      %v550 = vunpack.c.h.b16 %v452
      %v551 = vunpack.c.l.b16 %v453
      %v552 = vunpack.c.l.b16 %v454
      %v553 = vunpack.c.h.b16 %v454
      %v554 = vunpack.c.l.b16 %v455
      %v555 = vunpack.c.l.b16 %v456
      %v556 = vunpack.c.h.b16 %v456
      %v557 = vunpack.c.l.b16 %v457
      %v558 = vunpack.c.l.b16 %v458
      %v559 = vunpack.c.h.b16 %v458
      %v560 = vunpack.c.l.b16 %v459
      %v561 = vunpack.c.l.b16 %v460
      %v562 = vunpack.c.h.b16 %v460
      %v563 = vunpack.c.l.b16 %v461
      %v564 = vunpack.c.l.b16 %v462
      %v565 = vunpack.c.h.b16 %v462
      %v566 = vunpack.c.l.b16 %v463
      %v567 = vunpack.c.l.b16 %v464
      %v568 = vunpack.c.h.b16 %v464
      %v569 = vunpack.c.l.b16 %v465
      %v570 = vunpack.c.l.b16 %v466
      %v571 = vunpack.c.h.b16 %v466
      %v572 = vunpack.c.l.b16 %v467
      %v573 = vunpack.c.l.b16 %v468
      %v574 = vunpack.c.h.b16 %v468
      %v575 = vunpack.c.l.b16 %v469
      %v576 = vpack.c.b16 %v531, %v528
      %v577 = vpack.c.b16 %v532, %v529
      %v578 = vpack.c.b16 %v533, %v530
      %v579 = vpack.c.b16 %v537, %v534
      %v580 = vpack.c.b16 %v538, %v535
      %v581 = vpack.c.b16 %v539, %v536
      %v582 = vpack.c.b16 %v543, %v540
      %v583 = vpack.c.b16 %v544, %v541
      %v584 = vpack.c.b16 %v545, %v542
      %v585 = vpack.c.b16 %v549, %v546
      %v586 = vpack.c.b16 %v550, %v547
      %v587 = vpack.c.b16 %v551, %v548
      %v588 = vpack.c.b16 %v555, %v552
      %v589 = vpack.c.b16 %v556, %v553
      %v590 = vpack.c.b16 %v557, %v554
      %v591 = vpack.c.b16 %v561, %v558
      %v592 = vpack.c.b16 %v562, %v559
      %v593 = vpack.c.b16 %v563, %v560
      %v594 = vpack.c.b16 %v567, %v564
      %v595 = vpack.c.b16 %v568, %v565
      %v596 = vpack.c.b16 %v569, %v566
      %v597 = vpack.c.b16 %v573, %v570
      %v598 = vpack.c.b16 %v574, %v571
      %v599 = vpack.c.b16 %v575, %v572
      %624 = vmatpush.bf16.msra.mxu0 %v597
      %625 = vmatpush.bf16.msra.mxu0 %v594
      %626 = vmatpush.bf16.msra.mxu0 %v591
      %627 = vmatpush.bf16.msra.mxu0 %v588
      %628 = vmatpush.bf16.msra.mxu0 %v585
      %629 = vmatpush.bf16.msra.mxu0 %v582
      %630 = vmatpush.bf16.msra.mxu0 %v579
      %631 = vmatpush.bf16.msra.mxu0 %v576
      %632 = vmatmul.bf16.gmra.mxu0 %v488
      %v633 = vpop.f32.mrf.mxu0
      %v634 = vadd.f32 %v490, %v633
      %v635 = vpop.f32.mrf.mxu0
      %636 = vdwg.mxu0
      %637 = vmatpush.bf16.msra.mxu0 %v598
      %638 = vmatpush.bf16.msra.mxu0 %v595
      %639 = vmatpush.bf16.msra.mxu0 %v592
      %640 = vmatpush.bf16.msra.mxu0 %v589
      %641 = vmatpush.bf16.msra.mxu0 %v586
      %642 = vmatpush.bf16.msra.mxu0 %v583
      %643 = vmatpush.bf16.msra.mxu0 %v580
      %644 = vmatpush.bf16.msra.mxu0 %v577
      %645 = vmatmul.bf16.gmra.mxu0 %v488
      %v646 = vpop.f32.mrf.mxu0
      %v647 = vadd.f32 %v491, %v646
      %v648 = vpop.f32.mrf.mxu0
      %649 = vdwg.mxu0
      %650 = vmatpush.bf16.msra.mxu0 %v599
      %651 = vmatpush.bf16.msra.mxu0 %v596
      %652 = vmatpush.bf16.msra.mxu0 %v593
      %653 = vmatpush.bf16.msra.mxu0 %v590
      %654 = vmatpush.bf16.msra.mxu0 %v587
      %655 = vmatpush.bf16.msra.mxu0 %v584
      %656 = vmatpush.bf16.msra.mxu0 %v581
      %657 = vmatpush.bf16.msra.mxu0 %v578
      %658 = vmatmul.bf16.gmra.mxu0 %v488
      %v659 = vpop.f32.mrf.mxu0
      %v660 = vadd.f32 %v492, %v659
      %v661 = vpop.f32.mrf.mxu0
      %662 = vdwg.mxu0
      %v663 = vpack.c.bf16 %v634, %v634
      %v664 = vpack.c.bf16 %v647, %v647
      %v665 = vpack.c.bf16 %v660, %v660
      %vm666 = vcmask 523264
      %v668 = vsel %vm666, %v663, 0
      %v671 = vsel %vm666, %v664, 0
      %673 = vmatpush.bf16.xpose.msra.mxu0 0
      %674 = vmatpush.bf16.xpose.msra.mxu0 0
      %675 = vmatpush.bf16.xpose.msra.mxu0 0
      %676 = vmatpush.bf16.xpose.msra.mxu0 0
      %677 = vmatpush.bf16.xpose.msra.mxu0 0
      %678 = vmatpush.bf16.xpose.msra.mxu0 0
      %679 = vmatpush.bf16.xpose.msra.mxu0 0
      %680 = vmatpush.bf16.xpose.msra.mxu0 %v671
      %681 = vmatmul.bf16.gmra.mxu0 %v668
      %v682 = vpop.f32.mrf.mxu0
      %v683 = vadd.f32 0.0, %v682
      %v684 = vpop.f32.mrf.mxu0
      %685 = vdwg.mxu0
      %v686 = vmul.f32 %v683, 0.125
      %v687 = vadd.f32 %v686, %v409
      %vm688 = vcmask 64512
      %v689 = vsel %vm688, %v687, -inf
      %690 = vmax.xlane.f32.xlu0 %v689
      %v691 = vpop.xlane.xlu0 %690
      %v692 = vsub.f32 %v687, %v691
      %v693 = vmul.f32 %v692, 1.442695
      %v694 = vpow.pop %v693
      %v695 = vsel %vm688, %v694, 0.0
      %696 = vadd.xlane.f32.xlu0 %v695
      %v697 = vpop.xlane.xlu0 %696
      %v698 = vrcp.pop %v697
      %v699 = vmul.f32 %v694, %v698
      %v700 = vpack.c.bf16 %v699, %v699
      %v702 = vsel %vm688, %v700, 0
      %vm704 = vcmask 1043456
      %v706 = vsel %vm704, %v665, 0
      %708 = vmatpush.bf16.msra.mxu0 0
      %709 = vmatpush.bf16.msra.mxu0 0
      %710 = vmatpush.bf16.msra.mxu0 0
      %711 = vmatpush.bf16.msra.mxu0 0
      %712 = vmatpush.bf16.msra.mxu0 0
      %713 = vmatpush.bf16.msra.mxu0 0
      %714 = vmatpush.bf16.msra.mxu0 0
      %715 = vmatpush.bf16.msra.mxu0 %v706
      %716 = vmatmul.bf16.gmra.mxu0 %v702
      %v717 = vpop.f32.mrf.mxu0
      %v718 = vadd.f32 0.0, %v717
      %v719 = vpop.f32.mrf.mxu0
      %720 = vdwg.mxu0
      %v721 = vpack.c.bf16 %v718, %v718
      %v730 = vunpack.c.l.b16 %v471
      %v731 = vunpack.c.l.b16 %v472
      %v732 = vunpack.c.l.b16 %v473
      %v733 = vunpack.c.l.b16 %v474
      %v734 = vunpack.c.l.b16 %v475
      %v735 = vunpack.c.l.b16 %v476
      %v736 = vunpack.c.l.b16 %v477
      %v737 = vunpack.c.l.b16 %v478
      %v738 = vpack.c.b16 %v731, %v730
      %v739 = vpack.c.b16 %v733, %v732
      %v740 = vpack.c.b16 %v735, %v734
      %v741 = vpack.c.b16 %v737, %v736
      %v747 = vsel %vm666, %v721, 0
      %749 = vmatpush.bf16.msra.mxu0 0
      %750 = vmatpush.bf16.msra.mxu0 0
      %751 = vmatpush.bf16.msra.mxu0 0
      %752 = vmatpush.bf16.msra.mxu0 0
      %753 = vmatpush.bf16.msra.mxu0 %v741
      %754 = vmatpush.bf16.msra.mxu0 %v740
      %755 = vmatpush.bf16.msra.mxu0 %v739
      %756 = vmatpush.bf16.msra.mxu0 %v738
      %757 = vmatmul.bf16.gmra.mxu0 %v747
      %v758 = vpop.f32.mrf.mxu0
      %v759 = vadd.f32 0.0, %v758
      %v760 = vpop.f32.mrf.mxu0
      %761 = vdwg.mxu0
      %v763 = vperm.slane %v487, 0
      %v765 = vadd.f32 %v763, %v759
      %767 = vrot.lane.b32.xlu0 %v663, 64
      %v768 = vpop.permute.xlu0 %767
      %770 = vrot.lane.b32.xlu0 %v664, 64
      %v771 = vpop.permute.xlu0 %770
      %v773 = vsel %vm666, %v768, 0
      %v776 = vsel %vm666, %v771, 0
      %778 = vmatpush.bf16.xpose.msra.mxu0 0
      %779 = vmatpush.bf16.xpose.msra.mxu0 0
      %780 = vmatpush.bf16.xpose.msra.mxu0 0
      %781 = vmatpush.bf16.xpose.msra.mxu0 0
      %782 = vmatpush.bf16.xpose.msra.mxu0 0
      %783 = vmatpush.bf16.xpose.msra.mxu0 0
      %784 = vmatpush.bf16.xpose.msra.mxu0 0
      %785 = vmatpush.bf16.xpose.msra.mxu0 %v776
      %786 = vmatmul.bf16.gmra.mxu0 %v773
      %v787 = vpop.f32.mrf.mxu0
      %v788 = vadd.f32 0.0, %v787
      %v789 = vpop.f32.mrf.mxu0
      %790 = vdwg.mxu0
      %v791 = vmul.f32 %v788, 0.125
      %v792 = vadd.f32 %v791, %v409
      %v793 = vsel %vm688, %v792, -inf
      %794 = vmax.xlane.f32.xlu0 %v793
      %v795 = vpop.xlane.xlu0 %794
      %v796 = vsub.f32 %v792, %v795
      %v797 = vmul.f32 %v796, 1.442695
      %v798 = vpow.pop %v797
      %v799 = vsel %vm688, %v798, 0.0
      %800 = vadd.xlane.f32.xlu0 %v799
      %v801 = vpop.xlane.xlu0 %800
      %v802 = vrcp.pop %v801
      %v803 = vmul.f32 %v798, %v802
      %v804 = vpack.c.bf16 %v803, %v803
      %806 = vrot.lane.b32.xlu0 %v665, 64
      %v807 = vpop.permute.xlu0 %806
      %v809 = vsel %vm688, %v804, 0
      %v812 = vsel %vm704, %v807, 0
      %814 = vmatpush.bf16.msra.mxu0 0
      %815 = vmatpush.bf16.msra.mxu0 0
      %816 = vmatpush.bf16.msra.mxu0 0
      %817 = vmatpush.bf16.msra.mxu0 0
      %818 = vmatpush.bf16.msra.mxu0 0
      %819 = vmatpush.bf16.msra.mxu0 0
      %820 = vmatpush.bf16.msra.mxu0 0
      %821 = vmatpush.bf16.msra.mxu0 %v812
      %822 = vmatmul.bf16.gmra.mxu0 %v809
      %v823 = vpop.f32.mrf.mxu0
      %v824 = vadd.f32 0.0, %v823
      %v825 = vpop.f32.mrf.mxu0
      %826 = vdwg.mxu0
      %v827 = vpack.c.bf16 %v824, %v824
      %v836 = vunpack.c.l.b16 %v479
      %v837 = vunpack.c.l.b16 %v480
      %v838 = vunpack.c.l.b16 %v481
      %v839 = vunpack.c.l.b16 %v482
      %v840 = vunpack.c.l.b16 %v483
      %v841 = vunpack.c.l.b16 %v484
      %v842 = vunpack.c.l.b16 %v485
      %v843 = vunpack.c.l.b16 %v486
      %v844 = vpack.c.b16 %v837, %v836
      %v845 = vpack.c.b16 %v839, %v838
      %v846 = vpack.c.b16 %v841, %v840
      %v847 = vpack.c.b16 %v843, %v842
      %v853 = vsel %vm666, %v827, 0
      %855 = vmatpush.bf16.msra.mxu0 0
      %856 = vmatpush.bf16.msra.mxu0 0
      %857 = vmatpush.bf16.msra.mxu0 0
      %858 = vmatpush.bf16.msra.mxu0 0
      %859 = vmatpush.bf16.msra.mxu0 %v847
      %860 = vmatpush.bf16.msra.mxu0 %v846
      %861 = vmatpush.bf16.msra.mxu0 %v845
      %862 = vmatpush.bf16.msra.mxu0 %v844
      %863 = vmatmul.bf16.gmra.mxu0 %v853
      %v864 = vpop.f32.mrf.mxu0
      %v865 = vadd.f32 0.0, %v864
      %v866 = vpop.f32.mrf.mxu0
      %867 = vdwg.mxu0
      %v868 = vadd.f32 %v765, %v865
      %v869 = vadd.f32 %v397, %v868
      %v870 = vld [vmem:[%s7] sm:$0x1]
      %v871 = vmul.f32 %v869, %v869
      %872 = vadd.xlane.f32.xlu0 %v871
      %v873 = vpop.xlane.xlu0 %872
      %v874 = vmul.f32 %v873, %v420
      %v875 = vadd.f32 %v874, 1e-05
      %v876 = vrsqrt.pop %v875
      %v877 = vmul.f32 %v876, %v875
      %v878 = vmul.f32 %v877, %v876
      %v879 = vmul.f32 0.5, %v878
      %v880 = vsub.f32 1.5, %v879
      %v881 = vmul.f32 %v876, %v880
      %vm882 = vweird.f32 %v875
      %vm883 = vweird.f32 %v876
      %vm884 = vmor %vm882, %vm883
      %v885 = vsel %vm884, %v876, %v881
      %v886 = vmul.f32 %v869, %v885
      %v888 = vperm.slane %v870, 0
      %v890 = vmul.f32 %v886, %v888
      %v891 = vpack.c.bf16 %v890, %v890
      %v892 = vld [vmem:[%s8] sm:$0xff]
      %v893 = vld [vmem:[%s8 + $0x8] sm:$0xff]
      %v894 = vld [vmem:[%s8 + $0x10] sm:$0xff]
      %v895 = vld [vmem:[%s8 + $0x18] sm:$0xff]
      %v896 = vld [vmem:[%s8 + $0x20] sm:$0xff]
      %v897 = vld [vmem:[%s8 + $0x28] sm:$0xff]
      %v898 = vld [vmem:[%s8 + $0x30] sm:$0xff]
      %v899 = vld [vmem:[%s8 + $0x38] sm:$0xff]
      %v900 = vld [vmem:[%s8 + $0x40] sm:$0xff]
      %v901 = vld [vmem:[%s8 + $0x48] sm:$0xff]
      %v902 = vld [vmem:[%s8 + $0x50] sm:$0xff]
      %v903 = vld [vmem:[%s8 + $0x58] sm:$0xff]
      %v904 = vld [vmem:[%s8 + $0x60] sm:$0xff]
      %v905 = vld [vmem:[%s8 + $0x68] sm:$0xff]
      %v906 = vld [vmem:[%s8 + $0x70] sm:$0xff]
      %v907 = vld [vmem:[%s8 + $0x78] sm:$0xff]
      %v908 = vld [vmem:[%s8 + $0x80] sm:$0xff]
      %v909 = vld [vmem:[%s8 + $0x88] sm:$0xff]
      %v910 = vld [vmem:[%s8 + $0x90] sm:$0xff]
      %v911 = vld [vmem:[%s8 + $0x98] sm:$0xff]
      %v912 = vld [vmem:[%s8 + $0xa0] sm:$0xff]
      %v913 = vld [vmem:[%s8 + $0xa8] sm:$0xff]
      %v914 = vld [vmem:[%s8 + $0xb0] sm:$0xff]
      %v915 = vld [vmem:[%s8 + $0xb8] sm:$0xff]
      %v916 = vld [vmem:[%s8 + $0xc0] sm:$0xff]
      %v917 = vld [vmem:[%s8 + $0xc8] sm:$0xff]
      %v918 = vld [vmem:[%s8 + $0xd0] sm:$0xff]
      %v919 = vld [vmem:[%s8 + $0xd8] sm:$0xff]
      %v920 = vld [vmem:[%s8 + $0xe0] sm:$0xff]
      %v921 = vld [vmem:[%s8 + $0xe8] sm:$0xff]
      %v922 = vld [vmem:[%s8 + $0xf0] sm:$0xff]
      %v923 = vld [vmem:[%s8 + $0xf8] sm:$0xff]
      %v956 = vunpack.c.l.b16 %v892
      %v957 = vunpack.c.h.b16 %v892
      %v958 = vunpack.c.l.b16 %v893
      %v959 = vunpack.c.h.b16 %v893
      %v960 = vunpack.c.l.b16 %v894
      %v961 = vunpack.c.h.b16 %v894
      %v962 = vunpack.c.l.b16 %v895
      %v963 = vunpack.c.h.b16 %v895
      %v964 = vunpack.c.l.b16 %v896
      %v965 = vunpack.c.h.b16 %v896
      %v966 = vunpack.c.l.b16 %v897
      %v967 = vunpack.c.h.b16 %v897
      %v968 = vunpack.c.l.b16 %v898
      %v969 = vunpack.c.h.b16 %v898
      %v970 = vunpack.c.l.b16 %v899
      %v971 = vunpack.c.h.b16 %v899
      %v972 = vunpack.c.l.b16 %v900
      %v973 = vunpack.c.h.b16 %v900
      %v974 = vunpack.c.l.b16 %v901
      %v975 = vunpack.c.h.b16 %v901
      %v976 = vunpack.c.l.b16 %v902
      %v977 = vunpack.c.h.b16 %v902
      %v978 = vunpack.c.l.b16 %v903
      %v979 = vunpack.c.h.b16 %v903
      %v980 = vunpack.c.l.b16 %v904
      %v981 = vunpack.c.h.b16 %v904
      %v982 = vunpack.c.l.b16 %v905
      %v983 = vunpack.c.h.b16 %v905
      %v984 = vunpack.c.l.b16 %v906
      %v985 = vunpack.c.h.b16 %v906
      %v986 = vunpack.c.l.b16 %v907
      %v987 = vunpack.c.h.b16 %v907
      %v988 = vunpack.c.l.b16 %v908
      %v989 = vunpack.c.h.b16 %v908
      %v990 = vunpack.c.l.b16 %v909
      %v991 = vunpack.c.h.b16 %v909
      %v992 = vunpack.c.l.b16 %v910
      %v993 = vunpack.c.h.b16 %v910
      %v994 = vunpack.c.l.b16 %v911
      %v995 = vunpack.c.h.b16 %v911
      %v996 = vunpack.c.l.b16 %v912
      %v997 = vunpack.c.h.b16 %v912
      %v998 = vunpack.c.l.b16 %v913
      %v999 = vunpack.c.h.b16 %v913
      %v1000 = vunpack.c.l.b16 %v914
      %v1001 = vunpack.c.h.b16 %v914
      %v1002 = vunpack.c.l.b16 %v915
      %v1003 = vunpack.c.h.b16 %v915
      %v1004 = vunpack.c.l.b16 %v916
      %v1005 = vunpack.c.h.b16 %v916
      %v1006 = vunpack.c.l.b16 %v917
      %v1007 = vunpack.c.h.b16 %v917
      %v1008 = vunpack.c.l.b16 %v918
      %v1009 = vunpack.c.h.b16 %v918
      %v1010 = vunpack.c.l.b16 %v919
      %v1011 = vunpack.c.h.b16 %v919
      %v1012 = vunpack.c.l.b16 %v920
      %v1013 = vunpack.c.h.b16 %v920
      %v1014 = vunpack.c.l.b16 %v921
      %v1015 = vunpack.c.h.b16 %v921
      %v1016 = vunpack.c.l.b16 %v922
      %v1017 = vunpack.c.h.b16 %v922
      %v1018 = vunpack.c.l.b16 %v923
      %v1019 = vunpack.c.h.b16 %v923
      %v1020 = vpack.c.b16 %v960, %v956
      %v1021 = vpack.c.b16 %v961, %v957
      %v1022 = vpack.c.b16 %v962, %v958
      %v1023 = vpack.c.b16 %v963, %v959
      %v1024 = vpack.c.b16 %v968, %v964
      %v1025 = vpack.c.b16 %v969, %v965
      %v1026 = vpack.c.b16 %v970, %v966
      %v1027 = vpack.c.b16 %v971, %v967
      %v1028 = vpack.c.b16 %v976, %v972
      %v1029 = vpack.c.b16 %v977, %v973
      %v1030 = vpack.c.b16 %v978, %v974
      %v1031 = vpack.c.b16 %v979, %v975
      %v1032 = vpack.c.b16 %v984, %v980
      %v1033 = vpack.c.b16 %v985, %v981
      %v1034 = vpack.c.b16 %v986, %v982
      %v1035 = vpack.c.b16 %v987, %v983
      %v1036 = vpack.c.b16 %v992, %v988
      %v1037 = vpack.c.b16 %v993, %v989
      %v1038 = vpack.c.b16 %v994, %v990
      %v1039 = vpack.c.b16 %v995, %v991
      %v1040 = vpack.c.b16 %v1000, %v996
      %v1041 = vpack.c.b16 %v1001, %v997
      %v1042 = vpack.c.b16 %v1002, %v998
      %v1043 = vpack.c.b16 %v1003, %v999
      %v1044 = vpack.c.b16 %v1008, %v1004
      %v1045 = vpack.c.b16 %v1009, %v1005
      %v1046 = vpack.c.b16 %v1010, %v1006
      %v1047 = vpack.c.b16 %v1011, %v1007
      %v1048 = vpack.c.b16 %v1016, %v1012
      %v1049 = vpack.c.b16 %v1017, %v1013
      %v1050 = vpack.c.b16 %v1018, %v1014
      %v1051 = vpack.c.b16 %v1019, %v1015
      %1084 = vmatpush.bf16.msra.mxu0 %v1048
      %1085 = vmatpush.bf16.msra.mxu0 %v1044
      %1086 = vmatpush.bf16.msra.mxu0 %v1040
      %1087 = vmatpush.bf16.msra.mxu0 %v1036
      %1088 = vmatpush.bf16.msra.mxu0 %v1032
      %1089 = vmatpush.bf16.msra.mxu0 %v1028
      %1090 = vmatpush.bf16.msra.mxu0 %v1024
      %1091 = vmatpush.bf16.msra.mxu0 %v1020
      %1092 = vmatmul.bf16.gmra.mxu0 %v891
      %v1093 = vpop.f32.mrf.mxu0
      %v1094 = vadd.f32 0.0, %v1093
      %v1095 = vpop.f32.mrf.mxu0
      %1096 = vdwg.mxu0
      %1097 = vmatpush.bf16.msra.mxu0 %v1049
      %1098 = vmatpush.bf16.msra.mxu0 %v1045
      %1099 = vmatpush.bf16.msra.mxu0 %v1041
      %1100 = vmatpush.bf16.msra.mxu0 %v1037
      %1101 = vmatpush.bf16.msra.mxu0 %v1033
      %1102 = vmatpush.bf16.msra.mxu0 %v1029
      %1103 = vmatpush.bf16.msra.mxu0 %v1025
      %1104 = vmatpush.bf16.msra.mxu0 %v1021
      %1105 = vmatmul.bf16.gmra.mxu0 %v891
      %v1106 = vpop.f32.mrf.mxu0
      %v1107 = vadd.f32 0.0, %v1106
      %v1108 = vpop.f32.mrf.mxu0
      %1109 = vdwg.mxu0
      %1110 = vmatpush.bf16.msra.mxu0 %v1050
      %1111 = vmatpush.bf16.msra.mxu0 %v1046
      %1112 = vmatpush.bf16.msra.mxu0 %v1042
      %1113 = vmatpush.bf16.msra.mxu0 %v1038
      %1114 = vmatpush.bf16.msra.mxu0 %v1034
      %1115 = vmatpush.bf16.msra.mxu0 %v1030
      %1116 = vmatpush.bf16.msra.mxu0 %v1026
      %1117 = vmatpush.bf16.msra.mxu0 %v1022
      %1118 = vmatmul.bf16.gmra.mxu0 %v891
      %v1119 = vpop.f32.mrf.mxu0
      %v1120 = vadd.f32 0.0, %v1119
      %v1121 = vpop.f32.mrf.mxu0
      %1122 = vdwg.mxu0
      %1123 = vmatpush.bf16.msra.mxu0 %v1051
      %1124 = vmatpush.bf16.msra.mxu0 %v1047
      %1125 = vmatpush.bf16.msra.mxu0 %v1043
      %1126 = vmatpush.bf16.msra.mxu0 %v1039
      %1127 = vmatpush.bf16.msra.mxu0 %v1035
      %1128 = vmatpush.bf16.msra.mxu0 %v1031
      %1129 = vmatpush.bf16.msra.mxu0 %v1027
      %1130 = vmatpush.bf16.msra.mxu0 %v1023
      %1131 = vmatmul.bf16.gmra.mxu0 %v891
      %v1132 = vpop.f32.mrf.mxu0
      %v1133 = vadd.f32 0.0, %v1132
      %v1134 = vpop.f32.mrf.mxu0
      %1135 = vdwg.mxu0
      %v1136 = vxor.u32 %v1094, 2147483648
      %v1137 = vxor.u32 %v1107, 2147483648
      %v1138 = vmul.f32 %v1136, 1.442695
      %v1139 = vpow.pop %v1138
      %v1140 = vmul.f32 %v1137, 1.442695
      %v1141 = vpow.pop %v1140
      %v1142 = vadd.f32 %v1139, 1.0
      %v1143 = vadd.f32 %v1141, 1.0
      %v1144 = vrcp.pop %v1142
      %v1145 = vmul.f32 %v1142, %v1144
      %v1146 = vsub.f32 1.0, %v1145
      %v1147 = vmul.f32 %v1144, %v1146
      %v1148 = vadd.f32 %v1144, %v1147
      %vm1149 = vweird.f32 %v1142
      %vm1150 = vweird.f32 %v1144
      %vm1151 = vmor %vm1149, %vm1150
      %v1152 = vsel %vm1151, %v1144, %v1148
      %v1153 = vand.u32 2147483647, %v1142
      %vm1154 = vcmp.eq.f32.partialorder %v1153, 8.507059e+37
      %v1155 = vand.u32 %v1142, 2147483648
      %v1156 = vor.u32 1.1754944e-38, %v1155
      %v1157 = vsel %vm1154, %v1156, %v1152
      %v1158 = vmul.f32 1.0, %v1157
      %v1159 = vrcp.pop %v1143
      %v1160 = vmul.f32 %v1143, %v1159
      %v1161 = vsub.f32 1.0, %v1160
      %v1162 = vmul.f32 %v1159, %v1161
      %v1163 = vadd.f32 %v1159, %v1162
      %vm1164 = vweird.f32 %v1143
      %vm1165 = vweird.f32 %v1159
      %vm1166 = vmor %vm1164, %vm1165
      %v1167 = vsel %vm1166, %v1159, %v1163
      %v1168 = vand.u32 2147483647, %v1143
      %vm1169 = vcmp.eq.f32.partialorder %v1168, 8.507059e+37
      %v1170 = vand.u32 %v1143, 2147483648
      %v1171 = vor.u32 1.1754944e-38, %v1170
      %v1172 = vsel %vm1169, %v1171, %v1167
      %v1173 = vmul.f32 1.0, %v1172
      %v1174 = vmul.f32 %v1094, %v1158
      %v1175 = vmul.f32 %v1107, %v1173
      %v1176 = vmul.f32 %v1174, %v1120
      %v1177 = vmul.f32 %v1175, %v1133
      %v1178 = vpack.c.bf16 %v1176, %v1176
      %v1179 = vpack.c.bf16 %v1177, %v1177
      %v1180 = vld [vmem:[%s9] sm:$0xf]
      %v1181 = vld [vmem:[%s9 + $0x4] sm:$0xf]
      %v1182 = vld [vmem:[%s9 + $0x8] sm:$0xf]
      %v1183 = vld [vmem:[%s9 + $0xc] sm:$0xf]
      %v1184 = vld [vmem:[%s9 + $0x10] sm:$0xf]
      %v1185 = vld [vmem:[%s9 + $0x14] sm:$0xf]
      %v1186 = vld [vmem:[%s9 + $0x18] sm:$0xf]
      %v1187 = vld [vmem:[%s9 + $0x1c] sm:$0xf]
      %v1188 = vld [vmem:[%s9 + $0x20] sm:$0xf]
      %v1189 = vld [vmem:[%s9 + $0x24] sm:$0xf]
      %v1190 = vld [vmem:[%s9 + $0x28] sm:$0xf]
      %v1191 = vld [vmem:[%s9 + $0x2c] sm:$0xf]
      %v1192 = vld [vmem:[%s9 + $0x30] sm:$0xf]
      %v1193 = vld [vmem:[%s9 + $0x34] sm:$0xf]
      %v1194 = vld [vmem:[%s9 + $0x38] sm:$0xf]
      %v1195 = vld [vmem:[%s9 + $0x3c] sm:$0xf]
      %v1196 = vld [vmem:[%s9 + $0x40] sm:$0xf]
      %v1197 = vld [vmem:[%s9 + $0x44] sm:$0xf]
      %v1198 = vld [vmem:[%s9 + $0x48] sm:$0xf]
      %v1199 = vld [vmem:[%s9 + $0x4c] sm:$0xf]
      %v1200 = vld [vmem:[%s9 + $0x50] sm:$0xf]
      %v1201 = vld [vmem:[%s9 + $0x54] sm:$0xf]
      %v1202 = vld [vmem:[%s9 + $0x58] sm:$0xf]
      %v1203 = vld [vmem:[%s9 + $0x5c] sm:$0xf]
      %v1204 = vld [vmem:[%s9 + $0x60] sm:$0xf]
      %v1205 = vld [vmem:[%s9 + $0x64] sm:$0xf]
      %v1206 = vld [vmem:[%s9 + $0x68] sm:$0xf]
      %v1207 = vld [vmem:[%s9 + $0x6c] sm:$0xf]
      %v1208 = vld [vmem:[%s9 + $0x70] sm:$0xf]
      %v1209 = vld [vmem:[%s9 + $0x74] sm:$0xf]
      %v1210 = vld [vmem:[%s9 + $0x78] sm:$0xf]
      %v1211 = vld [vmem:[%s9 + $0x7c] sm:$0xf]
      %v1244 = vunpack.c.l.b16 %v1180
      %v1245 = vunpack.c.l.b16 %v1181
      %v1246 = vunpack.c.l.b16 %v1182
      %v1247 = vunpack.c.l.b16 %v1183
      %v1248 = vunpack.c.l.b16 %v1184
      %v1249 = vunpack.c.l.b16 %v1185
      %v1250 = vunpack.c.l.b16 %v1186
      %v1251 = vunpack.c.l.b16 %v1187
      %v1252 = vunpack.c.l.b16 %v1188
      %v1253 = vunpack.c.l.b16 %v1189
      %v1254 = vunpack.c.l.b16 %v1190
      %v1255 = vunpack.c.l.b16 %v1191
      %v1256 = vunpack.c.l.b16 %v1192
      %v1257 = vunpack.c.l.b16 %v1193
      %v1258 = vunpack.c.l.b16 %v1194
      %v1259 = vunpack.c.l.b16 %v1195
      %v1260 = vunpack.c.l.b16 %v1196
      %v1261 = vunpack.c.l.b16 %v1197
      %v1262 = vunpack.c.l.b16 %v1198
      %v1263 = vunpack.c.l.b16 %v1199
      %v1264 = vunpack.c.l.b16 %v1200
      %v1265 = vunpack.c.l.b16 %v1201
      %v1266 = vunpack.c.l.b16 %v1202
      %v1267 = vunpack.c.l.b16 %v1203
      %v1268 = vunpack.c.l.b16 %v1204
      %v1269 = vunpack.c.l.b16 %v1205
      %v1270 = vunpack.c.l.b16 %v1206
      %v1271 = vunpack.c.l.b16 %v1207
      %v1272 = vunpack.c.l.b16 %v1208
      %v1273 = vunpack.c.l.b16 %v1209
      %v1274 = vunpack.c.l.b16 %v1210
      %v1275 = vunpack.c.l.b16 %v1211
      %v1276 = vpack.c.b16 %v1245, %v1244
      %v1277 = vpack.c.b16 %v1247, %v1246
      %v1278 = vpack.c.b16 %v1249, %v1248
      %v1279 = vpack.c.b16 %v1251, %v1250
      %v1280 = vpack.c.b16 %v1253, %v1252
      %v1281 = vpack.c.b16 %v1255, %v1254
      %v1282 = vpack.c.b16 %v1257, %v1256
      %v1283 = vpack.c.b16 %v1259, %v1258
      %v1284 = vpack.c.b16 %v1261, %v1260
      %v1285 = vpack.c.b16 %v1263, %v1262
      %v1286 = vpack.c.b16 %v1265, %v1264
      %v1287 = vpack.c.b16 %v1267, %v1266
      %v1288 = vpack.c.b16 %v1269, %v1268
      %v1289 = vpack.c.b16 %v1271, %v1270
      %v1290 = vpack.c.b16 %v1273, %v1272
      %v1291 = vpack.c.b16 %v1275, %v1274
      %1308 = vmatpush.bf16.msra.mxu0 %v1283
      %1309 = vmatpush.bf16.msra.mxu0 %v1282
      %1310 = vmatpush.bf16.msra.mxu0 %v1281
      %1311 = vmatpush.bf16.msra.mxu0 %v1280
      %1312 = vmatpush.bf16.msra.mxu0 %v1279
      %1313 = vmatpush.bf16.msra.mxu0 %v1278
      %1314 = vmatpush.bf16.msra.mxu0 %v1277
      %1315 = vmatpush.bf16.msra.mxu0 %v1276
      %1316 = vmatmul.bf16.gmra.mxu0 %v1178
      %v1317 = vpop.f32.mrf.mxu0
      %v1318 = vadd.f32 0.0, %v1317
      %v1319 = vpop.f32.mrf.mxu0
      %1320 = vdwg.mxu0
      %1321 = vmatpush.bf16.msra.mxu0 %v1291
      %1322 = vmatpush.bf16.msra.mxu0 %v1290
      %1323 = vmatpush.bf16.msra.mxu0 %v1289
      %1324 = vmatpush.bf16.msra.mxu0 %v1288
      %1325 = vmatpush.bf16.msra.mxu0 %v1287
      %1326 = vmatpush.bf16.msra.mxu0 %v1286
      %1327 = vmatpush.bf16.msra.mxu0 %v1285
      %1328 = vmatpush.bf16.msra.mxu0 %v1284
      %1329 = vmatmul.bf16.gmra.mxu0 %v1179
      %v1330 = vpop.f32.mrf.mxu0
      %v1331 = vadd.f32 %v1318, %v1330
      %v1332 = vpop.f32.mrf.mxu0
      %1333 = vdwg.mxu0
      %v1334 = vadd.f32 %v869, %v1331
      %v1335 = vld [vmem:[%s10] sm:$0x1]
      %v1336 = vmul.f32 %v1334, %v1334
      %1337 = vadd.xlane.f32.xlu0 %v1336
      %v1338 = vpop.xlane.xlu0 %1337
      %v1339 = vmul.f32 %v1338, %v420
      %v1340 = vadd.f32 %v1339, 1e-05
      %v1341 = vrsqrt.pop %v1340
      %v1342 = vmul.f32 %v1341, %v1340
      %v1343 = vmul.f32 %v1342, %v1341
      %v1344 = vmul.f32 0.5, %v1343
      %v1345 = vsub.f32 1.5, %v1344
      %v1346 = vmul.f32 %v1341, %v1345
      %vm1347 = vweird.f32 %v1340
      %vm1348 = vweird.f32 %v1341
      %vm1349 = vmor %vm1347, %vm1348
      %v1350 = vsel %vm1349, %v1341, %v1346
      %v1351 = vmul.f32 %v1334, %v1350
      %v1353 = vperm.slane %v1335, 0
      %v1355 = vmul.f32 %v1351, %v1353
      %1356 = vst [vmem:[%s395] sm:$0xff] %v1355
      %p1357 = scmp.lt.s32.totalorder %s22, 1
      %s1358 = scalar_select %p1357, %s22, 1
      %s1359 = smul.addr %s1358, 8
      %s1360 = scalar_lea.vmem %s11, %s1359
      // Predicated region
      $region65: #{_lambda_.6} parent=63 // pred_check
        %p1361 = pneg %p281
      $region66: #{_lambda_.6} parent=63 // pred_check_branch
        %1363 = sbr.rel (%p1361) target = $region68
      $region67: #{_lambda_.6} parent=63 // pred_region
        _
      $region68: #{_lambda_.6} parent=63 // pred_fallthru
        _
    $region64: #{_lambda_.6} parent=5 // pred_fallthru
      _
    %p1364 = scmp.le.s32.totalorder 2, %s17
    // Predicated region
    $region69: #{_lambda_.6} parent=5 // pred_check
      %p1365 = pneg %p1364
    $region70: #{_lambda_.6} parent=5 // pred_check_branch
      %1367 = sbr.rel (%p1365) target = $region72
    $region71: #{_lambda_.6} parent=5 // pred_region
      %s1368 = ssub.s32 %s17, 2
      // Predicated region
      $region73: #{_lambda_.6} parent=71 // pred_check
        %p1369 = pneg %p287
      $region74: #{_lambda_.6} parent=71 // pred_check_branch
        %1371 = sbr.rel (%p1369) target = $region76
      $region75: #{_lambda_.6} parent=71 // pred_region
        %p1372 = scmp.lt.s32.totalorder %s23, 1
        %s1373 = scalar_select %p1372, %s23, 1
        %s1374 = smul.addr %s1373, 8
        %s1375 = scalar_lea.vmem %s11, %s1374
      $region76: #{_lambda_.6} parent=71 // pred_fallthru
        _
    $region72: #{_lambda_.6} parent=5 // pred_fallthru
      _
  $region6: #{_lambda_.6} parent=0 // loop_footer
    %s21 = sadd.s32 1, %s17
  $region7: #{_lambda_.6} parent=0 // loop_footer_branch
    %16 = sbr.rel target = $region3
  $region8: #{_lambda_.6} parent=0 // loop_exit
    _

</llo_original>
